<compile_context>
chip_gen: v5e
topology: v5e:2x2
jax: 0.10.0
libtpu: 0.0.40
codegen_flags: <defaults>
</compile_context>

<pallas_src>
import functools

import jax
import jax.numpy as jnp
from jax import lax
from jax.experimental import pallas as pl
from jax.experimental.pallas import tpu as pltpu


def _eblock_kernel(x_ref, w_ref, b_ref, o_ref, xpad_ref, *, H, W, C, num_res):
    """Fused EBlock: num_res ResBlocks, activation kept resident in VMEM.

    x_ref    : (1, H, W, C)            one batch element (NHWC)
    w_ref    : (2*num_res, 9*C, C)     im2col-reshaped conv weights
    b_ref    : (2*num_res, 1, C)       biases (f32)
    o_ref    : (1, H, W, C)
    xpad_ref : (H+2, W+2, C) f32 VMEM  zero-halo scratch for SAME padding
    """
    # Zero the padded scratch once per batch element; only its interior is
    # rewritten below, so the 1-pixel halo stays zero (== SAME zero padding).
    xpad_ref[...] = jnp.zeros_like(xpad_ref)

    def conv3x3(act_hwc, w_kc, bias_1c):
        # act_hwc: (H, W, C) f32 ; w_kc: (9*C, C) ; bias_1c: (1, C) f32
        xpad_ref[1:H + 1, 1:W + 1, :] = act_hwc
        # im2col: 9 shifted (H*W, C) slabs -> one (H*W, 9*C) patch matrix,
        # contracted in a single K = 9*C MXU matmul (f32 accumulation).
        slabs = [xpad_ref[dh:dh + H, dw:dw + W, :].reshape(H * W, C)
                 for dh in range(3) for dw in range(3)]
        patches = jnp.concatenate(slabs, axis=-1).astype(w_kc.dtype)
        y = jnp.dot(patches, w_kc, preferred_element_type=jnp.float32)
        return y + bias_1c                      # (H*W, C) f32

    x0 = x_ref[0].astype(jnp.float32)           # (H, W, C)

    def resblock(r, x):
        h = conv3x3(x, w_ref[2 * r], b_ref[2 * r])          # conv1 + bias
        h = jnp.maximum(h, 0.0).reshape(H, W, C)            # ReLU
        y = conv3x3(h, w_ref[2 * r + 1], b_ref[2 * r + 1])  # conv2 + bias
        return y.reshape(H, W, C) + x                       # + skip

    x_out = lax.fori_loop(0, num_res, resblock, x0)
    o_ref[0] = x_out.astype(o_ref.dtype)


def eblock_forward(x_nchw, params, *, compute_dtype=jnp.float32):
    """EBlock forward. x_nchw: (N,C,H,W) -> (N,C,H,W).

    compute_dtype: dtype of the MXU operands (weights / im2col patches).
    Use jnp.bfloat16 on v6e/v7x for ~2x MXU throughput; accumulation,
    bias and residual math stay f32 either way.
    """
    x = jnp.transpose(x_nchw, (0, 2, 3, 1))                 # NCHW -> NHWC
    N, H, W, C = x.shape
    num_res = len(params)

    # Stack all weights/biases: weights in im2col layout (rows = (dh,dw,cin)),
    # matching the patch-column ordering built inside the kernel.
    w_all = jnp.stack(
        [w.reshape(9 * C, C) for (w1, b1, w2, b2) in params for w in (w1, w2)],
        axis=0).astype(compute_dtype)                       # (2*num_res, 9C, C)
    b_all = jnp.stack(
        [b.reshape(1, C) for (w1, b1, w2, b2) in params for b in (b1, b2)],
        axis=0).astype(jnp.float32)                         # (2*num_res, 1, C)

    kern = functools.partial(_eblock_kernel, H=H, W=W, C=C, num_res=num_res)
    out = pl.pallas_call(
        kern,
        out_shape=jax.ShapeDtypeStruct((N, H, W, C), x.dtype),
        grid=(N,),
        in_specs=[
            pl.BlockSpec((1, H, W, C), lambda n: (n, 0, 0, 0)),
            # Constant index_map -> weights/biases DMA'd once, resident in VMEM.
            pl.BlockSpec((2 * num_res, 9 * C, C), lambda n: (0, 0, 0)),
            pl.BlockSpec((2 * num_res, 1, C), lambda n: (0, 0, 0)),
        ],
        out_specs=pl.BlockSpec((1, H, W, C), lambda n: (n, 0, 0, 0)),
        scratch_shapes=[pltpu.VMEM((H + 2, W + 2, C), jnp.float32)],
        compiler_params=pltpu.CompilerParams(
            dimension_semantics=("parallel",)),
    )(x, w_all, b_all)
    return jnp.transpose(out, (0, 3, 1, 2))                 # NHWC -> NCHW


def init_eblock_params(key, channels, num_res):
    """Deterministic synthetic weights: 2 convs per ResBlock, HWIO layout."""
    params = []
    std = 1.0 / jnp.sqrt(9.0 * channels)
    for _ in range(num_res):
        k1, k2, k3, k4, key = jax.random.split(key, 5)
        w1 = jax.random.normal(k1, (3, 3, channels, channels), jnp.float32) * std
        b1 = jax.random.normal(k2, (channels,), jnp.float32) * 0.01
        w2 = jax.random.normal(k3, (3, 3, channels, channels), jnp.float32) * std
        b2 = jax.random.normal(k4, (channels,), jnp.float32) * 0.01
        params.append((w1, b1, w2, b2))
    return params


# ---------------- pure-JAX reference for correctness ----------------
def _conv_ref(x_nhwc, w_hwio, b):
    y = lax.conv_general_dilated(
        x_nhwc, w_hwio, window_strides=(1, 1), padding="SAME",
        dimension_numbers=("NHWC", "HWIO", "NHWC"))
    return y + b.reshape(1, 1, 1, -1)


def eblock_ref(x_nchw, params):
    x = jnp.transpose(x_nchw, (0, 2, 3, 1))
    for (w1, b1, w2, b2) in params:
        h = jnp.maximum(_conv_ref(x, w1, b1), 0.0)
        x = _conv_ref(h, w2, b2) + x
    return jnp.transpose(x, (0, 3, 1, 2))


if __name__ == "__main__":
    N, C, H, W = 2, 32, 16, 16
    NUM_RES = 8

    key = jax.random.PRNGKey(0)
    kx, kp = jax.random.split(key)
    x = jax.random.normal(kx, (N, C, H, W), jnp.float32)   # NCHW, as in PyTorch
    params = init_eblock_params(kp, C, NUM_RES)

    fwd = jax.jit(eblock_forward)
    out = jax.block_until_ready(fwd(x, params))
    ref = jax.block_until_ready(eblock_ref(x, params))

    assert out.shape == (N, C, H, W)
    assert jnp.allclose(out, ref, atol=1e-4, rtol=1e-4), (
        float(jnp.max(jnp.abs(out - ref))))

    print("KERNEL_OK")
</pallas_src>

<mosaic_0001>
module attributes {stable_mosaic.version = 11 : i64} {
  func.func @_eblock_kernel(%arg0: i32, %arg1: memref<1x16x16x32xf32, #tpu.memory_space<vmem>>, %arg2: memref<16x288x32xf32, #tpu.memory_space<vmem>>, %arg3: memref<16x1x32xf32, #tpu.memory_space<vmem>>, %arg4: memref<1x16x16x32xf32, #tpu.memory_space<vmem>>, %arg5: memref<18x18x32xf32, #tpu.memory_space<vmem>>) attributes {dimension_semantics = [#tpu.dimension_semantics<parallel>], iteration_bounds = array<i64: 2>, scalar_prefetch = 0 : i64, scratch_operands = 1 : i64, tpu.core_type = #tpu.core_type<tc>, window_params = [{transform_indices = @transform_0, window_bounds = array<i64: 1, 16, 16, 32>}, {pipeline_mode = #tpu.pipeline_mode<synchronous>, transform_indices = @transform_1, window_bounds = array<i64: 16, 288, 32>}, {pipeline_mode = #tpu.pipeline_mode<synchronous>, transform_indices = @transform_2, window_bounds = array<i64: 16, 1, 32>}, {transform_indices = @transform_3, window_bounds = array<i64: 1, 16, 16, 32>}]} {
    %cst = arith.constant 0.000000e+00 : f32
    %0 = vector.broadcast %cst : f32 to vector<18x18x32xf32>
    %c0 = arith.constant 0 : index
    %c0_0 = arith.constant 0 : index
    %c0_1 = arith.constant 0 : index
    %1 = vector.load %arg5[%c0, %c0_0, %c0_1] : memref<18x18x32xf32, #tpu.memory_space<vmem>>, vector<18x18x32xf32>
    tpu.vector_store %arg5[%c0, %c0_0, %c0_1], %0 {strides = array<i32>} : memref<18x18x32xf32, #tpu.memory_space<vmem>>, vector<18x18x32xf32>,
    %c0_2 = arith.constant 0 : index
    %c0_3 = arith.constant 0 : index
    %c0_4 = arith.constant 0 : index
    %c0_5 = arith.constant 0 : index
    %2 = vector.load %arg1[%c0_2, %c0_3, %c0_4, %c0_5] : memref<1x16x16x32xf32, #tpu.memory_space<vmem>>, vector<1x16x16x32xf32>
    %3 = vector.shape_cast %2 : vector<1x16x16x32xf32> to vector<16x16x32xf32>
    %c0_i32 = arith.constant 0 : i32
    %c8_i32 = arith.constant 8 : i32
    %4 = arith.addi %c0_i32, %c8_i32 : i32
    %c1_i32 = arith.constant 1 : i32
    %5 = scf.for %arg6 = %c0_i32 to %4 step %c1_i32 iter_args(%arg7 = %3) -> (vector<16x16x32xf32>)  : i32 {
      %c2_i32 = arith.constant 2 : i32
      %9 = arith.muli %c2_i32, %arg6 : i32
      %10 = arith.index_cast %9 : i32 to index
      %c0_11 = arith.constant 0 : index
      %c0_12 = arith.constant 0 : index
      %11 = vector.load %arg2[%10, %c0_11, %c0_12] : memref<16x288x32xf32, #tpu.memory_space<vmem>>, vector<1x288x32xf32>
      %12 = vector.shape_cast %11 : vector<1x288x32xf32> to vector<288x32xf32>
      %c2_i32_13 = arith.constant 2 : i32
      %13 = arith.muli %c2_i32_13, %arg6 : i32
      %14 = arith.index_cast %13 : i32 to index
      %c0_14 = arith.constant 0 : index
      %c0_15 = arith.constant 0 : index
      %15 = vector.load %arg3[%14, %c0_14, %c0_15] : memref<16x1x32xf32, #tpu.memory_space<vmem>>, vector<1x1x32xf32>
      %16 = vector.shape_cast %15 : vector<1x1x32xf32> to vector<1x32xf32>
      %c1 = arith.constant 1 : index
      %c1_16 = arith.constant 1 : index
      %c0_17 = arith.constant 0 : index
      %17 = vector.load %arg5[%c1, %c1_16, %c0_17] : memref<18x18x32xf32, #tpu.memory_space<vmem>>, vector<16x16x32xf32>
      tpu.vector_store %arg5[%c1, %c1_16, %c0_17], %arg7 {strides = array<i32>} : memref<18x18x32xf32, #tpu.memory_space<vmem>>, vector<16x16x32xf32>,
      %c0_18 = arith.constant 0 : index
      %c0_19 = arith.constant 0 : index
      %c0_20 = arith.constant 0 : index
      %18 = vector.load %arg5[%c0_18, %c0_19, %c0_20] : memref<18x18x32xf32, #tpu.memory_space<vmem>>, vector<16x16x32xf32>
      %19 = vector.shape_cast %18 : vector<16x16x32xf32> to vector<256x32xf32>
      %c0_21 = arith.constant 0 : index
      %c1_22 = arith.constant 1 : index
      %c0_23 = arith.constant 0 : index
      %20 = vector.load %arg5[%c0_21, %c1_22, %c0_23] : memref<18x18x32xf32, #tpu.memory_space<vmem>>, vector<16x16x32xf32>
      %21 = vector.shape_cast %20 : vector<16x16x32xf32> to vector<256x32xf32>
      %c0_24 = arith.constant 0 : index
      %c2 = arith.constant 2 : index
      %c0_25 = arith.constant 0 : index
      %22 = vector.load %arg5[%c0_24, %c2, %c0_25] : memref<18x18x32xf32, #tpu.memory_space<vmem>>, vector<16x16x32xf32>
      %23 = vector.shape_cast %22 : vector<16x16x32xf32> to vector<256x32xf32>
      %c1_26 = arith.constant 1 : index
      %c0_27 = arith.constant 0 : index
      %c0_28 = arith.constant 0 : index
      %24 = vector.load %arg5[%c1_26, %c0_27, %c0_28] : memref<18x18x32xf32, #tpu.memory_space<vmem>>, vector<16x16x32xf32>
      %25 = vector.shape_cast %24 : vector<16x16x32xf32> to vector<256x32xf32>
      %c1_29 = arith.constant 1 : index
      %c1_30 = arith.constant 1 : index
      %c0_31 = arith.constant 0 : index
      %26 = vector.load %arg5[%c1_29, %c1_30, %c0_31] : memref<18x18x32xf32, #tpu.memory_space<vmem>>, vector<16x16x32xf32>
      %27 = vector.shape_cast %26 : vector<16x16x32xf32> to vector<256x32xf32>
      %c1_32 = arith.constant 1 : index
      %c2_33 = arith.constant 2 : index
      %c0_34 = arith.constant 0 : index
      %28 = vector.load %arg5[%c1_32, %c2_33, %c0_34] : memref<18x18x32xf32, #tpu.memory_space<vmem>>, vector<16x16x32xf32>
      %29 = vector.shape_cast %28 : vector<16x16x32xf32> to vector<256x32xf32>
      %c2_35 = arith.constant 2 : index
      %c0_36 = arith.constant 0 : index
      %c0_37 = arith.constant 0 : index
      %30 = vector.load %arg5[%c2_35, %c0_36, %c0_37] : memref<18x18x32xf32, #tpu.memory_space<vmem>>, vector<16x16x32xf32>
      %31 = vector.shape_cast %30 : vector<16x16x32xf32> to vector<256x32xf32>
      %c2_38 = arith.constant 2 : index
      %c1_39 = arith.constant 1 : index
      %c0_40 = arith.constant 0 : index
      %32 = vector.load %arg5[%c2_38, %c1_39, %c0_40] : memref<18x18x32xf32, #tpu.memory_space<vmem>>, vector<16x16x32xf32>
      %33 = vector.shape_cast %32 : vector<16x16x32xf32> to vector<256x32xf32>
      %c2_41 = arith.constant 2 : index
      %c2_42 = arith.constant 2 : index
      %c0_43 = arith.constant 0 : index
      %34 = vector.load %arg5[%c2_41, %c2_42, %c0_43] : memref<18x18x32xf32, #tpu.memory_space<vmem>>, vector<16x16x32xf32>
      %35 = vector.shape_cast %34 : vector<16x16x32xf32> to vector<256x32xf32>
      %36 = tpu.concatenate %19, %21, %23, %25, %27, %29, %31, %33, %35 in 1 : vector<256x32xf32>, vector<256x32xf32>, vector<256x32xf32>, vector<256x32xf32>, vector<256x32xf32>, vector<256x32xf32>, vector<256x32xf32>, vector<256x32xf32>, vector<256x32xf32> -> vector<256x288xf32>
      %cst_44 = arith.constant dense<0.000000e+00> : vector<256x32xf32>
      %37 = tpu.matmul %36, %12, %cst_44 {dimension_numbers = #tpu.dot_dimension_numbers<[1], [0], [0], [1], [0, 0, 1, 1], [], []>} : vector<256x288xf32>, vector<288x32xf32>, vector<256x32xf32> -> vector<256x32xf32>
      %38 = vector.broadcast %16 : vector<1x32xf32> to vector<256x32xf32>
      %39 = arith.addf %37, %38 : vector<256x32xf32>
      %cst_45 = arith.constant 0.000000e+00 : f32
      %40 = vector.broadcast %cst_45 : f32 to vector<256x32xf32>
      %41 = arith.maximumf %39, %40 : vector<256x32xf32>
      %42 = vector.shape_cast %41 : vector<256x32xf32> to vector<16x16x32xf32>
      %c2_i32_46 = arith.constant 2 : i32
      %43 = arith.muli %c2_i32_46, %arg6 : i32
      %c1_i32_47 = arith.constant 1 : i32
      %44 = arith.addi %43, %c1_i32_47 : i32
      %45 = arith.index_cast %44 : i32 to index
      %c0_48 = arith.constant 0 : index
      %c0_49 = arith.constant 0 : index
      %46 = vector.load %arg2[%45, %c0_48, %c0_49] : memref<16x288x32xf32, #tpu.memory_space<vmem>>, vector<1x288x32xf32>
      %47 = vector.shape_cast %46 : vector<1x288x32xf32> to vector<288x32xf32>
      %c2_i32_50 = arith.constant 2 : i32
      %48 = arith.muli %c2_i32_50, %arg6 : i32
      %c1_i32_51 = arith.constant 1 : i32
      %49 = arith.addi %48, %c1_i32_51 : i32
      %50 = arith.index_cast %49 : i32 to index
      %c0_52 = arith.constant 0 : index
      %c0_53 = arith.constant 0 : index
      %51 = vector.load %arg3[%50, %c0_52, %c0_53] : memref<16x1x32xf32, #tpu.memory_space<vmem>>, vector<1x1x32xf32>
      %52 = vector.shape_cast %51 : vector<1x1x32xf32> to vector<1x32xf32>
      %c1_54 = arith.constant 1 : index
      %c1_55 = arith.constant 1 : index
      %c0_56 = arith.constant 0 : index
      %53 = vector.load %arg5[%c1_54, %c1_55, %c0_56] : memref<18x18x32xf32, #tpu.memory_space<vmem>>, vector<16x16x32xf32>
      tpu.vector_store %arg5[%c1_54, %c1_55, %c0_56], %42 {strides = array<i32>} : memref<18x18x32xf32, #tpu.memory_space<vmem>>, vector<16x16x32xf32>,
      %c0_57 = arith.constant 0 : index
      %c0_58 = arith.constant 0 : index
      %c0_59 = arith.constant 0 : index
      %54 = vector.load %arg5[%c0_57, %c0_58, %c0_59] : memref<18x18x32xf32, #tpu.memory_space<vmem>>, vector<16x16x32xf32>
      %55 = vector.shape_cast %54 : vector<16x16x32xf32> to vector<256x32xf32>
      %c0_60 = arith.constant 0 : index
      %c1_61 = arith.constant 1 : index
      %c0_62 = arith.constant 0 : index
      %56 = vector.load %arg5[%c0_60, %c1_61, %c0_62] : memref<18x18x32xf32, #tpu.memory_space<vmem>>, vector<16x16x32xf32>
      %57 = vector.shape_cast %56 : vector<16x16x32xf32> to vector<256x32xf32>
      %c0_63 = arith.constant 0 : index
      %c2_64 = arith.constant 2 : index
      %c0_65 = arith.constant 0 : index
      %58 = vector.load %arg5[%c0_63, %c2_64, %c0_65] : memref<18x18x32xf32, #tpu.memory_space<vmem>>, vector<16x16x32xf32>
      %59 = vector.shape_cast %58 : vector<16x16x32xf32> to vector<256x32xf32>
      %c1_66 = arith.constant 1 : index
      %c0_67 = arith.constant 0 : index
      %c0_68 = arith.constant 0 : index
      %60 = vector.load %arg5[%c1_66, %c0_67, %c0_68] : memref<18x18x32xf32, #tpu.memory_space<vmem>>, vector<16x16x32xf32>
      %61 = vector.shape_cast %60 : vector<16x16x32xf32> to vector<256x32xf32>
      %c1_69 = arith.constant 1 : index
      %c1_70 = arith.constant 1 : index
      %c0_71 = arith.constant 0 : index
      %62 = vector.load %arg5[%c1_69, %c1_70, %c0_71] : memref<18x18x32xf32, #tpu.memory_space<vmem>>, vector<16x16x32xf32>
      %63 = vector.shape_cast %62 : vector<16x16x32xf32> to vector<256x32xf32>
      %c1_72 = arith.constant 1 : index
      %c2_73 = arith.constant 2 : index
      %c0_74 = arith.constant 0 : index
      %64 = vector.load %arg5[%c1_72, %c2_73, %c0_74] : memref<18x18x32xf32, #tpu.memory_space<vmem>>, vector<16x16x32xf32>
      %65 = vector.shape_cast %64 : vector<16x16x32xf32> to vector<256x32xf32>
      %c2_75 = arith.constant 2 : index
      %c0_76 = arith.constant 0 : index
      %c0_77 = arith.constant 0 : index
      %66 = vector.load %arg5[%c2_75, %c0_76, %c0_77] : memref<18x18x32xf32, #tpu.memory_space<vmem>>, vector<16x16x32xf32>
      %67 = vector.shape_cast %66 : vector<16x16x32xf32> to vector<256x32xf32>
      %c2_78 = arith.constant 2 : index
      %c1_79 = arith.constant 1 : index
      %c0_80 = arith.constant 0 : index
      %68 = vector.load %arg5[%c2_78, %c1_79, %c0_80] : memref<18x18x32xf32, #tpu.memory_space<vmem>>, vector<16x16x32xf32>
      %69 = vector.shape_cast %68 : vector<16x16x32xf32> to vector<256x32xf32>
      %c2_81 = arith.constant 2 : index
      %c2_82 = arith.constant 2 : index
      %c0_83 = arith.constant 0 : index
      %70 = vector.load %arg5[%c2_81, %c2_82, %c0_83] : memref<18x18x32xf32, #tpu.memory_space<vmem>>, vector<16x16x32xf32>
      %71 = vector.shape_cast %70 : vector<16x16x32xf32> to vector<256x32xf32>
      %72 = tpu.concatenate %55, %57, %59, %61, %63, %65, %67, %69, %71 in 1 : vector<256x32xf32>, vector<256x32xf32>, vector<256x32xf32>, vector<256x32xf32>, vector<256x32xf32>, vector<256x32xf32>, vector<256x32xf32>, vector<256x32xf32>, vector<256x32xf32> -> vector<256x288xf32>
      %cst_84 = arith.constant dense<0.000000e+00> : vector<256x32xf32>
      %73 = tpu.matmul %72, %47, %cst_84 {dimension_numbers = #tpu.dot_dimension_numbers<[1], [0], [0], [1], [0, 0, 1, 1], [], []>} : vector<256x288xf32>, vector<288x32xf32>, vector<256x32xf32> -> vector<256x32xf32>
      %74 = vector.broadcast %52 : vector<1x32xf32> to vector<256x32xf32>
      %75 = arith.addf %73, %74 : vector<256x32xf32>
      %76 = vector.shape_cast %75 : vector<256x32xf32> to vector<16x16x32xf32>
      %77 = arith.addf %76, %arg7 : vector<16x16x32xf32>
      scf.yield %77 : vector<16x16x32xf32>
    }
    %c8_i32_6 = arith.constant 8 : i32
    %c0_7 = arith.constant 0 : index
    %c0_8 = arith.constant 0 : index
    %c0_9 = arith.constant 0 : index
    %c0_10 = arith.constant 0 : index
    %6 = vector.load %arg4[%c0_7, %c0_8, %c0_9, %c0_10] : memref<1x16x16x32xf32, #tpu.memory_space<vmem>>, vector<1x16x16x32xf32>
    %7 = vector.shape_cast %6 : vector<1x16x16x32xf32> to vector<16x16x32xf32>
    %8 = vector.shape_cast %5 : vector<16x16x32xf32> to vector<1x16x16x32xf32>
    tpu.vector_store %arg4[%c0_7, %c0_8, %c0_9, %c0_10], %8 {strides = array<i32>} : memref<1x16x16x32xf32, #tpu.memory_space<vmem>>, vector<1x16x16x32xf32>,
    return
  }
  func.func @transform_0(%arg0: i32) -> (i32, i32, i32, i32) {
    %c0_i32 = arith.constant 0 : i32
    %c0_i32_0 = arith.constant 0 : i32
    %c0_i32_1 = arith.constant 0 : i32
    %c0_i32_2 = arith.constant 0 : i32
    return %arg0, %c0_i32, %c0_i32_0, %c0_i32_1 : i32, i32, i32, i32
  }
  func.func @transform_1(%arg0: i32) -> (i32, i32, i32) {
    %c0_i32 = arith.constant 0 : i32
    %c0_i32_0 = arith.constant 0 : i32
    %c0_i32_1 = arith.constant 0 : i32
    %c0_i32_2 = arith.constant 0 : i32
    return %c0_i32, %c0_i32_0, %c0_i32_1 : i32, i32, i32
  }
  func.func @transform_2(%arg0: i32) -> (i32, i32, i32) {
    %c0_i32 = arith.constant 0 : i32
    %c0_i32_0 = arith.constant 0 : i32
    %c0_i32_1 = arith.constant 0 : i32
    %c0_i32_2 = arith.constant 0 : i32
    return %c0_i32, %c0_i32_0, %c0_i32_1 : i32, i32, i32
  }
  func.func @transform_3(%arg0: i32) -> (i32, i32, i32, i32) {
    %c0_i32 = arith.constant 0 : i32
    %c0_i32_0 = arith.constant 0 : i32
    %c0_i32_1 = arith.constant 0 : i32
    %c0_i32_2 = arith.constant 0 : i32
    return %arg0, %c0_i32, %c0_i32_0, %c0_i32_1 : i32, i32, i32, i32
  }
}

</mosaic_0001>

<llo_original>
// kernel: eblock_forward.1
$region0: #{eblock_forward.1}
  #allocation0 [shape = 'u32[]', space=smem, size = 0x4, offset = 0x4, fixed_abs, tag = 'smem constant byte address 0x4 - core index']
  #allocation1 [shape = 'u32[72,128]{1,0:T(1,128)}', space=vmem, size = 0x9000, scoped, tag = 'internal scratch']
  #allocation2 [shape = 'f32[18,18,32]{2,1,0:T(8,128)}', space=vmem, size = 0x36000, scoped, tag = 'scratch operand']
  %s0 = inlined_call_operand.vmem [shape: f32[2,16,16,32], index: 0, kind: input, shape index: {}]
  %s1 = inlined_call_operand.vmem [shape: f32[16,288,32], index: 1, kind: input, shape index: {}]
  %s2 = inlined_call_operand.vmem [shape: f32[16,1,32], index: 2, kind: input, shape index: {}]
  %s3 = inlined_call_operand.hbm [shape: f32[2,16,16,32], index: 3, kind: output, shape index: {}]
  %s4 = sld [smem:[#allocation0]]
  $region52: #{eblock_forward.1} parent=0
    _
  %s6 = ssub.s32 1, %s4
  %s7 = scalar_select 0, %s6, %s4
  $region1: #{eblock_forward.1} parent=0
    #allocation3 [shape = 'u8[262144]{0}', space=vmem, size = 0x40000, scoped, tag = 'output window, operand 0']
    #allocation4 [shape = 's32[2]{0}', space=sflag, size = 0x8, scoped, tag = 'scoped memory for eblock_forward.1']
    %8 = vsyncpa [#allocation4], 0
    %s9 = scalar_lea.sflag [#allocation4], 1
    %10 = vsyncpa %s9, 0
    loop: start=0, step=1, limit=4
    $region2: #{eblock_forward.1} parent=1 // loop_pre_header
      _
    $region3: #{eblock_forward.1} parent=1 // loop_header
      %s12 = sphi 0, %s16
      %p13 = scmp.ge.s32.totalorder %s12, 4
      %s22 = sphi 0, %s24
      %s25 = sphi 0, %s22
      %s26 = sphi 0, %s25
      %s42 = sphi 0, %s26
      %s46 = sphi 0, %s46
      %s48 = sphi 0, %s46
      %s49 = sphi 0, %s48
      %s63 = sphi 0, %s49
      %s67 = sphi 0, %s67
      %s69 = sphi 0, %s67
      %s70 = sphi 0, %s69
      %s84 = sphi 0, %s70
      %s90 = sphi 0, %s92
      %s93 = sphi 0, %s90
      %s94 = sphi 0, %s93
      %s110 = sphi 0, %s94
    $region4: #{eblock_forward.1} parent=1 // loop_header_branch
      %15 = sbr.rel (%p13) target = $region8
    $region5: #{eblock_forward.1} parent=1 // loop_body
      %s17 = ssub.s32 %s12, 1
      %s18 = ssub.s32 %s12, 2
      %s19 = sadd.s32 %s12, 1
      %s20 = ssub.s32 %s12, %s19
      %p21 = scmp.eq.s32.totalorder %s20, 0
      %s23 = sadd.s32 %s22, 1
      %s24 = scalar_select %p21, %s22, %s23
      %p27 = pneg %p21
      %p28 = scmp.eq.s32.totalorder %s12, 1
      %p29 = por %p27, %p28
      %p30 = scmp.ne.s32.totalorder %s22, %s25
      %p31 = scmp.eq.s32.totalorder %s12, 0
      %p32 = por %p30, %p31
      %p33 = scmp.ne.s32.totalorder %s22, %s25
      %p34 = scmp.eq.s32.totalorder %s17, 1
      %p35 = por %p33, %p34
      %p36 = scmp.ne.s32.totalorder %s25, %s26
      %p37 = scmp.eq.s32.totalorder %s17, 0
      %p38 = por %p36, %p37
      %p39 = scmp.ne.s32.totalorder %s25, %s26
      %p40 = scmp.eq.s32.totalorder %s18, 1
      %p41 = por %p39, %p40
      %p43 = scmp.ne.s32.totalorder %s26, %s42
      %p44 = scmp.eq.s32.totalorder %s18, 0
      %p45 = por %p43, %p44
      %s47 = sadd.s32 %s46, 1
      %p50 = scmp.eq.s32.totalorder %s12, 1
      %p51 = scmp.ne.s32.totalorder %s46, %s48
      %p52 = scmp.eq.s32.totalorder %s12, 0
      %p53 = por %p51, %p52
      %p54 = scmp.ne.s32.totalorder %s46, %s48
      %p55 = scmp.eq.s32.totalorder %s17, 1
      %p56 = por %p54, %p55
      %p57 = scmp.ne.s32.totalorder %s48, %s49
      %p58 = scmp.eq.s32.totalorder %s17, 0
      %p59 = por %p57, %p58
      %p60 = scmp.ne.s32.totalorder %s48, %s49
      %p61 = scmp.eq.s32.totalorder %s18, 1
      %p62 = por %p60, %p61
      %p64 = scmp.ne.s32.totalorder %s49, %s63
      %p65 = scmp.eq.s32.totalorder %s18, 0
      %p66 = por %p64, %p65
      %s68 = sadd.s32 %s67, 1
      %p71 = scmp.eq.s32.totalorder %s12, 1
      %p72 = scmp.ne.s32.totalorder %s67, %s69
      %p73 = scmp.eq.s32.totalorder %s12, 0
      %p74 = por %p72, %p73
      %p75 = scmp.ne.s32.totalorder %s67, %s69
      %p76 = scmp.eq.s32.totalorder %s17, 1
      %p77 = por %p75, %p76
      %p78 = scmp.ne.s32.totalorder %s69, %s70
      %p79 = scmp.eq.s32.totalorder %s17, 0
      %p80 = por %p78, %p79
      %p81 = scmp.ne.s32.totalorder %s69, %s70
      %p82 = scmp.eq.s32.totalorder %s18, 1
      %p83 = por %p81, %p82
      %p85 = scmp.ne.s32.totalorder %s70, %s84
      %p86 = scmp.eq.s32.totalorder %s18, 0
      %p87 = por %p85, %p86
      %s88 = ssub.s32 %s12, %s19
      %p89 = scmp.eq.s32.totalorder %s88, 0
      %s91 = sadd.s32 %s90, 1
      %s92 = scalar_select %p89, %s90, %s91
      %p95 = pneg %p89
      %p96 = scmp.eq.s32.totalorder %s12, 1
      %p97 = por %p95, %p96
      %p98 = scmp.ne.s32.totalorder %s90, %s93
      %p99 = scmp.eq.s32.totalorder %s12, 0
      %p100 = por %p98, %p99
      %p101 = scmp.ne.s32.totalorder %s90, %s93
      %p102 = scmp.eq.s32.totalorder %s17, 1
      %p103 = por %p101, %p102
      %p104 = scmp.ne.s32.totalorder %s93, %s94
      %p105 = scmp.eq.s32.totalorder %s17, 0
      %p106 = por %p104, %p105
      %p107 = scmp.ne.s32.totalorder %s93, %s94
      %p108 = scmp.eq.s32.totalorder %s18, 1
      %p109 = por %p107, %p108
      %p111 = scmp.ne.s32.totalorder %s94, %s110
      %p112 = scmp.eq.s32.totalorder %s18, 0
      %p113 = por %p111, %p112
      %p114 = scmp.le.s32.totalorder 1, %s12
      %p115 = scmp.lt.s32.totalorder %s12, 3
      %p116 = pnand %p114, %p115
      %p117 = pneg %p116
      // Predicated region
      $region9: #{eblock_forward.1} parent=5 // pred_check
        _
      $region10: #{eblock_forward.1} parent=5 // pred_check_branch
        %119 = sbr.rel (%p116) target = $region12
      $region11: #{eblock_forward.1} parent=5 // pred_region
        %s120 = ssub.s32 %s12, 1
        // Predicated region
        $region13: #{eblock_forward.1} parent=11 // pred_check
          %p121 = pneg %p59
        $region14: #{eblock_forward.1} parent=11 // pred_check_branch
          %123 = sbr.rel (%p121) target = $region16
        $region15: #{eblock_forward.1} parent=11 // pred_region
          _
        $region16: #{eblock_forward.1} parent=11 // pred_fallthru
          _
        // Predicated region
        $region17: #{eblock_forward.1} parent=11 // pred_check
          %p124 = pneg %p80
        $region18: #{eblock_forward.1} parent=11 // pred_check_branch
          %126 = sbr.rel (%p124) target = $region20
        $region19: #{eblock_forward.1} parent=11 // pred_region
          _
        $region20: #{eblock_forward.1} parent=11 // pred_fallthru
          _
      $region12: #{eblock_forward.1} parent=5 // pred_fallthru
        _
      %p127 = scmp.lt.s32.totalorder %s12, 2
      // Predicated region
      $region21: #{eblock_forward.1} parent=5 // pred_check
        %p128 = pneg %p127
      $region22: #{eblock_forward.1} parent=5 // pred_check_branch
        %130 = sbr.rel (%p128) target = $region24
      $region23: #{eblock_forward.1} parent=5 // pred_region
        // Predicated region
        $region25: #{eblock_forward.1} parent=23 // pred_check
          %p131 = pneg %p32
        $region26: #{eblock_forward.1} parent=23 // pred_check_branch
          %133 = sbr.rel (%p131) target = $region28
        $region27: #{eblock_forward.1} parent=23 // pred_region
          %p134 = scmp.lt.s32.totalorder %s12, 1
          %s135 = scalar_select %p134, %s12, 1
          %s136 = smul.addr %s135, 32
          %s137 = smul.addr %s136, 8
          %s138 = scalar_lea.vmem %s0, %s137
        $region28: #{eblock_forward.1} parent=23 // pred_fallthru
          _
      $region24: #{eblock_forward.1} parent=5 // pred_fallthru
        _
      %p139 = scmp.le.s32.totalorder 1, %s12
      %p140 = scmp.lt.s32.totalorder %s12, 3
      %p141 = pnand %p139, %p140
      %p142 = pneg %p141
      // Predicated region
      $region29: #{eblock_forward.1} parent=5 // pred_check
        _
      $region30: #{eblock_forward.1} parent=5 // pred_check_branch
        %144 = sbr.rel (%p141) target = $region32
      $region31: #{eblock_forward.1} parent=5 // pred_region
        %s145 = ssub.s32 %s12, 1
        %p146 = scmp.lt.s32.totalorder %s17, 1
        %s147 = scalar_select %p146, %s17, 1
        %s148 = smul.addr %s147, 32
        %s149 = smul.addr %s148, 8
        %s150 = scalar_lea.vmem %s0, %s149
        %p151 = pneg %p38
        %p152 = pneg %p35
        %p153 = pneg %p59
        %p154 = pneg %p56
        %p155 = pneg %p80
        %p156 = pneg %p77
        %p157 = pneg %p106
        %p158 = pneg %p103
        %s159 = sand.u32 %s93, 1
        %s160 = scalar_lea.sflag [#allocation4], %s159
        %s161 = sand.u32 %s93, 1
        %s162 = smul.addr %s161, 256
        %s163 = scalar_lea.vmem [#allocation3], %s162
        %p164 = scmp.lt.s32.totalorder %s17, 1
        %s165 = scalar_select %p164, %s17, 1
        %s166 = smul.addr %s165, 32
        %s167 = smul.addr %s166, 8
        %s168 = scalar_lea.vmem %s0, %s167
        %vm169 = vcmask 261120
        %170 = vst.msk [vmem:[#allocation2] sm:$0xff] %vm169, 0.0
        %171 = vst.msk [vmem:[#allocation2 + $0x8] sm:$0xff] %vm169, 0.0
        %vm172 = vcmask 254976
        %173 = vst.msk [vmem:[#allocation2 + $0x10] sm:$0x3] %vm172, 0.0
        %174 = vst.msk [vmem:[#allocation2 + $0x18] sm:$0xff] %vm169, 0.0
        %175 = vst.msk [vmem:[#allocation2 + $0x20] sm:$0xff] %vm169, 0.0
        %176 = vst.msk [vmem:[#allocation2 + $0x28] sm:$0x3] %vm172, 0.0
        %177 = vst.msk [vmem:[#allocation2 + $0x30] sm:$0xff] %vm169, 0.0
        %178 = vst.msk [vmem:[#allocation2 + $0x38] sm:$0xff] %vm169, 0.0
        %179 = vst.msk [vmem:[#allocation2 + $0x40] sm:$0x3] %vm172, 0.0
        %180 = vst.msk [vmem:[#allocation2 + $0x48] sm:$0xff] %vm169, 0.0
        %181 = vst.msk [vmem:[#allocation2 + $0x50] sm:$0xff] %vm169, 0.0
        %182 = vst.msk [vmem:[#allocation2 + $0x58] sm:$0x3] %vm172, 0.0
        %183 = vst.msk [vmem:[#allocation2 + $0x60] sm:$0xff] %vm169, 0.0
        %184 = vst.msk [vmem:[#allocation2 + $0x68] sm:$0xff] %vm169, 0.0
        %185 = vst.msk [vmem:[#allocation2 + $0x70] sm:$0x3] %vm172, 0.0
        %186 = vst.msk [vmem:[#allocation2 + $0x78] sm:$0xff] %vm169, 0.0
        %187 = vst.msk [vmem:[#allocation2 + $0x80] sm:$0xff] %vm169, 0.0
        %188 = vst.msk [vmem:[#allocation2 + $0x88] sm:$0x3] %vm172, 0.0
        %189 = vst.msk [vmem:[#allocation2 + $0x90] sm:$0xff] %vm169, 0.0
        %190 = vst.msk [vmem:[#allocation2 + $0x98] sm:$0xff] %vm169, 0.0
        %191 = vst.msk [vmem:[#allocation2 + $0xa0] sm:$0x3] %vm172, 0.0
        %192 = vst.msk [vmem:[#allocation2 + $0xa8] sm:$0xff] %vm169, 0.0
        %193 = vst.msk [vmem:[#allocation2 + $0xb0] sm:$0xff] %vm169, 0.0
        %194 = vst.msk [vmem:[#allocation2 + $0xb8] sm:$0x3] %vm172, 0.0
        %195 = vst.msk [vmem:[#allocation2 + $0xc0] sm:$0xff] %vm169, 0.0
        %196 = vst.msk [vmem:[#allocation2 + $0xc8] sm:$0xff] %vm169, 0.0
        %197 = vst.msk [vmem:[#allocation2 + $0xd0] sm:$0x3] %vm172, 0.0
        %198 = vst.msk [vmem:[#allocation2 + $0xd8] sm:$0xff] %vm169, 0.0
        %199 = vst.msk [vmem:[#allocation2 + $0xe0] sm:$0xff] %vm169, 0.0
        %200 = vst.msk [vmem:[#allocation2 + $0xe8] sm:$0x3] %vm172, 0.0
        %201 = vst.msk [vmem:[#allocation2 + $0xf0] sm:$0xff] %vm169, 0.0
        %202 = vst.msk [vmem:[#allocation2 + $0xf8] sm:$0xff] %vm169, 0.0
        %203 = vst.msk [vmem:[#allocation2 + $0x100] sm:$0x3] %vm172, 0.0
        %204 = vst.msk [vmem:[#allocation2 + $0x108] sm:$0xff] %vm169, 0.0
        %205 = vst.msk [vmem:[#allocation2 + $0x110] sm:$0xff] %vm169, 0.0
        %206 = vst.msk [vmem:[#allocation2 + $0x118] sm:$0x3] %vm172, 0.0
        %207 = vst.msk [vmem:[#allocation2 + $0x120] sm:$0xff] %vm169, 0.0
        %208 = vst.msk [vmem:[#allocation2 + $0x128] sm:$0xff] %vm169, 0.0
        %209 = vst.msk [vmem:[#allocation2 + $0x130] sm:$0x3] %vm172, 0.0
        %210 = vst.msk [vmem:[#allocation2 + $0x138] sm:$0xff] %vm169, 0.0
        %211 = vst.msk [vmem:[#allocation2 + $0x140] sm:$0xff] %vm169, 0.0
        %212 = vst.msk [vmem:[#allocation2 + $0x148] sm:$0x3] %vm172, 0.0
        %213 = vst.msk [vmem:[#allocation2 + $0x150] sm:$0xff] %vm169, 0.0
        %214 = vst.msk [vmem:[#allocation2 + $0x158] sm:$0xff] %vm169, 0.0
        %215 = vst.msk [vmem:[#allocation2 + $0x160] sm:$0x3] %vm172, 0.0
        %216 = vst.msk [vmem:[#allocation2 + $0x168] sm:$0xff] %vm169, 0.0
        %217 = vst.msk [vmem:[#allocation2 + $0x170] sm:$0xff] %vm169, 0.0
        %218 = vst.msk [vmem:[#allocation2 + $0x178] sm:$0x3] %vm172, 0.0
        %219 = vst.msk [vmem:[#allocation2 + $0x180] sm:$0xff] %vm169, 0.0
        %220 = vst.msk [vmem:[#allocation2 + $0x188] sm:$0xff] %vm169, 0.0
        %221 = vst.msk [vmem:[#allocation2 + $0x190] sm:$0x3] %vm172, 0.0
        %222 = vst.msk [vmem:[#allocation2 + $0x198] sm:$0xff] %vm169, 0.0
        %223 = vst.msk [vmem:[#allocation2 + $0x1a0] sm:$0xff] %vm169, 0.0
        %224 = vst.msk [vmem:[#allocation2 + $0x1a8] sm:$0x3] %vm172, 0.0
        %v225 = vld [vmem:[%s168] sm:$0xff]
        %v226 = vld [vmem:[%s168 + $0x8] sm:$0xff]
        %v227 = vld [vmem:[%s168 + $0x10] sm:$0xff]
        %v228 = vld [vmem:[%s168 + $0x18] sm:$0xff]
        %v229 = vld [vmem:[%s168 + $0x20] sm:$0xff]
        %v230 = vld [vmem:[%s168 + $0x28] sm:$0xff]
        %v231 = vld [vmem:[%s168 + $0x30] sm:$0xff]
        %v232 = vld [vmem:[%s168 + $0x38] sm:$0xff]
        %v233 = vld [vmem:[%s168 + $0x40] sm:$0xff]
        %v234 = vld [vmem:[%s168 + $0x48] sm:$0xff]
        %v235 = vld [vmem:[%s168 + $0x50] sm:$0xff]
        %v236 = vld [vmem:[%s168 + $0x58] sm:$0xff]
        %v237 = vld [vmem:[%s168 + $0x60] sm:$0xff]
        %v238 = vld [vmem:[%s168 + $0x68] sm:$0xff]
        %v239 = vld [vmem:[%s168 + $0x70] sm:$0xff]
        %v240 = vld [vmem:[%s168 + $0x78] sm:$0xff]
        %v241 = vld [vmem:[%s168 + $0x80] sm:$0xff]
        %v242 = vld [vmem:[%s168 + $0x88] sm:$0xff]
        %v243 = vld [vmem:[%s168 + $0x90] sm:$0xff]
        %v244 = vld [vmem:[%s168 + $0x98] sm:$0xff]
        %v245 = vld [vmem:[%s168 + $0xa0] sm:$0xff]
        %v246 = vld [vmem:[%s168 + $0xa8] sm:$0xff]
        %v247 = vld [vmem:[%s168 + $0xb0] sm:$0xff]
        %v248 = vld [vmem:[%s168 + $0xb8] sm:$0xff]
        %v249 = vld [vmem:[%s168 + $0xc0] sm:$0xff]
        %v250 = vld [vmem:[%s168 + $0xc8] sm:$0xff]
        %v251 = vld [vmem:[%s168 + $0xd0] sm:$0xff]
        %v252 = vld [vmem:[%s168 + $0xd8] sm:$0xff]
        %v253 = vld [vmem:[%s168 + $0xe0] sm:$0xff]
        %v254 = vld [vmem:[%s168 + $0xe8] sm:$0xff]
        %v255 = vld [vmem:[%s168 + $0xf0] sm:$0xff]
        %v256 = vld [vmem:[%s168 + $0xf8] sm:$0xff]
        loop: start=0, step=1, limit=8
        $region33: #{eblock_forward.1} parent=31 // loop_pre_header
          _
        $region34: #{eblock_forward.1} parent=31 // loop_header
          %s258 = sphi 0, %s262
          %p259 = scmp.ge.s32.totalorder %s258, 8
          %v263 = vphi %v225, %v3849
          %v264 = vphi %v226, %v3850
          %v265 = vphi %v227, %v3851
          %v266 = vphi %v228, %v3852
          %v267 = vphi %v229, %v3853
          %v268 = vphi %v230, %v3854
          %v269 = vphi %v231, %v3855
          %v270 = vphi %v232, %v3856
          %v271 = vphi %v233, %v3857
          %v272 = vphi %v234, %v3858
          %v273 = vphi %v235, %v3859
          %v274 = vphi %v236, %v3860
          %v275 = vphi %v237, %v3861
          %v276 = vphi %v238, %v3862
          %v277 = vphi %v239, %v3863
          %v278 = vphi %v240, %v3864
          %v279 = vphi %v241, %v3865
          %v280 = vphi %v242, %v3866
          %v281 = vphi %v243, %v3867
          %v282 = vphi %v244, %v3868
          %v283 = vphi %v245, %v3869
          %v284 = vphi %v246, %v3870
          %v285 = vphi %v247, %v3871
          %v286 = vphi %v248, %v3872
          %v287 = vphi %v249, %v3873
          %v288 = vphi %v250, %v3874
          %v289 = vphi %v251, %v3875
          %v290 = vphi %v252, %v3876
          %v291 = vphi %v253, %v3877
          %v292 = vphi %v254, %v3878
          %v293 = vphi %v255, %v3879
          %v294 = vphi %v256, %v3880
        $region35: #{eblock_forward.1} parent=31 // loop_header_branch
          %261 = sbr.rel (%p259) target = $region39
        $region36: #{eblock_forward.1} parent=31 // loop_body
          %s295 = smul.u32 %s258, 2
          %s296 = smul.u32 %s295, 288
          %s297 = scalar_lea.vmem %s1, %s296
          %v298 = vld [vmem:[%s297] sm:$0xff]
          %v299 = vld [vmem:[%s297 + $0x8] sm:$0xff]
          %v300 = vld [vmem:[%s297 + $0x10] sm:$0xff]
          %v301 = vld [vmem:[%s297 + $0x18] sm:$0xff]
          %v302 = vld [vmem:[%s297 + $0x20] sm:$0xff]
          %v303 = vld [vmem:[%s297 + $0x28] sm:$0xff]
          %v304 = vld [vmem:[%s297 + $0x30] sm:$0xff]
          %v305 = vld [vmem:[%s297 + $0x38] sm:$0xff]
          %v306 = vld [vmem:[%s297 + $0x40] sm:$0xff]
          %v307 = vld [vmem:[%s297 + $0x48] sm:$0xff]
          %v308 = vld [vmem:[%s297 + $0x50] sm:$0xff]
          %v309 = vld [vmem:[%s297 + $0x58] sm:$0xff]
          %v310 = vld [vmem:[%s297 + $0x60] sm:$0xff]
          %v311 = vld [vmem:[%s297 + $0x68] sm:$0xff]
          %v312 = vld [vmem:[%s297 + $0x70] sm:$0xff]
          %v313 = vld [vmem:[%s297 + $0x78] sm:$0xff]
          %v314 = vld [vmem:[%s297 + $0x80] sm:$0xff]
          %v315 = vld [vmem:[%s297 + $0x88] sm:$0xff]
          %v316 = vld [vmem:[%s297 + $0x90] sm:$0xff]
          %v317 = vld [vmem:[%s297 + $0x98] sm:$0xff]
          %v318 = vld [vmem:[%s297 + $0xa0] sm:$0xff]
          %v319 = vld [vmem:[%s297 + $0xa8] sm:$0xff]
          %v320 = vld [vmem:[%s297 + $0xb0] sm:$0xff]
          %v321 = vld [vmem:[%s297 + $0xb8] sm:$0xff]
          %v322 = vld [vmem:[%s297 + $0xc0] sm:$0xff]
          %v323 = vld [vmem:[%s297 + $0xc8] sm:$0xff]
          %v324 = vld [vmem:[%s297 + $0xd0] sm:$0xff]
          %v325 = vld [vmem:[%s297 + $0xd8] sm:$0xff]
          %v326 = vld [vmem:[%s297 + $0xe0] sm:$0xff]
          %v327 = vld [vmem:[%s297 + $0xe8] sm:$0xff]
          %v328 = vld [vmem:[%s297 + $0xf0] sm:$0xff]
          %v329 = vld [vmem:[%s297 + $0xf8] sm:$0xff]
          %v330 = vld [vmem:[%s297 + $0x100] sm:$0xff]
          %v331 = vld [vmem:[%s297 + $0x108] sm:$0xff]
          %v332 = vld [vmem:[%s297 + $0x110] sm:$0xff]
          %v333 = vld [vmem:[%s297 + $0x118] sm:$0xff]
          %s334 = scalar_lea.vmem %s2, %s295
          %v335 = vld [vmem:[%s334] sm:$0x1]
          %s336 = scalar_lea.vmem [#allocation2], 24
          %337 = vst.msk [vmem:[%s336 + $0x1] sm:$0xff] %vm169, %v263
          %338 = vst.msk [vmem:[%s336 + $0x9] sm:$0xff] %vm169, %v264
          %339 = vst.msk [vmem:[%s336 + $0x19] sm:$0xff] %vm169, %v265
          %340 = vst.msk [vmem:[%s336 + $0x21] sm:$0xff] %vm169, %v266
          %341 = vst.msk [vmem:[%s336 + $0x31] sm:$0xff] %vm169, %v267
          %342 = vst.msk [vmem:[%s336 + $0x39] sm:$0xff] %vm169, %v268
          %343 = vst.msk [vmem:[%s336 + $0x49] sm:$0xff] %vm169, %v269
          %344 = vst.msk [vmem:[%s336 + $0x51] sm:$0xff] %vm169, %v270
          %345 = vst.msk [vmem:[%s336 + $0x61] sm:$0xff] %vm169, %v271
          %346 = vst.msk [vmem:[%s336 + $0x69] sm:$0xff] %vm169, %v272
          %347 = vst.msk [vmem:[%s336 + $0x79] sm:$0xff] %vm169, %v273
          %348 = vst.msk [vmem:[%s336 + $0x81] sm:$0xff] %vm169, %v274
          %349 = vst.msk [vmem:[%s336 + $0x91] sm:$0xff] %vm169, %v275
          %350 = vst.msk [vmem:[%s336 + $0x99] sm:$0xff] %vm169, %v276
          %351 = vst.msk [vmem:[%s336 + $0xa9] sm:$0xff] %vm169, %v277
          %352 = vst.msk [vmem:[%s336 + $0xb1] sm:$0xff] %vm169, %v278
          %353 = vst.msk [vmem:[%s336 + $0xc1] sm:$0xff] %vm169, %v279
          %354 = vst.msk [vmem:[%s336 + $0xc9] sm:$0xff] %vm169, %v280
          %355 = vst.msk [vmem:[%s336 + $0xd9] sm:$0xff] %vm169, %v281
          %356 = vst.msk [vmem:[%s336 + $0xe1] sm:$0xff] %vm169, %v282
          %357 = vst.msk [vmem:[%s336 + $0xf1] sm:$0xff] %vm169, %v283
          %358 = vst.msk [vmem:[%s336 + $0xf9] sm:$0xff] %vm169, %v284
          %359 = vst.msk [vmem:[%s336 + $0x109] sm:$0xff] %vm169, %v285
          %360 = vst.msk [vmem:[%s336 + $0x111] sm:$0xff] %vm169, %v286
          %361 = vst.msk [vmem:[%s336 + $0x121] sm:$0xff] %vm169, %v287
          %362 = vst.msk [vmem:[%s336 + $0x129] sm:$0xff] %vm169, %v288
          %363 = vst.msk [vmem:[%s336 + $0x139] sm:$0xff] %vm169, %v289
          %364 = vst.msk [vmem:[%s336 + $0x141] sm:$0xff] %vm169, %v290
          %365 = vst.msk [vmem:[%s336 + $0x151] sm:$0xff] %vm169, %v291
          %366 = vst.msk [vmem:[%s336 + $0x159] sm:$0xff] %vm169, %v292
          %367 = vst.msk [vmem:[%s336 + $0x169] sm:$0xff] %vm169, %v293
          %368 = vst.msk [vmem:[%s336 + $0x171] sm:$0xff] %vm169, %v294
          %v369 = vld [vmem:[#allocation2] sm:$0xff]
          %v370 = vld [vmem:[#allocation2 + $0x8] sm:$0xff]
          %v371 = vld [vmem:[#allocation2 + $0x18] sm:$0xff]
          %v372 = vld [vmem:[#allocation2 + $0x20] sm:$0xff]
          %v373 = vld [vmem:[#allocation2 + $0x30] sm:$0xff]
          %v374 = vld [vmem:[#allocation2 + $0x38] sm:$0xff]
          %v375 = vld [vmem:[#allocation2 + $0x48] sm:$0xff]
          %v376 = vld [vmem:[#allocation2 + $0x50] sm:$0xff]
          %v377 = vld [vmem:[#allocation2 + $0x60] sm:$0xff]
          %v378 = vld [vmem:[#allocation2 + $0x68] sm:$0xff]
          %v379 = vld [vmem:[#allocation2 + $0x78] sm:$0xff]
          %v380 = vld [vmem:[#allocation2 + $0x80] sm:$0xff]
          %v381 = vld [vmem:[#allocation2 + $0x90] sm:$0xff]
          %v382 = vld [vmem:[#allocation2 + $0x98] sm:$0xff]
          %v383 = vld [vmem:[#allocation2 + $0xa8] sm:$0xff]
          %v384 = vld [vmem:[#allocation2 + $0xb0] sm:$0xff]
          %v385 = vld [vmem:[#allocation2 + $0xc0] sm:$0xff]
          %v386 = vld [vmem:[#allocation2 + $0xc8] sm:$0xff]
          %v387 = vld [vmem:[#allocation2 + $0xd8] sm:$0xff]
          %v388 = vld [vmem:[#allocation2 + $0xe0] sm:$0xff]
          %v389 = vld [vmem:[#allocation2 + $0xf0] sm:$0xff]
          %v390 = vld [vmem:[#allocation2 + $0xf8] sm:$0xff]
          %v391 = vld [vmem:[#allocation2 + $0x108] sm:$0xff]
          %v392 = vld [vmem:[#allocation2 + $0x110] sm:$0xff]
          %v393 = vld [vmem:[#allocation2 + $0x120] sm:$0xff]
          %v394 = vld [vmem:[#allocation2 + $0x128] sm:$0xff]
          %v395 = vld [vmem:[#allocation2 + $0x138] sm:$0xff]
          %v396 = vld [vmem:[#allocation2 + $0x140] sm:$0xff]
          %v397 = vld [vmem:[#allocation2 + $0x150] sm:$0xff]
          %v398 = vld [vmem:[#allocation2 + $0x158] sm:$0xff]
          %v399 = vld [vmem:[#allocation2 + $0x168] sm:$0xff]
          %v400 = vld [vmem:[#allocation2 + $0x170] sm:$0xff]
          %v401 = vld [vmem:[#allocation2 + $0x1] sm:$0xff]
          %v402 = vld [vmem:[#allocation2 + $0x9] sm:$0xff]
          %v403 = vld [vmem:[#allocation2 + $0x19] sm:$0xff]
          %v404 = vld [vmem:[#allocation2 + $0x21] sm:$0xff]
          %v405 = vld [vmem:[#allocation2 + $0x31] sm:$0xff]
          %v406 = vld [vmem:[#allocation2 + $0x39] sm:$0xff]
          %v407 = vld [vmem:[#allocation2 + $0x49] sm:$0xff]
          %v408 = vld [vmem:[#allocation2 + $0x51] sm:$0xff]
          %v409 = vld [vmem:[#allocation2 + $0x61] sm:$0xff]
          %v410 = vld [vmem:[#allocation2 + $0x69] sm:$0xff]
          %v411 = vld [vmem:[#allocation2 + $0x79] sm:$0xff]
          %v412 = vld [vmem:[#allocation2 + $0x81] sm:$0xff]
          %v413 = vld [vmem:[#allocation2 + $0x91] sm:$0xff]
          %v414 = vld [vmem:[#allocation2 + $0x99] sm:$0xff]
          %v415 = vld [vmem:[#allocation2 + $0xa9] sm:$0xff]
          %v416 = vld [vmem:[#allocation2 + $0xb1] sm:$0xff]
          %v417 = vld [vmem:[#allocation2 + $0xc1] sm:$0xff]
          %v418 = vld [vmem:[#allocation2 + $0xc9] sm:$0xff]
          %v419 = vld [vmem:[#allocation2 + $0xd9] sm:$0xff]
          %v420 = vld [vmem:[#allocation2 + $0xe1] sm:$0xff]
          %v421 = vld [vmem:[#allocation2 + $0xf1] sm:$0xff]
          %v422 = vld [vmem:[#allocation2 + $0xf9] sm:$0xff]
          %v423 = vld [vmem:[#allocation2 + $0x109] sm:$0xff]
          %v424 = vld [vmem:[#allocation2 + $0x111] sm:$0xff]
          %v425 = vld [vmem:[#allocation2 + $0x121] sm:$0xff]
          %v426 = vld [vmem:[#allocation2 + $0x129] sm:$0xff]
          %v427 = vld [vmem:[#allocation2 + $0x139] sm:$0xff]
          %v428 = vld [vmem:[#allocation2 + $0x141] sm:$0xff]
          %v429 = vld [vmem:[#allocation2 + $0x151] sm:$0xff]
          %v430 = vld [vmem:[#allocation2 + $0x159] sm:$0xff]
          %v431 = vld [vmem:[#allocation2 + $0x169] sm:$0xff]
          %v432 = vld [vmem:[#allocation2 + $0x171] sm:$0xff]
          %v433 = vld [vmem:[#allocation2 + $0x2] sm:$0xff]
          %v434 = vld [vmem:[#allocation2 + $0xa] sm:$0xff]
          %v435 = vld [vmem:[#allocation2 + $0x1a] sm:$0xff]
          %v436 = vld [vmem:[#allocation2 + $0x22] sm:$0xff]
          %v437 = vld [vmem:[#allocation2 + $0x32] sm:$0xff]
          %v438 = vld [vmem:[#allocation2 + $0x3a] sm:$0xff]
          %v439 = vld [vmem:[#allocation2 + $0x4a] sm:$0xff]
          %v440 = vld [vmem:[#allocation2 + $0x52] sm:$0xff]
          %v441 = vld [vmem:[#allocation2 + $0x62] sm:$0xff]
          %v442 = vld [vmem:[#allocation2 + $0x6a] sm:$0xff]
          %v443 = vld [vmem:[#allocation2 + $0x7a] sm:$0xff]
          %v444 = vld [vmem:[#allocation2 + $0x82] sm:$0xff]
          %v445 = vld [vmem:[#allocation2 + $0x92] sm:$0xff]
          %v446 = vld [vmem:[#allocation2 + $0x9a] sm:$0xff]
          %v447 = vld [vmem:[#allocation2 + $0xaa] sm:$0xff]
          %v448 = vld [vmem:[#allocation2 + $0xb2] sm:$0xff]
          %v449 = vld [vmem:[#allocation2 + $0xc2] sm:$0xff]
          %v450 = vld [vmem:[#allocation2 + $0xca] sm:$0xff]
          %v451 = vld [vmem:[#allocation2 + $0xda] sm:$0xff]
          %v452 = vld [vmem:[#allocation2 + $0xe2] sm:$0xff]
          %v453 = vld [vmem:[#allocation2 + $0xf2] sm:$0xff]
          %v454 = vld [vmem:[#allocation2 + $0xfa] sm:$0xff]
          %v455 = vld [vmem:[#allocation2 + $0x10a] sm:$0xff]
          %v456 = vld [vmem:[#allocation2 + $0x112] sm:$0xff]
          %v457 = vld [vmem:[#allocation2 + $0x122] sm:$0xff]
          %v458 = vld [vmem:[#allocation2 + $0x12a] sm:$0xff]
          %v459 = vld [vmem:[#allocation2 + $0x13a] sm:$0xff]
          %v460 = vld [vmem:[#allocation2 + $0x142] sm:$0xff]
          %v461 = vld [vmem:[#allocation2 + $0x152] sm:$0xff]
          %v462 = vld [vmem:[#allocation2 + $0x15a] sm:$0xff]
          %v463 = vld [vmem:[#allocation2 + $0x16a] sm:$0xff]
          %v464 = vld [vmem:[#allocation2 + $0x172] sm:$0xff]
          %v465 = vld [vmem:[%s336] sm:$0xff]
          %v466 = vld [vmem:[%s336 + $0x8] sm:$0xff]
          %v467 = vld [vmem:[%s336 + $0x18] sm:$0xff]
          %v468 = vld [vmem:[%s336 + $0x20] sm:$0xff]
          %v469 = vld [vmem:[%s336 + $0x30] sm:$0xff]
          %v470 = vld [vmem:[%s336 + $0x38] sm:$0xff]
          %v471 = vld [vmem:[%s336 + $0x48] sm:$0xff]
          %v472 = vld [vmem:[%s336 + $0x50] sm:$0xff]
          %v473 = vld [vmem:[%s336 + $0x60] sm:$0xff]
          %v474 = vld [vmem:[%s336 + $0x68] sm:$0xff]
          %v475 = vld [vmem:[%s336 + $0x78] sm:$0xff]
          %v476 = vld [vmem:[%s336 + $0x80] sm:$0xff]
          %v477 = vld [vmem:[%s336 + $0x90] sm:$0xff]
          %v478 = vld [vmem:[%s336 + $0x98] sm:$0xff]
          %v479 = vld [vmem:[%s336 + $0xa8] sm:$0xff]
          %v480 = vld [vmem:[%s336 + $0xb0] sm:$0xff]
          %v481 = vld [vmem:[%s336 + $0xc0] sm:$0xff]
          %v482 = vld [vmem:[%s336 + $0xc8] sm:$0xff]
          %v483 = vld [vmem:[%s336 + $0xd8] sm:$0xff]
          %v484 = vld [vmem:[%s336 + $0xe0] sm:$0xff]
          %v485 = vld [vmem:[%s336 + $0xf0] sm:$0xff]
          %v486 = vld [vmem:[%s336 + $0xf8] sm:$0xff]
          %v487 = vld [vmem:[%s336 + $0x108] sm:$0xff]
          %v488 = vld [vmem:[%s336 + $0x110] sm:$0xff]
          %v489 = vld [vmem:[%s336 + $0x120] sm:$0xff]
          %v490 = vld [vmem:[%s336 + $0x128] sm:$0xff]
          %v491 = vld [vmem:[%s336 + $0x138] sm:$0xff]
          %v492 = vld [vmem:[%s336 + $0x140] sm:$0xff]
          %v493 = vld [vmem:[%s336 + $0x150] sm:$0xff]
          %v494 = vld [vmem:[%s336 + $0x158] sm:$0xff]
          %v495 = vld [vmem:[%s336 + $0x168] sm:$0xff]
          %v496 = vld [vmem:[%s336 + $0x170] sm:$0xff]
          %v497 = vld [vmem:[%s336 + $0x1] sm:$0xff]
          %v498 = vld [vmem:[%s336 + $0x9] sm:$0xff]
          %v499 = vld [vmem:[%s336 + $0x19] sm:$0xff]
          %v500 = vld [vmem:[%s336 + $0x21] sm:$0xff]
          %v501 = vld [vmem:[%s336 + $0x31] sm:$0xff]
          %v502 = vld [vmem:[%s336 + $0x39] sm:$0xff]
          %v503 = vld [vmem:[%s336 + $0x49] sm:$0xff]
          %v504 = vld [vmem:[%s336 + $0x51] sm:$0xff]
          %v505 = vld [vmem:[%s336 + $0x61] sm:$0xff]
          %v506 = vld [vmem:[%s336 + $0x69] sm:$0xff]
          %v507 = vld [vmem:[%s336 + $0x79] sm:$0xff]
          %v508 = vld [vmem:[%s336 + $0x81] sm:$0xff]
          %v509 = vld [vmem:[%s336 + $0x91] sm:$0xff]
          %v510 = vld [vmem:[%s336 + $0x99] sm:$0xff]
          %v511 = vld [vmem:[%s336 + $0xa9] sm:$0xff]
          %v512 = vld [vmem:[%s336 + $0xb1] sm:$0xff]
          %v513 = vld [vmem:[%s336 + $0xc1] sm:$0xff]
          %v514 = vld [vmem:[%s336 + $0xc9] sm:$0xff]
          %v515 = vld [vmem:[%s336 + $0xd9] sm:$0xff]
          %v516 = vld [vmem:[%s336 + $0xe1] sm:$0xff]
          %v517 = vld [vmem:[%s336 + $0xf1] sm:$0xff]
          %v518 = vld [vmem:[%s336 + $0xf9] sm:$0xff]
          %v519 = vld [vmem:[%s336 + $0x109] sm:$0xff]
          %v520 = vld [vmem:[%s336 + $0x111] sm:$0xff]
          %v521 = vld [vmem:[%s336 + $0x121] sm:$0xff]
          %v522 = vld [vmem:[%s336 + $0x129] sm:$0xff]
          %v523 = vld [vmem:[%s336 + $0x139] sm:$0xff]
          %v524 = vld [vmem:[%s336 + $0x141] sm:$0xff]
          %v525 = vld [vmem:[%s336 + $0x151] sm:$0xff]
          %v526 = vld [vmem:[%s336 + $0x159] sm:$0xff]
          %v527 = vld [vmem:[%s336 + $0x169] sm:$0xff]
          %v528 = vld [vmem:[%s336 + $0x171] sm:$0xff]
          %v529 = vld [vmem:[%s336 + $0x2] sm:$0xff]
          %v530 = vld [vmem:[%s336 + $0xa] sm:$0xff]
          %v531 = vld [vmem:[%s336 + $0x1a] sm:$0xff]
          %v532 = vld [vmem:[%s336 + $0x22] sm:$0xff]
          %v533 = vld [vmem:[%s336 + $0x32] sm:$0xff]
          %v534 = vld [vmem:[%s336 + $0x3a] sm:$0xff]
          %v535 = vld [vmem:[%s336 + $0x4a] sm:$0xff]
          %v536 = vld [vmem:[%s336 + $0x52] sm:$0xff]
          %v537 = vld [vmem:[%s336 + $0x62] sm:$0xff]
          %v538 = vld [vmem:[%s336 + $0x6a] sm:$0xff]
          %v539 = vld [vmem:[%s336 + $0x7a] sm:$0xff]
          %v540 = vld [vmem:[%s336 + $0x82] sm:$0xff]
          %v541 = vld [vmem:[%s336 + $0x92] sm:$0xff]
          %v542 = vld [vmem:[%s336 + $0x9a] sm:$0xff]
          %v543 = vld [vmem:[%s336 + $0xaa] sm:$0xff]
          %v544 = vld [vmem:[%s336 + $0xb2] sm:$0xff]
          %v545 = vld [vmem:[%s336 + $0xc2] sm:$0xff]
          %v546 = vld [vmem:[%s336 + $0xca] sm:$0xff]
          %v547 = vld [vmem:[%s336 + $0xda] sm:$0xff]
          %v548 = vld [vmem:[%s336 + $0xe2] sm:$0xff]
          %v549 = vld [vmem:[%s336 + $0xf2] sm:$0xff]
          %v550 = vld [vmem:[%s336 + $0xfa] sm:$0xff]
          %v551 = vld [vmem:[%s336 + $0x10a] sm:$0xff]
          %v552 = vld [vmem:[%s336 + $0x112] sm:$0xff]
          %v553 = vld [vmem:[%s336 + $0x122] sm:$0xff]
          %v554 = vld [vmem:[%s336 + $0x12a] sm:$0xff]
          %v555 = vld [vmem:[%s336 + $0x13a] sm:$0xff]
          %v556 = vld [vmem:[%s336 + $0x142] sm:$0xff]
          %v557 = vld [vmem:[%s336 + $0x152] sm:$0xff]
          %v558 = vld [vmem:[%s336 + $0x15a] sm:$0xff]
          %v559 = vld [vmem:[%s336 + $0x16a] sm:$0xff]
          %v560 = vld [vmem:[%s336 + $0x172] sm:$0xff]
          %s561 = scalar_lea.vmem [#allocation2], 48
          %v562 = vld [vmem:[%s561] sm:$0xff]
          %v563 = vld [vmem:[%s561 + $0x8] sm:$0xff]
          %v564 = vld [vmem:[%s561 + $0x18] sm:$0xff]
          %v565 = vld [vmem:[%s561 + $0x20] sm:$0xff]
          %v566 = vld [vmem:[%s561 + $0x30] sm:$0xff]
          %v567 = vld [vmem:[%s561 + $0x38] sm:$0xff]
          %v568 = vld [vmem:[%s561 + $0x48] sm:$0xff]
          %v569 = vld [vmem:[%s561 + $0x50] sm:$0xff]
          %v570 = vld [vmem:[%s561 + $0x60] sm:$0xff]
          %v571 = vld [vmem:[%s561 + $0x68] sm:$0xff]
          %v572 = vld [vmem:[%s561 + $0x78] sm:$0xff]
          %v573 = vld [vmem:[%s561 + $0x80] sm:$0xff]
          %v574 = vld [vmem:[%s561 + $0x90] sm:$0xff]
          %v575 = vld [vmem:[%s561 + $0x98] sm:$0xff]
          %v576 = vld [vmem:[%s561 + $0xa8] sm:$0xff]
          %v577 = vld [vmem:[%s561 + $0xb0] sm:$0xff]
          %v578 = vld [vmem:[%s561 + $0xc0] sm:$0xff]
          %v579 = vld [vmem:[%s561 + $0xc8] sm:$0xff]
          %v580 = vld [vmem:[%s561 + $0xd8] sm:$0xff]
          %v581 = vld [vmem:[%s561 + $0xe0] sm:$0xff]
          %v582 = vld [vmem:[%s561 + $0xf0] sm:$0xff]
          %v583 = vld [vmem:[%s561 + $0xf8] sm:$0xff]
          %v584 = vld [vmem:[%s561 + $0x108] sm:$0xff]
          %v585 = vld [vmem:[%s561 + $0x110] sm:$0xff]
          %v586 = vld [vmem:[%s561 + $0x120] sm:$0xff]
          %v587 = vld [vmem:[%s561 + $0x128] sm:$0xff]
          %v588 = vld [vmem:[%s561 + $0x138] sm:$0xff]
          %v589 = vld [vmem:[%s561 + $0x140] sm:$0xff]
          %v590 = vld [vmem:[%s561 + $0x150] sm:$0xff]
          %v591 = vld [vmem:[%s561 + $0x158] sm:$0xff]
          %v592 = vld [vmem:[%s561 + $0x168] sm:$0xff]
          %v593 = vld [vmem:[%s561 + $0x170] sm:$0xff]
          %v594 = vld [vmem:[%s561 + $0x1] sm:$0xff]
          %v595 = vld [vmem:[%s561 + $0x9] sm:$0xff]
          %v596 = vld [vmem:[%s561 + $0x19] sm:$0xff]
          %v597 = vld [vmem:[%s561 + $0x21] sm:$0xff]
          %v598 = vld [vmem:[%s561 + $0x31] sm:$0xff]
          %v599 = vld [vmem:[%s561 + $0x39] sm:$0xff]
          %v600 = vld [vmem:[%s561 + $0x49] sm:$0xff]
          %v601 = vld [vmem:[%s561 + $0x51] sm:$0xff]
          %v602 = vld [vmem:[%s561 + $0x61] sm:$0xff]
          %v603 = vld [vmem:[%s561 + $0x69] sm:$0xff]
          %v604 = vld [vmem:[%s561 + $0x79] sm:$0xff]
          %v605 = vld [vmem:[%s561 + $0x81] sm:$0xff]
          %v606 = vld [vmem:[%s561 + $0x91] sm:$0xff]
          %v607 = vld [vmem:[%s561 + $0x99] sm:$0xff]
          %v608 = vld [vmem:[%s561 + $0xa9] sm:$0xff]
          %v609 = vld [vmem:[%s561 + $0xb1] sm:$0xff]
          %v610 = vld [vmem:[%s561 + $0xc1] sm:$0xff]
          %v611 = vld [vmem:[%s561 + $0xc9] sm:$0xff]
          %v612 = vld [vmem:[%s561 + $0xd9] sm:$0xff]
          %v613 = vld [vmem:[%s561 + $0xe1] sm:$0xff]
          %v614 = vld [vmem:[%s561 + $0xf1] sm:$0xff]
          %v615 = vld [vmem:[%s561 + $0xf9] sm:$0xff]
          %v616 = vld [vmem:[%s561 + $0x109] sm:$0xff]
          %v617 = vld [vmem:[%s561 + $0x111] sm:$0xff]
          %v618 = vld [vmem:[%s561 + $0x121] sm:$0xff]
          %v619 = vld [vmem:[%s561 + $0x129] sm:$0xff]
          %v620 = vld [vmem:[%s561 + $0x139] sm:$0xff]
          %v621 = vld [vmem:[%s561 + $0x141] sm:$0xff]
          %v622 = vld [vmem:[%s561 + $0x151] sm:$0xff]
          %v623 = vld [vmem:[%s561 + $0x159] sm:$0xff]
          %v624 = vld [vmem:[%s561 + $0x169] sm:$0xff]
          %v625 = vld [vmem:[%s561 + $0x171] sm:$0xff]
          %v626 = vld [vmem:[%s561 + $0x2] sm:$0xff]
          %v627 = vld [vmem:[%s561 + $0xa] sm:$0xff]
          %v628 = vld [vmem:[%s561 + $0x1a] sm:$0xff]
          %v629 = vld [vmem:[%s561 + $0x22] sm:$0xff]
          %v630 = vld [vmem:[%s561 + $0x32] sm:$0xff]
          %v631 = vld [vmem:[%s561 + $0x3a] sm:$0xff]
          %v632 = vld [vmem:[%s561 + $0x4a] sm:$0xff]
          %v633 = vld [vmem:[%s561 + $0x52] sm:$0xff]
          %v634 = vld [vmem:[%s561 + $0x62] sm:$0xff]
          %v635 = vld [vmem:[%s561 + $0x6a] sm:$0xff]
          %v636 = vld [vmem:[%s561 + $0x7a] sm:$0xff]
          %v637 = vld [vmem:[%s561 + $0x82] sm:$0xff]
          %v638 = vld [vmem:[%s561 + $0x92] sm:$0xff]
          %v639 = vld [vmem:[%s561 + $0x9a] sm:$0xff]
          %v640 = vld [vmem:[%s561 + $0xaa] sm:$0xff]
          %v641 = vld [vmem:[%s561 + $0xb2] sm:$0xff]
          %v642 = vld [vmem:[%s561 + $0xc2] sm:$0xff]
          %v643 = vld [vmem:[%s561 + $0xca] sm:$0xff]
          %v644 = vld [vmem:[%s561 + $0xda] sm:$0xff]
          %v645 = vld [vmem:[%s561 + $0xe2] sm:$0xff]
          %v646 = vld [vmem:[%s561 + $0xf2] sm:$0xff]
          %v647 = vld [vmem:[%s561 + $0xfa] sm:$0xff]
          %v648 = vld [vmem:[%s561 + $0x10a] sm:$0xff]
          %v649 = vld [vmem:[%s561 + $0x112] sm:$0xff]
          %v650 = vld [vmem:[%s561 + $0x122] sm:$0xff]
          %v651 = vld [vmem:[%s561 + $0x12a] sm:$0xff]
          %v652 = vld [vmem:[%s561 + $0x13a] sm:$0xff]
          %v653 = vld [vmem:[%s561 + $0x142] sm:$0xff]
          %v654 = vld [vmem:[%s561 + $0x152] sm:$0xff]
          %v655 = vld [vmem:[%s561 + $0x15a] sm:$0xff]
          %v656 = vld [vmem:[%s561 + $0x16a] sm:$0xff]
          %v657 = vld [vmem:[%s561 + $0x172] sm:$0xff]
          %690 = vrot.lane.b32.xlu0 %v401, 32
          %v691 = vpop.permute.xlu0 %690
          %692 = vrot.lane.b32.xlu0 %v402, 32
          %v693 = vpop.permute.xlu0 %692
          %694 = vrot.lane.b32.xlu0 %v403, 32
          %v695 = vpop.permute.xlu0 %694
          %696 = vrot.lane.b32.xlu0 %v404, 32
          %v697 = vpop.permute.xlu0 %696
          %698 = vrot.lane.b32.xlu0 %v405, 32
          %v699 = vpop.permute.xlu0 %698
          %700 = vrot.lane.b32.xlu0 %v406, 32
          %v701 = vpop.permute.xlu0 %700
          %702 = vrot.lane.b32.xlu0 %v407, 32
          %v703 = vpop.permute.xlu0 %702
          %704 = vrot.lane.b32.xlu0 %v408, 32
          %v705 = vpop.permute.xlu0 %704
          %706 = vrot.lane.b32.xlu0 %v409, 32
          %v707 = vpop.permute.xlu0 %706
          %708 = vrot.lane.b32.xlu0 %v410, 32
          %v709 = vpop.permute.xlu0 %708
          %710 = vrot.lane.b32.xlu0 %v411, 32
          %v711 = vpop.permute.xlu0 %710
          %712 = vrot.lane.b32.xlu0 %v412, 32
          %v713 = vpop.permute.xlu0 %712
          %714 = vrot.lane.b32.xlu0 %v413, 32
          %v715 = vpop.permute.xlu0 %714
          %716 = vrot.lane.b32.xlu0 %v414, 32
          %v717 = vpop.permute.xlu0 %716
          %718 = vrot.lane.b32.xlu0 %v415, 32
          %v719 = vpop.permute.xlu0 %718
          %720 = vrot.lane.b32.xlu0 %v416, 32
          %v721 = vpop.permute.xlu0 %720
          %722 = vrot.lane.b32.xlu0 %v417, 32
          %v723 = vpop.permute.xlu0 %722
          %724 = vrot.lane.b32.xlu0 %v418, 32
          %v725 = vpop.permute.xlu0 %724
          %726 = vrot.lane.b32.xlu0 %v419, 32
          %v727 = vpop.permute.xlu0 %726
          %728 = vrot.lane.b32.xlu0 %v420, 32
          %v729 = vpop.permute.xlu0 %728
          %730 = vrot.lane.b32.xlu0 %v421, 32
          %v731 = vpop.permute.xlu0 %730
          %732 = vrot.lane.b32.xlu0 %v422, 32
          %v733 = vpop.permute.xlu0 %732
          %734 = vrot.lane.b32.xlu0 %v423, 32
          %v735 = vpop.permute.xlu0 %734
          %736 = vrot.lane.b32.xlu0 %v424, 32
          %v737 = vpop.permute.xlu0 %736
          %738 = vrot.lane.b32.xlu0 %v425, 32
          %v739 = vpop.permute.xlu0 %738
          %740 = vrot.lane.b32.xlu0 %v426, 32
          %v741 = vpop.permute.xlu0 %740
          %742 = vrot.lane.b32.xlu0 %v427, 32
          %v743 = vpop.permute.xlu0 %742
          %744 = vrot.lane.b32.xlu0 %v428, 32
          %v745 = vpop.permute.xlu0 %744
          %746 = vrot.lane.b32.xlu0 %v429, 32
          %v747 = vpop.permute.xlu0 %746
          %748 = vrot.lane.b32.xlu0 %v430, 32
          %v749 = vpop.permute.xlu0 %748
          %750 = vrot.lane.b32.xlu0 %v431, 32
          %v751 = vpop.permute.xlu0 %750
          %752 = vrot.lane.b32.xlu0 %v432, 32
          %v753 = vpop.permute.xlu0 %752
          %818 = vrot.lane.b32.xlu0 %v433, 64
          %v819 = vpop.permute.xlu0 %818
          %820 = vrot.lane.b32.xlu0 %v434, 64
          %v821 = vpop.permute.xlu0 %820
          %822 = vrot.lane.b32.xlu0 %v435, 64
          %v823 = vpop.permute.xlu0 %822
          %824 = vrot.lane.b32.xlu0 %v436, 64
          %v825 = vpop.permute.xlu0 %824
          %826 = vrot.lane.b32.xlu0 %v437, 64
          %v827 = vpop.permute.xlu0 %826
          %828 = vrot.lane.b32.xlu0 %v438, 64
          %v829 = vpop.permute.xlu0 %828
          %830 = vrot.lane.b32.xlu0 %v439, 64
          %v831 = vpop.permute.xlu0 %830
          %832 = vrot.lane.b32.xlu0 %v440, 64
          %v833 = vpop.permute.xlu0 %832
          %834 = vrot.lane.b32.xlu0 %v441, 64
          %v835 = vpop.permute.xlu0 %834
          %836 = vrot.lane.b32.xlu0 %v442, 64
          %v837 = vpop.permute.xlu0 %836
          %838 = vrot.lane.b32.xlu0 %v443, 64
          %v839 = vpop.permute.xlu0 %838
          %840 = vrot.lane.b32.xlu0 %v444, 64
          %v841 = vpop.permute.xlu0 %840
          %842 = vrot.lane.b32.xlu0 %v445, 64
          %v843 = vpop.permute.xlu0 %842
          %844 = vrot.lane.b32.xlu0 %v446, 64
          %v845 = vpop.permute.xlu0 %844
          %846 = vrot.lane.b32.xlu0 %v447, 64
          %v847 = vpop.permute.xlu0 %846
          %848 = vrot.lane.b32.xlu0 %v448, 64
          %v849 = vpop.permute.xlu0 %848
          %850 = vrot.lane.b32.xlu0 %v449, 64
          %v851 = vpop.permute.xlu0 %850
          %852 = vrot.lane.b32.xlu0 %v450, 64
          %v853 = vpop.permute.xlu0 %852
          %854 = vrot.lane.b32.xlu0 %v451, 64
          %v855 = vpop.permute.xlu0 %854
          %856 = vrot.lane.b32.xlu0 %v452, 64
          %v857 = vpop.permute.xlu0 %856
          %858 = vrot.lane.b32.xlu0 %v453, 64
          %v859 = vpop.permute.xlu0 %858
          %860 = vrot.lane.b32.xlu0 %v454, 64
          %v861 = vpop.permute.xlu0 %860
          %862 = vrot.lane.b32.xlu0 %v455, 64
          %v863 = vpop.permute.xlu0 %862
          %864 = vrot.lane.b32.xlu0 %v456, 64
          %v865 = vpop.permute.xlu0 %864
          %866 = vrot.lane.b32.xlu0 %v457, 64
          %v867 = vpop.permute.xlu0 %866
          %868 = vrot.lane.b32.xlu0 %v458, 64
          %v869 = vpop.permute.xlu0 %868
          %870 = vrot.lane.b32.xlu0 %v459, 64
          %v871 = vpop.permute.xlu0 %870
          %872 = vrot.lane.b32.xlu0 %v460, 64
          %v873 = vpop.permute.xlu0 %872
          %874 = vrot.lane.b32.xlu0 %v461, 64
          %v875 = vpop.permute.xlu0 %874
          %876 = vrot.lane.b32.xlu0 %v462, 64
          %v877 = vpop.permute.xlu0 %876
          %878 = vrot.lane.b32.xlu0 %v463, 64
          %v879 = vpop.permute.xlu0 %878
          %880 = vrot.lane.b32.xlu0 %v464, 64
          %v881 = vpop.permute.xlu0 %880
          %946 = vrot.lane.b32.xlu0 %v465, 96
          %v947 = vpop.permute.xlu0 %946
          %948 = vrot.lane.b32.xlu0 %v466, 96
          %v949 = vpop.permute.xlu0 %948
          %950 = vrot.lane.b32.xlu0 %v467, 96
          %v951 = vpop.permute.xlu0 %950
          %952 = vrot.lane.b32.xlu0 %v468, 96
          %v953 = vpop.permute.xlu0 %952
          %954 = vrot.lane.b32.xlu0 %v469, 96
          %v955 = vpop.permute.xlu0 %954
          %956 = vrot.lane.b32.xlu0 %v470, 96
          %v957 = vpop.permute.xlu0 %956
          %958 = vrot.lane.b32.xlu0 %v471, 96
          %v959 = vpop.permute.xlu0 %958
          %960 = vrot.lane.b32.xlu0 %v472, 96
          %v961 = vpop.permute.xlu0 %960
          %962 = vrot.lane.b32.xlu0 %v473, 96
          %v963 = vpop.permute.xlu0 %962
          %964 = vrot.lane.b32.xlu0 %v474, 96
          %v965 = vpop.permute.xlu0 %964
          %966 = vrot.lane.b32.xlu0 %v475, 96
          %v967 = vpop.permute.xlu0 %966
          %968 = vrot.lane.b32.xlu0 %v476, 96
          %v969 = vpop.permute.xlu0 %968
          %970 = vrot.lane.b32.xlu0 %v477, 96
          %v971 = vpop.permute.xlu0 %970
          %972 = vrot.lane.b32.xlu0 %v478, 96
          %v973 = vpop.permute.xlu0 %972
          %974 = vrot.lane.b32.xlu0 %v479, 96
          %v975 = vpop.permute.xlu0 %974
          %976 = vrot.lane.b32.xlu0 %v480, 96
          %v977 = vpop.permute.xlu0 %976
          %978 = vrot.lane.b32.xlu0 %v481, 96
          %v979 = vpop.permute.xlu0 %978
          %980 = vrot.lane.b32.xlu0 %v482, 96
          %v981 = vpop.permute.xlu0 %980
          %982 = vrot.lane.b32.xlu0 %v483, 96
          %v983 = vpop.permute.xlu0 %982
          %984 = vrot.lane.b32.xlu0 %v484, 96
          %v985 = vpop.permute.xlu0 %984
          %986 = vrot.lane.b32.xlu0 %v485, 96
          %v987 = vpop.permute.xlu0 %986
          %988 = vrot.lane.b32.xlu0 %v486, 96
          %v989 = vpop.permute.xlu0 %988
          %990 = vrot.lane.b32.xlu0 %v487, 96
          %v991 = vpop.permute.xlu0 %990
          %992 = vrot.lane.b32.xlu0 %v488, 96
          %v993 = vpop.permute.xlu0 %992
          %994 = vrot.lane.b32.xlu0 %v489, 96
          %v995 = vpop.permute.xlu0 %994
          %996 = vrot.lane.b32.xlu0 %v490, 96
          %v997 = vpop.permute.xlu0 %996
          %998 = vrot.lane.b32.xlu0 %v491, 96
          %v999 = vpop.permute.xlu0 %998
          %1000 = vrot.lane.b32.xlu0 %v492, 96
          %v1001 = vpop.permute.xlu0 %1000
          %1002 = vrot.lane.b32.xlu0 %v493, 96
          %v1003 = vpop.permute.xlu0 %1002
          %1004 = vrot.lane.b32.xlu0 %v494, 96
          %v1005 = vpop.permute.xlu0 %1004
          %1006 = vrot.lane.b32.xlu0 %v495, 96
          %v1007 = vpop.permute.xlu0 %1006
          %1008 = vrot.lane.b32.xlu0 %v496, 96
          %v1009 = vpop.permute.xlu0 %1008
          %1074 = vrot.lane.b32.xlu0 %v529, 32
          %v1075 = vpop.permute.xlu0 %1074
          %1076 = vrot.lane.b32.xlu0 %v530, 32
          %v1077 = vpop.permute.xlu0 %1076
          %1078 = vrot.lane.b32.xlu0 %v531, 32
          %v1079 = vpop.permute.xlu0 %1078
          %1080 = vrot.lane.b32.xlu0 %v532, 32
          %v1081 = vpop.permute.xlu0 %1080
          %1082 = vrot.lane.b32.xlu0 %v533, 32
          %v1083 = vpop.permute.xlu0 %1082
          %1084 = vrot.lane.b32.xlu0 %v534, 32
          %v1085 = vpop.permute.xlu0 %1084
          %1086 = vrot.lane.b32.xlu0 %v535, 32
          %v1087 = vpop.permute.xlu0 %1086
          %1088 = vrot.lane.b32.xlu0 %v536, 32
          %v1089 = vpop.permute.xlu0 %1088
          %1090 = vrot.lane.b32.xlu0 %v537, 32
          %v1091 = vpop.permute.xlu0 %1090
          %1092 = vrot.lane.b32.xlu0 %v538, 32
          %v1093 = vpop.permute.xlu0 %1092
          %1094 = vrot.lane.b32.xlu0 %v539, 32
          %v1095 = vpop.permute.xlu0 %1094
          %1096 = vrot.lane.b32.xlu0 %v540, 32
          %v1097 = vpop.permute.xlu0 %1096
          %1098 = vrot.lane.b32.xlu0 %v541, 32
          %v1099 = vpop.permute.xlu0 %1098
          %1100 = vrot.lane.b32.xlu0 %v542, 32
          %v1101 = vpop.permute.xlu0 %1100
          %1102 = vrot.lane.b32.xlu0 %v543, 32
          %v1103 = vpop.permute.xlu0 %1102
          %1104 = vrot.lane.b32.xlu0 %v544, 32
          %v1105 = vpop.permute.xlu0 %1104
          %1106 = vrot.lane.b32.xlu0 %v545, 32
          %v1107 = vpop.permute.xlu0 %1106
          %1108 = vrot.lane.b32.xlu0 %v546, 32
          %v1109 = vpop.permute.xlu0 %1108
          %1110 = vrot.lane.b32.xlu0 %v547, 32
          %v1111 = vpop.permute.xlu0 %1110
          %1112 = vrot.lane.b32.xlu0 %v548, 32
          %v1113 = vpop.permute.xlu0 %1112
          %1114 = vrot.lane.b32.xlu0 %v549, 32
          %v1115 = vpop.permute.xlu0 %1114
          %1116 = vrot.lane.b32.xlu0 %v550, 32
          %v1117 = vpop.permute.xlu0 %1116
          %1118 = vrot.lane.b32.xlu0 %v551, 32
          %v1119 = vpop.permute.xlu0 %1118
          %1120 = vrot.lane.b32.xlu0 %v552, 32
          %v1121 = vpop.permute.xlu0 %1120
          %1122 = vrot.lane.b32.xlu0 %v553, 32
          %v1123 = vpop.permute.xlu0 %1122
          %1124 = vrot.lane.b32.xlu0 %v554, 32
          %v1125 = vpop.permute.xlu0 %1124
          %1126 = vrot.lane.b32.xlu0 %v555, 32
          %v1127 = vpop.permute.xlu0 %1126
          %1128 = vrot.lane.b32.xlu0 %v556, 32
          %v1129 = vpop.permute.xlu0 %1128
          %1130 = vrot.lane.b32.xlu0 %v557, 32
          %v1131 = vpop.permute.xlu0 %1130
          %1132 = vrot.lane.b32.xlu0 %v558, 32
          %v1133 = vpop.permute.xlu0 %1132
          %1134 = vrot.lane.b32.xlu0 %v559, 32
          %v1135 = vpop.permute.xlu0 %1134
          %1136 = vrot.lane.b32.xlu0 %v560, 32
          %v1137 = vpop.permute.xlu0 %1136
          %1202 = vrot.lane.b32.xlu0 %v562, 64
          %v1203 = vpop.permute.xlu0 %1202
          %1204 = vrot.lane.b32.xlu0 %v563, 64
          %v1205 = vpop.permute.xlu0 %1204
          %1206 = vrot.lane.b32.xlu0 %v564, 64
          %v1207 = vpop.permute.xlu0 %1206
          %1208 = vrot.lane.b32.xlu0 %v565, 64
          %v1209 = vpop.permute.xlu0 %1208
          %1210 = vrot.lane.b32.xlu0 %v566, 64
          %v1211 = vpop.permute.xlu0 %1210
          %1212 = vrot.lane.b32.xlu0 %v567, 64
          %v1213 = vpop.permute.xlu0 %1212
          %1214 = vrot.lane.b32.xlu0 %v568, 64
          %v1215 = vpop.permute.xlu0 %1214
          %1216 = vrot.lane.b32.xlu0 %v569, 64
          %v1217 = vpop.permute.xlu0 %1216
          %1218 = vrot.lane.b32.xlu0 %v570, 64
          %v1219 = vpop.permute.xlu0 %1218
          %1220 = vrot.lane.b32.xlu0 %v571, 64
          %v1221 = vpop.permute.xlu0 %1220
          %1222 = vrot.lane.b32.xlu0 %v572, 64
          %v1223 = vpop.permute.xlu0 %1222
          %1224 = vrot.lane.b32.xlu0 %v573, 64
          %v1225 = vpop.permute.xlu0 %1224
          %1226 = vrot.lane.b32.xlu0 %v574, 64
          %v1227 = vpop.permute.xlu0 %1226
          %1228 = vrot.lane.b32.xlu0 %v575, 64
          %v1229 = vpop.permute.xlu0 %1228
          %1230 = vrot.lane.b32.xlu0 %v576, 64
          %v1231 = vpop.permute.xlu0 %1230
          %1232 = vrot.lane.b32.xlu0 %v577, 64
          %v1233 = vpop.permute.xlu0 %1232
          %1234 = vrot.lane.b32.xlu0 %v578, 64
          %v1235 = vpop.permute.xlu0 %1234
          %1236 = vrot.lane.b32.xlu0 %v579, 64
          %v1237 = vpop.permute.xlu0 %1236
          %1238 = vrot.lane.b32.xlu0 %v580, 64
          %v1239 = vpop.permute.xlu0 %1238
          %1240 = vrot.lane.b32.xlu0 %v581, 64
          %v1241 = vpop.permute.xlu0 %1240
          %1242 = vrot.lane.b32.xlu0 %v582, 64
          %v1243 = vpop.permute.xlu0 %1242
          %1244 = vrot.lane.b32.xlu0 %v583, 64
          %v1245 = vpop.permute.xlu0 %1244
          %1246 = vrot.lane.b32.xlu0 %v584, 64
          %v1247 = vpop.permute.xlu0 %1246
          %1248 = vrot.lane.b32.xlu0 %v585, 64
          %v1249 = vpop.permute.xlu0 %1248
          %1250 = vrot.lane.b32.xlu0 %v586, 64
          %v1251 = vpop.permute.xlu0 %1250
          %1252 = vrot.lane.b32.xlu0 %v587, 64
          %v1253 = vpop.permute.xlu0 %1252
          %1254 = vrot.lane.b32.xlu0 %v588, 64
          %v1255 = vpop.permute.xlu0 %1254
          %1256 = vrot.lane.b32.xlu0 %v589, 64
          %v1257 = vpop.permute.xlu0 %1256
          %1258 = vrot.lane.b32.xlu0 %v590, 64
          %v1259 = vpop.permute.xlu0 %1258
          %1260 = vrot.lane.b32.xlu0 %v591, 64
          %v1261 = vpop.permute.xlu0 %1260
          %1262 = vrot.lane.b32.xlu0 %v592, 64
          %v1263 = vpop.permute.xlu0 %1262
          %1264 = vrot.lane.b32.xlu0 %v593, 64
          %v1265 = vpop.permute.xlu0 %1264
          %1330 = vrot.lane.b32.xlu0 %v594, 96
          %v1331 = vpop.permute.xlu0 %1330
          %1332 = vrot.lane.b32.xlu0 %v595, 96
          %v1333 = vpop.permute.xlu0 %1332
          %1334 = vrot.lane.b32.xlu0 %v596, 96
          %v1335 = vpop.permute.xlu0 %1334
          %1336 = vrot.lane.b32.xlu0 %v597, 96
          %v1337 = vpop.permute.xlu0 %1336
          %1338 = vrot.lane.b32.xlu0 %v598, 96
          %v1339 = vpop.permute.xlu0 %1338
          %1340 = vrot.lane.b32.xlu0 %v599, 96
          %v1341 = vpop.permute.xlu0 %1340
          %1342 = vrot.lane.b32.xlu0 %v600, 96
          %v1343 = vpop.permute.xlu0 %1342
          %1344 = vrot.lane.b32.xlu0 %v601, 96
          %v1345 = vpop.permute.xlu0 %1344
          %1346 = vrot.lane.b32.xlu0 %v602, 96
          %v1347 = vpop.permute.xlu0 %1346
          %1348 = vrot.lane.b32.xlu0 %v603, 96
          %v1349 = vpop.permute.xlu0 %1348
          %1350 = vrot.lane.b32.xlu0 %v604, 96
          %v1351 = vpop.permute.xlu0 %1350
          %1352 = vrot.lane.b32.xlu0 %v605, 96
          %v1353 = vpop.permute.xlu0 %1352
          %1354 = vrot.lane.b32.xlu0 %v606, 96
          %v1355 = vpop.permute.xlu0 %1354
          %1356 = vrot.lane.b32.xlu0 %v607, 96
          %v1357 = vpop.permute.xlu0 %1356
          %1358 = vrot.lane.b32.xlu0 %v608, 96
          %v1359 = vpop.permute.xlu0 %1358
          %1360 = vrot.lane.b32.xlu0 %v609, 96
          %v1361 = vpop.permute.xlu0 %1360
          %1362 = vrot.lane.b32.xlu0 %v610, 96
          %v1363 = vpop.permute.xlu0 %1362
          %1364 = vrot.lane.b32.xlu0 %v611, 96
          %v1365 = vpop.permute.xlu0 %1364
          %1366 = vrot.lane.b32.xlu0 %v612, 96
          %v1367 = vpop.permute.xlu0 %1366
          %1368 = vrot.lane.b32.xlu0 %v613, 96
          %v1369 = vpop.permute.xlu0 %1368
          %1370 = vrot.lane.b32.xlu0 %v614, 96
          %v1371 = vpop.permute.xlu0 %1370
          %1372 = vrot.lane.b32.xlu0 %v615, 96
          %v1373 = vpop.permute.xlu0 %1372
          %1374 = vrot.lane.b32.xlu0 %v616, 96
          %v1375 = vpop.permute.xlu0 %1374
          %1376 = vrot.lane.b32.xlu0 %v617, 96
          %v1377 = vpop.permute.xlu0 %1376
          %1378 = vrot.lane.b32.xlu0 %v618, 96
          %v1379 = vpop.permute.xlu0 %1378
          %1380 = vrot.lane.b32.xlu0 %v619, 96
          %v1381 = vpop.permute.xlu0 %1380
          %1382 = vrot.lane.b32.xlu0 %v620, 96
          %v1383 = vpop.permute.xlu0 %1382
          %1384 = vrot.lane.b32.xlu0 %v621, 96
          %v1385 = vpop.permute.xlu0 %1384
          %1386 = vrot.lane.b32.xlu0 %v622, 96
          %v1387 = vpop.permute.xlu0 %1386
          %1388 = vrot.lane.b32.xlu0 %v623, 96
          %v1389 = vpop.permute.xlu0 %1388
          %1390 = vrot.lane.b32.xlu0 %v624, 96
          %v1391 = vpop.permute.xlu0 %1390
          %1392 = vrot.lane.b32.xlu0 %v625, 96
          %v1393 = vpop.permute.xlu0 %1392
          %v1426 = vsel %vm169, %v369, %v691
          %v1427 = vsel %vm169, %v370, %v693
          %v1428 = vsel %vm169, %v371, %v695
          %v1429 = vsel %vm169, %v372, %v697
          %v1430 = vsel %vm169, %v373, %v699
          %v1431 = vsel %vm169, %v374, %v701
          %v1432 = vsel %vm169, %v375, %v703
          %v1433 = vsel %vm169, %v376, %v705
          %v1434 = vsel %vm169, %v377, %v707
          %v1435 = vsel %vm169, %v378, %v709
          %v1436 = vsel %vm169, %v379, %v711
          %v1437 = vsel %vm169, %v380, %v713
          %v1438 = vsel %vm169, %v381, %v715
          %v1439 = vsel %vm169, %v382, %v717
          %v1440 = vsel %vm169, %v383, %v719
          %v1441 = vsel %vm169, %v384, %v721
          %v1442 = vsel %vm169, %v385, %v723
          %v1443 = vsel %vm169, %v386, %v725
          %v1444 = vsel %vm169, %v387, %v727
          %v1445 = vsel %vm169, %v388, %v729
          %v1446 = vsel %vm169, %v389, %v731
          %v1447 = vsel %vm169, %v390, %v733
          %v1448 = vsel %vm169, %v391, %v735
          %v1449 = vsel %vm169, %v392, %v737
          %v1450 = vsel %vm169, %v393, %v739
          %v1451 = vsel %vm169, %v394, %v741
          %v1452 = vsel %vm169, %v395, %v743
          %v1453 = vsel %vm169, %v396, %v745
          %v1454 = vsel %vm169, %v397, %v747
          %v1455 = vsel %vm169, %v398, %v749
          %v1456 = vsel %vm169, %v399, %v751
          %v1457 = vsel %vm169, %v400, %v753
          %vm1458 = vcmask 523264
          %v1459 = vsel %vm1458, %v1426, %v819
          %v1460 = vsel %vm1458, %v1427, %v821
          %v1461 = vsel %vm1458, %v1428, %v823
          %v1462 = vsel %vm1458, %v1429, %v825
          %v1463 = vsel %vm1458, %v1430, %v827
          %v1464 = vsel %vm1458, %v1431, %v829
          %v1465 = vsel %vm1458, %v1432, %v831
          %v1466 = vsel %vm1458, %v1433, %v833
          %v1467 = vsel %vm1458, %v1434, %v835
          %v1468 = vsel %vm1458, %v1435, %v837
          %v1469 = vsel %vm1458, %v1436, %v839
          %v1470 = vsel %vm1458, %v1437, %v841
          %v1471 = vsel %vm1458, %v1438, %v843
          %v1472 = vsel %vm1458, %v1439, %v845
          %v1473 = vsel %vm1458, %v1440, %v847
          %v1474 = vsel %vm1458, %v1441, %v849
          %v1475 = vsel %vm1458, %v1442, %v851
          %v1476 = vsel %vm1458, %v1443, %v853
          %v1477 = vsel %vm1458, %v1444, %v855
          %v1478 = vsel %vm1458, %v1445, %v857
          %v1479 = vsel %vm1458, %v1446, %v859
          %v1480 = vsel %vm1458, %v1447, %v861
          %v1481 = vsel %vm1458, %v1448, %v863
          %v1482 = vsel %vm1458, %v1449, %v865
          %v1483 = vsel %vm1458, %v1450, %v867
          %v1484 = vsel %vm1458, %v1451, %v869
          %v1485 = vsel %vm1458, %v1452, %v871
          %v1486 = vsel %vm1458, %v1453, %v873
          %v1487 = vsel %vm1458, %v1454, %v875
          %v1488 = vsel %vm1458, %v1455, %v877
          %v1489 = vsel %vm1458, %v1456, %v879
          %v1490 = vsel %vm1458, %v1457, %v881
          %vm1491 = vcmask 785408
          %v1492 = vsel %vm1491, %v1459, %v947
          %v1493 = vsel %vm1491, %v1460, %v949
          %v1494 = vsel %vm1491, %v1461, %v951
          %v1495 = vsel %vm1491, %v1462, %v953
          %v1496 = vsel %vm1491, %v1463, %v955
          %v1497 = vsel %vm1491, %v1464, %v957
          %v1498 = vsel %vm1491, %v1465, %v959
          %v1499 = vsel %vm1491, %v1466, %v961
          %v1500 = vsel %vm1491, %v1467, %v963
          %v1501 = vsel %vm1491, %v1468, %v965
          %v1502 = vsel %vm1491, %v1469, %v967
          %v1503 = vsel %vm1491, %v1470, %v969
          %v1504 = vsel %vm1491, %v1471, %v971
          %v1505 = vsel %vm1491, %v1472, %v973
          %v1506 = vsel %vm1491, %v1473, %v975
          %v1507 = vsel %vm1491, %v1474, %v977
          %v1508 = vsel %vm1491, %v1475, %v979
          %v1509 = vsel %vm1491, %v1476, %v981
          %v1510 = vsel %vm1491, %v1477, %v983
          %v1511 = vsel %vm1491, %v1478, %v985
          %v1512 = vsel %vm1491, %v1479, %v987
          %v1513 = vsel %vm1491, %v1480, %v989
          %v1514 = vsel %vm1491, %v1481, %v991
          %v1515 = vsel %vm1491, %v1482, %v993
          %v1516 = vsel %vm1491, %v1483, %v995
          %v1517 = vsel %vm1491, %v1484, %v997
          %v1518 = vsel %vm1491, %v1485, %v999
          %v1519 = vsel %vm1491, %v1486, %v1001
          %v1520 = vsel %vm1491, %v1487, %v1003
          %v1521 = vsel %vm1491, %v1488, %v1005
          %v1522 = vsel %vm1491, %v1489, %v1007
          %v1523 = vsel %vm1491, %v1490, %v1009
          %v1524 = vsel %vm169, %v497, %v1075
          %v1525 = vsel %vm169, %v498, %v1077
          %v1526 = vsel %vm169, %v499, %v1079
          %v1527 = vsel %vm169, %v500, %v1081
          %v1528 = vsel %vm169, %v501, %v1083
          %v1529 = vsel %vm169, %v502, %v1085
          %v1530 = vsel %vm169, %v503, %v1087
          %v1531 = vsel %vm169, %v504, %v1089
          %v1532 = vsel %vm169, %v505, %v1091
          %v1533 = vsel %vm169, %v506, %v1093
          %v1534 = vsel %vm169, %v507, %v1095
          %v1535 = vsel %vm169, %v508, %v1097
          %v1536 = vsel %vm169, %v509, %v1099
          %v1537 = vsel %vm169, %v510, %v1101
          %v1538 = vsel %vm169, %v511, %v1103
          %v1539 = vsel %vm169, %v512, %v1105
          %v1540 = vsel %vm169, %v513, %v1107
          %v1541 = vsel %vm169, %v514, %v1109
          %v1542 = vsel %vm169, %v515, %v1111
          %v1543 = vsel %vm169, %v516, %v1113
          %v1544 = vsel %vm169, %v517, %v1115
          %v1545 = vsel %vm169, %v518, %v1117
          %v1546 = vsel %vm169, %v519, %v1119
          %v1547 = vsel %vm169, %v520, %v1121
          %v1548 = vsel %vm169, %v521, %v1123
          %v1549 = vsel %vm169, %v522, %v1125
          %v1550 = vsel %vm169, %v523, %v1127
          %v1551 = vsel %vm169, %v524, %v1129
          %v1552 = vsel %vm169, %v525, %v1131
          %v1553 = vsel %vm169, %v526, %v1133
          %v1554 = vsel %vm169, %v527, %v1135
          %v1555 = vsel %vm169, %v528, %v1137
          %v1556 = vsel %vm1458, %v1524, %v1203
          %v1557 = vsel %vm1458, %v1525, %v1205
          %v1558 = vsel %vm1458, %v1526, %v1207
          %v1559 = vsel %vm1458, %v1527, %v1209
          %v1560 = vsel %vm1458, %v1528, %v1211
          %v1561 = vsel %vm1458, %v1529, %v1213
          %v1562 = vsel %vm1458, %v1530, %v1215
          %v1563 = vsel %vm1458, %v1531, %v1217
          %v1564 = vsel %vm1458, %v1532, %v1219
          %v1565 = vsel %vm1458, %v1533, %v1221
          %v1566 = vsel %vm1458, %v1534, %v1223
          %v1567 = vsel %vm1458, %v1535, %v1225
          %v1568 = vsel %vm1458, %v1536, %v1227
          %v1569 = vsel %vm1458, %v1537, %v1229
          %v1570 = vsel %vm1458, %v1538, %v1231
          %v1571 = vsel %vm1458, %v1539, %v1233
          %v1572 = vsel %vm1458, %v1540, %v1235
          %v1573 = vsel %vm1458, %v1541, %v1237
          %v1574 = vsel %vm1458, %v1542, %v1239
          %v1575 = vsel %vm1458, %v1543, %v1241
          %v1576 = vsel %vm1458, %v1544, %v1243
          %v1577 = vsel %vm1458, %v1545, %v1245
          %v1578 = vsel %vm1458, %v1546, %v1247
          %v1579 = vsel %vm1458, %v1547, %v1249
          %v1580 = vsel %vm1458, %v1548, %v1251
          %v1581 = vsel %vm1458, %v1549, %v1253
          %v1582 = vsel %vm1458, %v1550, %v1255
          %v1583 = vsel %vm1458, %v1551, %v1257
          %v1584 = vsel %vm1458, %v1552, %v1259
          %v1585 = vsel %vm1458, %v1553, %v1261
          %v1586 = vsel %vm1458, %v1554, %v1263
          %v1587 = vsel %vm1458, %v1555, %v1265
          %v1588 = vsel %vm1491, %v1556, %v1331
          %v1589 = vsel %vm1491, %v1557, %v1333
          %v1590 = vsel %vm1491, %v1558, %v1335
          %v1591 = vsel %vm1491, %v1559, %v1337
          %v1592 = vsel %vm1491, %v1560, %v1339
          %v1593 = vsel %vm1491, %v1561, %v1341
          %v1594 = vsel %vm1491, %v1562, %v1343
          %v1595 = vsel %vm1491, %v1563, %v1345
          %v1596 = vsel %vm1491, %v1564, %v1347
          %v1597 = vsel %vm1491, %v1565, %v1349
          %v1598 = vsel %vm1491, %v1566, %v1351
          %v1599 = vsel %vm1491, %v1567, %v1353
          %v1600 = vsel %vm1491, %v1568, %v1355
          %v1601 = vsel %vm1491, %v1569, %v1357
          %v1602 = vsel %vm1491, %v1570, %v1359
          %v1603 = vsel %vm1491, %v1571, %v1361
          %v1604 = vsel %vm1491, %v1572, %v1363
          %v1605 = vsel %vm1491, %v1573, %v1365
          %v1606 = vsel %vm1491, %v1574, %v1367
          %v1607 = vsel %vm1491, %v1575, %v1369
          %v1608 = vsel %vm1491, %v1576, %v1371
          %v1609 = vsel %vm1491, %v1577, %v1373
          %v1610 = vsel %vm1491, %v1578, %v1375
          %v1611 = vsel %vm1491, %v1579, %v1377
          %v1612 = vsel %vm1491, %v1580, %v1379
          %v1613 = vsel %vm1491, %v1581, %v1381
          %v1614 = vsel %vm1491, %v1582, %v1383
          %v1615 = vsel %vm1491, %v1583, %v1385
          %v1616 = vsel %vm1491, %v1584, %v1387
          %v1617 = vsel %vm1491, %v1585, %v1389
          %v1618 = vsel %vm1491, %v1586, %v1391
          %v1619 = vsel %vm1491, %v1587, %v1393
          %v1621 = vperm.slane %v335, 0
          %v1624 = vsel %vm169, %v626, 0
          %v1627 = vsel %vm169, %v627, 0
          %v1630 = vsel %vm169, %v628, 0
          %v1633 = vsel %vm169, %v629, 0
          %v1636 = vsel %vm169, %v630, 0
          %v1639 = vsel %vm169, %v631, 0
          %v1642 = vsel %vm169, %v632, 0
          %v1645 = vsel %vm169, %v633, 0
          %v1648 = vsel %vm169, %v634, 0
          %v1651 = vsel %vm169, %v635, 0
          %v1654 = vsel %vm169, %v636, 0
          %v1657 = vsel %vm169, %v637, 0
          %v1660 = vsel %vm169, %v638, 0
          %v1663 = vsel %vm169, %v639, 0
          %v1666 = vsel %vm169, %v640, 0
          %v1669 = vsel %vm169, %v641, 0
          %v1672 = vsel %vm169, %v642, 0
          %v1675 = vsel %vm169, %v643, 0
          %v1678 = vsel %vm169, %v644, 0
          %v1681 = vsel %vm169, %v645, 0
          %v1684 = vsel %vm169, %v646, 0
          %v1687 = vsel %vm169, %v647, 0
          %v1690 = vsel %vm169, %v648, 0
          %v1693 = vsel %vm169, %v649, 0
          %v1696 = vsel %vm169, %v650, 0
          %v1699 = vsel %vm169, %v651, 0
          %v1702 = vsel %vm169, %v652, 0
          %v1705 = vsel %vm169, %v653, 0
          %v1708 = vsel %vm169, %v654, 0
          %v1711 = vsel %vm169, %v655, 0
          %v1714 = vsel %vm169, %v656, 0
          %v1717 = vsel %vm169, %v657, 0
          %1719 = vmatpush.msra.mxu0 %v313
          %1720 = vmatpush.msra.mxu0 %v312
          %1721 = vmatpush.msra.mxu0 %v311
          %1722 = vmatpush.msra.mxu0 %v310
          %1723 = vmatpush.msra.mxu0 %v309
          %1724 = vmatpush.msra.mxu0 %v308
          %1725 = vmatpush.msra.mxu0 %v307
          %1726 = vmatpush.msra.mxu0 %v306
          %1727 = vmatpush.msra.mxu0 %v305
          %1728 = vmatpush.msra.mxu0 %v304
          %1729 = vmatpush.msra.mxu0 %v303
          %1730 = vmatpush.msra.mxu0 %v302
          %1731 = vmatpush.msra.mxu0 %v301
          %1732 = vmatpush.msra.mxu0 %v300
          %1733 = vmatpush.msra.mxu0 %v299
          %1734 = vmatpush.msra.mxu0 %v298
          %1735 = vmatmul.f32.gmra.mxu0 %v1492
          %v1736 = vpop.f32.mrf.mxu0
          %v1737 = vadd.f32 %v1621, %v1736
          %1738 = vmatmul.f32.gmra.mxu0 %v1493
          %v1739 = vpop.f32.mrf.mxu0
          %v1740 = vadd.f32 %v1621, %v1739
          %1741 = vmatmul.f32.gmra.mxu0 %v1494
          %v1742 = vpop.f32.mrf.mxu0
          %v1743 = vadd.f32 %v1621, %v1742
          %1744 = vmatmul.f32.gmra.mxu0 %v1495
          %v1745 = vpop.f32.mrf.mxu0
          %v1746 = vadd.f32 %v1621, %v1745
          %1747 = vmatmul.f32.gmra.mxu0 %v1496
          %v1748 = vpop.f32.mrf.mxu0
          %v1749 = vadd.f32 %v1621, %v1748
          %1750 = vmatmul.f32.gmra.mxu0 %v1497
          %v1751 = vpop.f32.mrf.mxu0
          %v1752 = vadd.f32 %v1621, %v1751
          %1753 = vmatmul.f32.gmra.mxu0 %v1498
          %v1754 = vpop.f32.mrf.mxu0
          %v1755 = vadd.f32 %v1621, %v1754
          %1756 = vmatmul.f32.gmra.mxu0 %v1499
          %v1757 = vpop.f32.mrf.mxu0
          %v1758 = vadd.f32 %v1621, %v1757
          %1759 = vmatmul.f32.gmra.mxu0 %v1500
          %v1760 = vpop.f32.mrf.mxu0
          %v1761 = vadd.f32 %v1621, %v1760
          %1762 = vmatmul.f32.gmra.mxu0 %v1501
          %v1763 = vpop.f32.mrf.mxu0
          %v1764 = vadd.f32 %v1621, %v1763
          %1765 = vmatmul.f32.gmra.mxu0 %v1502
          %v1766 = vpop.f32.mrf.mxu0
          %v1767 = vadd.f32 %v1621, %v1766
          %1768 = vmatmul.f32.gmra.mxu0 %v1503
          %v1769 = vpop.f32.mrf.mxu0
          %v1770 = vadd.f32 %v1621, %v1769
          %1771 = vmatmul.f32.gmra.mxu0 %v1504
          %v1772 = vpop.f32.mrf.mxu0
          %v1773 = vadd.f32 %v1621, %v1772
          %1774 = vmatmul.f32.gmra.mxu0 %v1505
          %v1775 = vpop.f32.mrf.mxu0
          %v1776 = vadd.f32 %v1621, %v1775
          %1777 = vmatmul.f32.gmra.mxu0 %v1506
          %v1778 = vpop.f32.mrf.mxu0
          %v1779 = vadd.f32 %v1621, %v1778
          %1780 = vmatmul.f32.gmra.mxu0 %v1507
          %v1781 = vpop.f32.mrf.mxu0
          %v1782 = vadd.f32 %v1621, %v1781
          %1783 = vmatmul.f32.gmra.mxu0 %v1508
          %v1784 = vpop.f32.mrf.mxu0
          %v1785 = vadd.f32 %v1621, %v1784
          %1786 = vmatmul.f32.gmra.mxu0 %v1509
          %v1787 = vpop.f32.mrf.mxu0
          %v1788 = vadd.f32 %v1621, %v1787
          %1789 = vmatmul.f32.gmra.mxu0 %v1510
          %v1790 = vpop.f32.mrf.mxu0
          %v1791 = vadd.f32 %v1621, %v1790
          %1792 = vmatmul.f32.gmra.mxu0 %v1511
          %v1793 = vpop.f32.mrf.mxu0
          %v1794 = vadd.f32 %v1621, %v1793
          %1795 = vmatmul.f32.gmra.mxu0 %v1512
          %v1796 = vpop.f32.mrf.mxu0
          %v1797 = vadd.f32 %v1621, %v1796
          %1798 = vmatmul.f32.gmra.mxu0 %v1513
          %v1799 = vpop.f32.mrf.mxu0
          %v1800 = vadd.f32 %v1621, %v1799
          %1801 = vmatmul.f32.gmra.mxu0 %v1514
          %v1802 = vpop.f32.mrf.mxu0
          %v1803 = vadd.f32 %v1621, %v1802
          %1804 = vmatmul.f32.gmra.mxu0 %v1515
          %v1805 = vpop.f32.mrf.mxu0
          %v1806 = vadd.f32 %v1621, %v1805
          %1807 = vmatmul.f32.gmra.mxu0 %v1516
          %v1808 = vpop.f32.mrf.mxu0
          %v1809 = vadd.f32 %v1621, %v1808
          %1810 = vmatmul.f32.gmra.mxu0 %v1517
          %v1811 = vpop.f32.mrf.mxu0
          %v1812 = vadd.f32 %v1621, %v1811
          %1813 = vmatmul.f32.gmra.mxu0 %v1518
          %v1814 = vpop.f32.mrf.mxu0
          %v1815 = vadd.f32 %v1621, %v1814
          %1816 = vmatmul.f32.gmra.mxu0 %v1519
          %v1817 = vpop.f32.mrf.mxu0
          %v1818 = vadd.f32 %v1621, %v1817
          %1819 = vmatmul.f32.gmra.mxu0 %v1520
          %v1820 = vpop.f32.mrf.mxu0
          %v1821 = vadd.f32 %v1621, %v1820
          %1822 = vmatmul.f32.gmra.mxu0 %v1521
          %v1823 = vpop.f32.mrf.mxu0
          %v1824 = vadd.f32 %v1621, %v1823
          %1825 = vmatmul.f32.gmra.mxu0 %v1522
          %v1826 = vpop.f32.mrf.mxu0
          %v1827 = vadd.f32 %v1621, %v1826
          %1828 = vmatmul.f32.gmra.mxu0 %v1523
          %v1829 = vpop.f32.mrf.mxu0
          %v1830 = vadd.f32 %v1621, %v1829
          %1831 = vdwg.mxu0
          %1832 = vmatpush.msra.mxu0 %v329
          %1833 = vmatpush.msra.mxu0 %v328
          %1834 = vmatpush.msra.mxu0 %v327
          %1835 = vmatpush.msra.mxu0 %v326
          %1836 = vmatpush.msra.mxu0 %v325
          %1837 = vmatpush.msra.mxu0 %v324
          %1838 = vmatpush.msra.mxu0 %v323
          %1839 = vmatpush.msra.mxu0 %v322
          %1840 = vmatpush.msra.mxu0 %v321
          %1841 = vmatpush.msra.mxu0 %v320
          %1842 = vmatpush.msra.mxu0 %v319
          %1843 = vmatpush.msra.mxu0 %v318
          %1844 = vmatpush.msra.mxu0 %v317
          %1845 = vmatpush.msra.mxu0 %v316
          %1846 = vmatpush.msra.mxu0 %v315
          %1847 = vmatpush.msra.mxu0 %v314
          %1848 = vmatmul.f32.gmra.mxu0 %v1588
          %v1849 = vpop.f32.mrf.mxu0
          %v1850 = vadd.f32 %v1737, %v1849
          %1851 = vmatmul.f32.gmra.mxu0 %v1589
          %v1852 = vpop.f32.mrf.mxu0
          %v1853 = vadd.f32 %v1740, %v1852
          %1854 = vmatmul.f32.gmra.mxu0 %v1590
          %v1855 = vpop.f32.mrf.mxu0
          %v1856 = vadd.f32 %v1743, %v1855
          %1857 = vmatmul.f32.gmra.mxu0 %v1591
          %v1858 = vpop.f32.mrf.mxu0
          %v1859 = vadd.f32 %v1746, %v1858
          %1860 = vmatmul.f32.gmra.mxu0 %v1592
          %v1861 = vpop.f32.mrf.mxu0
          %v1862 = vadd.f32 %v1749, %v1861
          %1863 = vmatmul.f32.gmra.mxu0 %v1593
          %v1864 = vpop.f32.mrf.mxu0
          %v1865 = vadd.f32 %v1752, %v1864
          %1866 = vmatmul.f32.gmra.mxu0 %v1594
          %v1867 = vpop.f32.mrf.mxu0
          %v1868 = vadd.f32 %v1755, %v1867
          %1869 = vmatmul.f32.gmra.mxu0 %v1595
          %v1870 = vpop.f32.mrf.mxu0
          %v1871 = vadd.f32 %v1758, %v1870
          %1872 = vmatmul.f32.gmra.mxu0 %v1596
          %v1873 = vpop.f32.mrf.mxu0
          %v1874 = vadd.f32 %v1761, %v1873
          %1875 = vmatmul.f32.gmra.mxu0 %v1597
          %v1876 = vpop.f32.mrf.mxu0
          %v1877 = vadd.f32 %v1764, %v1876
          %1878 = vmatmul.f32.gmra.mxu0 %v1598
          %v1879 = vpop.f32.mrf.mxu0
          %v1880 = vadd.f32 %v1767, %v1879
          %1881 = vmatmul.f32.gmra.mxu0 %v1599
          %v1882 = vpop.f32.mrf.mxu0
          %v1883 = vadd.f32 %v1770, %v1882
          %1884 = vmatmul.f32.gmra.mxu0 %v1600
          %v1885 = vpop.f32.mrf.mxu0
          %v1886 = vadd.f32 %v1773, %v1885
          %1887 = vmatmul.f32.gmra.mxu0 %v1601
          %v1888 = vpop.f32.mrf.mxu0
          %v1889 = vadd.f32 %v1776, %v1888
          %1890 = vmatmul.f32.gmra.mxu0 %v1602
          %v1891 = vpop.f32.mrf.mxu0
          %v1892 = vadd.f32 %v1779, %v1891
          %1893 = vmatmul.f32.gmra.mxu0 %v1603
          %v1894 = vpop.f32.mrf.mxu0
          %v1895 = vadd.f32 %v1782, %v1894
          %1896 = vmatmul.f32.gmra.mxu0 %v1604
          %v1897 = vpop.f32.mrf.mxu0
          %v1898 = vadd.f32 %v1785, %v1897
          %1899 = vmatmul.f32.gmra.mxu0 %v1605
          %v1900 = vpop.f32.mrf.mxu0
          %v1901 = vadd.f32 %v1788, %v1900
          %1902 = vmatmul.f32.gmra.mxu0 %v1606
          %v1903 = vpop.f32.mrf.mxu0
          %v1904 = vadd.f32 %v1791, %v1903
          %1905 = vmatmul.f32.gmra.mxu0 %v1607
          %v1906 = vpop.f32.mrf.mxu0
          %v1907 = vadd.f32 %v1794, %v1906
          %1908 = vmatmul.f32.gmra.mxu0 %v1608
          %v1909 = vpop.f32.mrf.mxu0
          %v1910 = vadd.f32 %v1797, %v1909
          %1911 = vmatmul.f32.gmra.mxu0 %v1609
          %v1912 = vpop.f32.mrf.mxu0
          %v1913 = vadd.f32 %v1800, %v1912
          %1914 = vmatmul.f32.gmra.mxu0 %v1610
          %v1915 = vpop.f32.mrf.mxu0
          %v1916 = vadd.f32 %v1803, %v1915
          %1917 = vmatmul.f32.gmra.mxu0 %v1611
          %v1918 = vpop.f32.mrf.mxu0
          %v1919 = vadd.f32 %v1806, %v1918
          %1920 = vmatmul.f32.gmra.mxu0 %v1612
          %v1921 = vpop.f32.mrf.mxu0
          %v1922 = vadd.f32 %v1809, %v1921
          %1923 = vmatmul.f32.gmra.mxu0 %v1613
          %v1924 = vpop.f32.mrf.mxu0
          %v1925 = vadd.f32 %v1812, %v1924
          %1926 = vmatmul.f32.gmra.mxu0 %v1614
          %v1927 = vpop.f32.mrf.mxu0
          %v1928 = vadd.f32 %v1815, %v1927
          %1929 = vmatmul.f32.gmra.mxu0 %v1615
          %v1930 = vpop.f32.mrf.mxu0
          %v1931 = vadd.f32 %v1818, %v1930
          %1932 = vmatmul.f32.gmra.mxu0 %v1616
          %v1933 = vpop.f32.mrf.mxu0
          %v1934 = vadd.f32 %v1821, %v1933
          %1935 = vmatmul.f32.gmra.mxu0 %v1617
          %v1936 = vpop.f32.mrf.mxu0
          %v1937 = vadd.f32 %v1824, %v1936
          %1938 = vmatmul.f32.gmra.mxu0 %v1618
          %v1939 = vpop.f32.mrf.mxu0
          %v1940 = vadd.f32 %v1827, %v1939
          %1941 = vmatmul.f32.gmra.mxu0 %v1619
          %v1942 = vpop.f32.mrf.mxu0
          %v1943 = vadd.f32 %v1830, %v1942
          %1944 = vdwg.mxu0
          %1945 = vmatpush.msra.mxu0 0.0
          %1946 = vmatpush.msra.mxu0 0.0
          %1947 = vmatpush.msra.mxu0 0.0
          %1948 = vmatpush.msra.mxu0 0.0
          %1949 = vmatpush.msra.mxu0 0.0
          %1950 = vmatpush.msra.mxu0 0.0
          %1951 = vmatpush.msra.mxu0 0.0
          %1952 = vmatpush.msra.mxu0 0.0
          %1953 = vmatpush.msra.mxu0 0.0
          %1954 = vmatpush.msra.mxu0 0.0
          %1955 = vmatpush.msra.mxu0 0.0
          %1956 = vmatpush.msra.mxu0 0.0
          %1957 = vmatpush.msra.mxu0 %v333
          %1958 = vmatpush.msra.mxu0 %v332
          %1959 = vmatpush.msra.mxu0 %v331
          %1960 = vmatpush.msra.mxu0 %v330
          %1961 = vmatmul.f32.gmra.mxu0 %v1624
          %v1962 = vpop.f32.mrf.mxu0
          %v1963 = vadd.f32 %v1850, %v1962
          %1964 = vmatmul.f32.gmra.mxu0 %v1627
          %v1965 = vpop.f32.mrf.mxu0
          %v1966 = vadd.f32 %v1853, %v1965
          %1967 = vmatmul.f32.gmra.mxu0 %v1630
          %v1968 = vpop.f32.mrf.mxu0
          %v1969 = vadd.f32 %v1856, %v1968
          %1970 = vmatmul.f32.gmra.mxu0 %v1633
          %v1971 = vpop.f32.mrf.mxu0
          %v1972 = vadd.f32 %v1859, %v1971
          %1973 = vmatmul.f32.gmra.mxu0 %v1636
          %v1974 = vpop.f32.mrf.mxu0
          %v1975 = vadd.f32 %v1862, %v1974
          %1976 = vmatmul.f32.gmra.mxu0 %v1639
          %v1977 = vpop.f32.mrf.mxu0
          %v1978 = vadd.f32 %v1865, %v1977
          %1979 = vmatmul.f32.gmra.mxu0 %v1642
          %v1980 = vpop.f32.mrf.mxu0
          %v1981 = vadd.f32 %v1868, %v1980
          %1982 = vmatmul.f32.gmra.mxu0 %v1645
          %v1983 = vpop.f32.mrf.mxu0
          %v1984 = vadd.f32 %v1871, %v1983
          %1985 = vmatmul.f32.gmra.mxu0 %v1648
          %v1986 = vpop.f32.mrf.mxu0
          %v1987 = vadd.f32 %v1874, %v1986
          %1988 = vmatmul.f32.gmra.mxu0 %v1651
          %v1989 = vpop.f32.mrf.mxu0
          %v1990 = vadd.f32 %v1877, %v1989
          %1991 = vmatmul.f32.gmra.mxu0 %v1654
          %v1992 = vpop.f32.mrf.mxu0
          %v1993 = vadd.f32 %v1880, %v1992
          %1994 = vmatmul.f32.gmra.mxu0 %v1657
          %v1995 = vpop.f32.mrf.mxu0
          %v1996 = vadd.f32 %v1883, %v1995
          %1997 = vmatmul.f32.gmra.mxu0 %v1660
          %v1998 = vpop.f32.mrf.mxu0
          %v1999 = vadd.f32 %v1886, %v1998
          %2000 = vmatmul.f32.gmra.mxu0 %v1663
          %v2001 = vpop.f32.mrf.mxu0
          %v2002 = vadd.f32 %v1889, %v2001
          %2003 = vmatmul.f32.gmra.mxu0 %v1666
          %v2004 = vpop.f32.mrf.mxu0
          %v2005 = vadd.f32 %v1892, %v2004
          %2006 = vmatmul.f32.gmra.mxu0 %v1669
          %v2007 = vpop.f32.mrf.mxu0
          %v2008 = vadd.f32 %v1895, %v2007
          %2009 = vmatmul.f32.gmra.mxu0 %v1672
          %v2010 = vpop.f32.mrf.mxu0
          %v2011 = vadd.f32 %v1898, %v2010
          %2012 = vmatmul.f32.gmra.mxu0 %v1675
          %v2013 = vpop.f32.mrf.mxu0
          %v2014 = vadd.f32 %v1901, %v2013
          %2015 = vmatmul.f32.gmra.mxu0 %v1678
          %v2016 = vpop.f32.mrf.mxu0
          %v2017 = vadd.f32 %v1904, %v2016
          %2018 = vmatmul.f32.gmra.mxu0 %v1681
          %v2019 = vpop.f32.mrf.mxu0
          %v2020 = vadd.f32 %v1907, %v2019
          %2021 = vmatmul.f32.gmra.mxu0 %v1684
          %v2022 = vpop.f32.mrf.mxu0
          %v2023 = vadd.f32 %v1910, %v2022
          %2024 = vmatmul.f32.gmra.mxu0 %v1687
          %v2025 = vpop.f32.mrf.mxu0
          %v2026 = vadd.f32 %v1913, %v2025
          %2027 = vmatmul.f32.gmra.mxu0 %v1690
          %v2028 = vpop.f32.mrf.mxu0
          %v2029 = vadd.f32 %v1916, %v2028
          %2030 = vmatmul.f32.gmra.mxu0 %v1693
          %v2031 = vpop.f32.mrf.mxu0
          %v2032 = vadd.f32 %v1919, %v2031
          %2033 = vmatmul.f32.gmra.mxu0 %v1696
          %v2034 = vpop.f32.mrf.mxu0
          %v2035 = vadd.f32 %v1922, %v2034
          %2036 = vmatmul.f32.gmra.mxu0 %v1699
          %v2037 = vpop.f32.mrf.mxu0
          %v2038 = vadd.f32 %v1925, %v2037
          %2039 = vmatmul.f32.gmra.mxu0 %v1702
          %v2040 = vpop.f32.mrf.mxu0
          %v2041 = vadd.f32 %v1928, %v2040
          %2042 = vmatmul.f32.gmra.mxu0 %v1705
          %v2043 = vpop.f32.mrf.mxu0
          %v2044 = vadd.f32 %v1931, %v2043
          %2045 = vmatmul.f32.gmra.mxu0 %v1708
          %v2046 = vpop.f32.mrf.mxu0
          %v2047 = vadd.f32 %v1934, %v2046
          %2048 = vmatmul.f32.gmra.mxu0 %v1711
          %v2049 = vpop.f32.mrf.mxu0
          %v2050 = vadd.f32 %v1937, %v2049
          %2051 = vmatmul.f32.gmra.mxu0 %v1714
          %v2052 = vpop.f32.mrf.mxu0
          %v2053 = vadd.f32 %v1940, %v2052
          %2054 = vmatmul.f32.gmra.mxu0 %v1717
          %v2055 = vpop.f32.mrf.mxu0
          %v2056 = vadd.f32 %v1943, %v2055
          %2057 = vdwg.mxu0
          %v2058 = vmax.f32 %v1963, 0.0
          %v2059 = vmax.f32 %v1966, 0.0
          %v2060 = vmax.f32 %v1969, 0.0
          %v2061 = vmax.f32 %v1972, 0.0
          %v2062 = vmax.f32 %v1975, 0.0
          %v2063 = vmax.f32 %v1978, 0.0
          %v2064 = vmax.f32 %v1981, 0.0
          %v2065 = vmax.f32 %v1984, 0.0
          %v2066 = vmax.f32 %v1987, 0.0
          %v2067 = vmax.f32 %v1990, 0.0
          %v2068 = vmax.f32 %v1993, 0.0
          %v2069 = vmax.f32 %v1996, 0.0
          %v2070 = vmax.f32 %v1999, 0.0
          %v2071 = vmax.f32 %v2002, 0.0
          %v2072 = vmax.f32 %v2005, 0.0
          %v2073 = vmax.f32 %v2008, 0.0
          %v2074 = vmax.f32 %v2011, 0.0
          %v2075 = vmax.f32 %v2014, 0.0
          %v2076 = vmax.f32 %v2017, 0.0
          %v2077 = vmax.f32 %v2020, 0.0
          %v2078 = vmax.f32 %v2023, 0.0
          %v2079 = vmax.f32 %v2026, 0.0
          %v2080 = vmax.f32 %v2029, 0.0
          %v2081 = vmax.f32 %v2032, 0.0
          %v2082 = vmax.f32 %v2035, 0.0
          %v2083 = vmax.f32 %v2038, 0.0
          %v2084 = vmax.f32 %v2041, 0.0
          %v2085 = vmax.f32 %v2044, 0.0
          %v2086 = vmax.f32 %v2047, 0.0
          %v2087 = vmax.f32 %v2050, 0.0
          %v2088 = vmax.f32 %v2053, 0.0
          %v2089 = vmax.f32 %v2056, 0.0
          %s2090 = sadd.s32 %s295, 1
          %s2091 = smul.u32 %s2090, 288
          %s2092 = scalar_lea.vmem %s1, %s2091
          %v2093 = vld [vmem:[%s2092] sm:$0xff]
          %v2094 = vld [vmem:[%s2092 + $0x8] sm:$0xff]
          %v2095 = vld [vmem:[%s2092 + $0x10] sm:$0xff]
          %v2096 = vld [vmem:[%s2092 + $0x18] sm:$0xff]
          %v2097 = vld [vmem:[%s2092 + $0x20] sm:$0xff]
          %v2098 = vld [vmem:[%s2092 + $0x28] sm:$0xff]
          %v2099 = vld [vmem:[%s2092 + $0x30] sm:$0xff]
          %v2100 = vld [vmem:[%s2092 + $0x38] sm:$0xff]
          %v2101 = vld [vmem:[%s2092 + $0x40] sm:$0xff]
          %v2102 = vld [vmem:[%s2092 + $0x48] sm:$0xff]
          %v2103 = vld [vmem:[%s2092 + $0x50] sm:$0xff]
          %v2104 = vld [vmem:[%s2092 + $0x58] sm:$0xff]
          %v2105 = vld [vmem:[%s2092 + $0x60] sm:$0xff]
          %v2106 = vld [vmem:[%s2092 + $0x68] sm:$0xff]
          %v2107 = vld [vmem:[%s2092 + $0x70] sm:$0xff]
          %v2108 = vld [vmem:[%s2092 + $0x78] sm:$0xff]
          %v2109 = vld [vmem:[%s2092 + $0x80] sm:$0xff]
          %v2110 = vld [vmem:[%s2092 + $0x88] sm:$0xff]
          %v2111 = vld [vmem:[%s2092 + $0x90] sm:$0xff]
          %v2112 = vld [vmem:[%s2092 + $0x98] sm:$0xff]
          %v2113 = vld [vmem:[%s2092 + $0xa0] sm:$0xff]
          %v2114 = vld [vmem:[%s2092 + $0xa8] sm:$0xff]
          %v2115 = vld [vmem:[%s2092 + $0xb0] sm:$0xff]
          %v2116 = vld [vmem:[%s2092 + $0xb8] sm:$0xff]
          %v2117 = vld [vmem:[%s2092 + $0xc0] sm:$0xff]
          %v2118 = vld [vmem:[%s2092 + $0xc8] sm:$0xff]
          %v2119 = vld [vmem:[%s2092 + $0xd0] sm:$0xff]
          %v2120 = vld [vmem:[%s2092 + $0xd8] sm:$0xff]
          %v2121 = vld [vmem:[%s2092 + $0xe0] sm:$0xff]
          %v2122 = vld [vmem:[%s2092 + $0xe8] sm:$0xff]
          %v2123 = vld [vmem:[%s2092 + $0xf0] sm:$0xff]
          %v2124 = vld [vmem:[%s2092 + $0xf8] sm:$0xff]
          %v2125 = vld [vmem:[%s2092 + $0x100] sm:$0xff]
          %v2126 = vld [vmem:[%s2092 + $0x108] sm:$0xff]
          %v2127 = vld [vmem:[%s2092 + $0x110] sm:$0xff]
          %v2128 = vld [vmem:[%s2092 + $0x118] sm:$0xff]
          %s2129 = scalar_lea.vmem %s2, %s2090
          %v2130 = vld [vmem:[%s2129] sm:$0x1]
          %2131 = vst.msk [vmem:[%s336 + $0x1] sm:$0xff] %vm169, %v2058
          %2132 = vst.msk [vmem:[%s336 + $0x9] sm:$0xff] %vm169, %v2059
          %2133 = vst.msk [vmem:[%s336 + $0x19] sm:$0xff] %vm169, %v2060
          %2134 = vst.msk [vmem:[%s336 + $0x21] sm:$0xff] %vm169, %v2061
          %2135 = vst.msk [vmem:[%s336 + $0x31] sm:$0xff] %vm169, %v2062
          %2136 = vst.msk [vmem:[%s336 + $0x39] sm:$0xff] %vm169, %v2063
          %2137 = vst.msk [vmem:[%s336 + $0x49] sm:$0xff] %vm169, %v2064
          %2138 = vst.msk [vmem:[%s336 + $0x51] sm:$0xff] %vm169, %v2065
          %2139 = vst.msk [vmem:[%s336 + $0x61] sm:$0xff] %vm169, %v2066
          %2140 = vst.msk [vmem:[%s336 + $0x69] sm:$0xff] %vm169, %v2067
          %2141 = vst.msk [vmem:[%s336 + $0x79] sm:$0xff] %vm169, %v2068
          %2142 = vst.msk [vmem:[%s336 + $0x81] sm:$0xff] %vm169, %v2069
          %2143 = vst.msk [vmem:[%s336 + $0x91] sm:$0xff] %vm169, %v2070
          %2144 = vst.msk [vmem:[%s336 + $0x99] sm:$0xff] %vm169, %v2071
          %2145 = vst.msk [vmem:[%s336 + $0xa9] sm:$0xff] %vm169, %v2072
          %2146 = vst.msk [vmem:[%s336 + $0xb1] sm:$0xff] %vm169, %v2073
          %2147 = vst.msk [vmem:[%s336 + $0xc1] sm:$0xff] %vm169, %v2074
          %2148 = vst.msk [vmem:[%s336 + $0xc9] sm:$0xff] %vm169, %v2075
          %2149 = vst.msk [vmem:[%s336 + $0xd9] sm:$0xff] %vm169, %v2076
          %2150 = vst.msk [vmem:[%s336 + $0xe1] sm:$0xff] %vm169, %v2077
          %2151 = vst.msk [vmem:[%s336 + $0xf1] sm:$0xff] %vm169, %v2078
          %2152 = vst.msk [vmem:[%s336 + $0xf9] sm:$0xff] %vm169, %v2079
          %2153 = vst.msk [vmem:[%s336 + $0x109] sm:$0xff] %vm169, %v2080
          %2154 = vst.msk [vmem:[%s336 + $0x111] sm:$0xff] %vm169, %v2081
          %2155 = vst.msk [vmem:[%s336 + $0x121] sm:$0xff] %vm169, %v2082
          %2156 = vst.msk [vmem:[%s336 + $0x129] sm:$0xff] %vm169, %v2083
          %2157 = vst.msk [vmem:[%s336 + $0x139] sm:$0xff] %vm169, %v2084
          %2158 = vst.msk [vmem:[%s336 + $0x141] sm:$0xff] %vm169, %v2085
          %2159 = vst.msk [vmem:[%s336 + $0x151] sm:$0xff] %vm169, %v2086
          %2160 = vst.msk [vmem:[%s336 + $0x159] sm:$0xff] %vm169, %v2087
          %2161 = vst.msk [vmem:[%s336 + $0x169] sm:$0xff] %vm169, %v2088
          %2162 = vst.msk [vmem:[%s336 + $0x171] sm:$0xff] %vm169, %v2089
          %v2163 = vld [vmem:[#allocation2] sm:$0xff]
          %v2164 = vld [vmem:[#allocation2 + $0x8] sm:$0xff]
          %v2165 = vld [vmem:[#allocation2 + $0x18] sm:$0xff]
          %v2166 = vld [vmem:[#allocation2 + $0x20] sm:$0xff]
          %v2167 = vld [vmem:[#allocation2 + $0x30] sm:$0xff]
          %v2168 = vld [vmem:[#allocation2 + $0x38] sm:$0xff]
          %v2169 = vld [vmem:[#allocation2 + $0x48] sm:$0xff]
          %v2170 = vld [vmem:[#allocation2 + $0x50] sm:$0xff]
          %v2171 = vld [vmem:[#allocation2 + $0x60] sm:$0xff]
          %v2172 = vld [vmem:[#allocation2 + $0x68] sm:$0xff]
          %v2173 = vld [vmem:[#allocation2 + $0x78] sm:$0xff]
          %v2174 = vld [vmem:[#allocation2 + $0x80] sm:$0xff]
          %v2175 = vld [vmem:[#allocation2 + $0x90] sm:$0xff]
          %v2176 = vld [vmem:[#allocation2 + $0x98] sm:$0xff]
          %v2177 = vld [vmem:[#allocation2 + $0xa8] sm:$0xff]
          %v2178 = vld [vmem:[#allocation2 + $0xb0] sm:$0xff]
          %v2179 = vld [vmem:[#allocation2 + $0xc0] sm:$0xff]
          %v2180 = vld [vmem:[#allocation2 + $0xc8] sm:$0xff]
          %v2181 = vld [vmem:[#allocation2 + $0xd8] sm:$0xff]
          %v2182 = vld [vmem:[#allocation2 + $0xe0] sm:$0xff]
          %v2183 = vld [vmem:[#allocation2 + $0xf0] sm:$0xff]
          %v2184 = vld [vmem:[#allocation2 + $0xf8] sm:$0xff]
          %v2185 = vld [vmem:[#allocation2 + $0x108] sm:$0xff]
          %v2186 = vld [vmem:[#allocation2 + $0x110] sm:$0xff]
          %v2187 = vld [vmem:[#allocation2 + $0x120] sm:$0xff]
          %v2188 = vld [vmem:[#allocation2 + $0x128] sm:$0xff]
          %v2189 = vld [vmem:[#allocation2 + $0x138] sm:$0xff]
          %v2190 = vld [vmem:[#allocation2 + $0x140] sm:$0xff]
          %v2191 = vld [vmem:[#allocation2 + $0x150] sm:$0xff]
          %v2192 = vld [vmem:[#allocation2 + $0x158] sm:$0xff]
          %v2193 = vld [vmem:[#allocation2 + $0x168] sm:$0xff]
          %v2194 = vld [vmem:[#allocation2 + $0x170] sm:$0xff]
          %v2195 = vld [vmem:[#allocation2 + $0x1] sm:$0xff]
          %v2196 = vld [vmem:[#allocation2 + $0x9] sm:$0xff]
          %v2197 = vld [vmem:[#allocation2 + $0x19] sm:$0xff]
          %v2198 = vld [vmem:[#allocation2 + $0x21] sm:$0xff]
          %v2199 = vld [vmem:[#allocation2 + $0x31] sm:$0xff]
          %v2200 = vld [vmem:[#allocation2 + $0x39] sm:$0xff]
          %v2201 = vld [vmem:[#allocation2 + $0x49] sm:$0xff]
          %v2202 = vld [vmem:[#allocation2 + $0x51] sm:$0xff]
          %v2203 = vld [vmem:[#allocation2 + $0x61] sm:$0xff]
          %v2204 = vld [vmem:[#allocation2 + $0x69] sm:$0xff]
          %v2205 = vld [vmem:[#allocation2 + $0x79] sm:$0xff]
          %v2206 = vld [vmem:[#allocation2 + $0x81] sm:$0xff]
          %v2207 = vld [vmem:[#allocation2 + $0x91] sm:$0xff]
          %v2208 = vld [vmem:[#allocation2 + $0x99] sm:$0xff]
          %v2209 = vld [vmem:[#allocation2 + $0xa9] sm:$0xff]
          %v2210 = vld [vmem:[#allocation2 + $0xb1] sm:$0xff]
          %v2211 = vld [vmem:[#allocation2 + $0xc1] sm:$0xff]
          %v2212 = vld [vmem:[#allocation2 + $0xc9] sm:$0xff]
          %v2213 = vld [vmem:[#allocation2 + $0xd9] sm:$0xff]
          %v2214 = vld [vmem:[#allocation2 + $0xe1] sm:$0xff]
          %v2215 = vld [vmem:[#allocation2 + $0xf1] sm:$0xff]
          %v2216 = vld [vmem:[#allocation2 + $0xf9] sm:$0xff]
          %v2217 = vld [vmem:[#allocation2 + $0x109] sm:$0xff]
          %v2218 = vld [vmem:[#allocation2 + $0x111] sm:$0xff]
          %v2219 = vld [vmem:[#allocation2 + $0x121] sm:$0xff]
          %v2220 = vld [vmem:[#allocation2 + $0x129] sm:$0xff]
          %v2221 = vld [vmem:[#allocation2 + $0x139] sm:$0xff]
          %v2222 = vld [vmem:[#allocation2 + $0x141] sm:$0xff]
          %v2223 = vld [vmem:[#allocation2 + $0x151] sm:$0xff]
          %v2224 = vld [vmem:[#allocation2 + $0x159] sm:$0xff]
          %v2225 = vld [vmem:[#allocation2 + $0x169] sm:$0xff]
          %v2226 = vld [vmem:[#allocation2 + $0x171] sm:$0xff]
          %v2227 = vld [vmem:[#allocation2 + $0x2] sm:$0xff]
          %v2228 = vld [vmem:[#allocation2 + $0xa] sm:$0xff]
          %v2229 = vld [vmem:[#allocation2 + $0x1a] sm:$0xff]
          %v2230 = vld [vmem:[#allocation2 + $0x22] sm:$0xff]
          %v2231 = vld [vmem:[#allocation2 + $0x32] sm:$0xff]
          %v2232 = vld [vmem:[#allocation2 + $0x3a] sm:$0xff]
          %v2233 = vld [vmem:[#allocation2 + $0x4a] sm:$0xff]
          %v2234 = vld [vmem:[#allocation2 + $0x52] sm:$0xff]
          %v2235 = vld [vmem:[#allocation2 + $0x62] sm:$0xff]
          %v2236 = vld [vmem:[#allocation2 + $0x6a] sm:$0xff]
          %v2237 = vld [vmem:[#allocation2 + $0x7a] sm:$0xff]
          %v2238 = vld [vmem:[#allocation2 + $0x82] sm:$0xff]
          %v2239 = vld [vmem:[#allocation2 + $0x92] sm:$0xff]
          %v2240 = vld [vmem:[#allocation2 + $0x9a] sm:$0xff]
          %v2241 = vld [vmem:[#allocation2 + $0xaa] sm:$0xff]
          %v2242 = vld [vmem:[#allocation2 + $0xb2] sm:$0xff]
          %v2243 = vld [vmem:[#allocation2 + $0xc2] sm:$0xff]
          %v2244 = vld [vmem:[#allocation2 + $0xca] sm:$0xff]
          %v2245 = vld [vmem:[#allocation2 + $0xda] sm:$0xff]
          %v2246 = vld [vmem:[#allocation2 + $0xe2] sm:$0xff]
          %v2247 = vld [vmem:[#allocation2 + $0xf2] sm:$0xff]
          %v2248 = vld [vmem:[#allocation2 + $0xfa] sm:$0xff]
          %v2249 = vld [vmem:[#allocation2 + $0x10a] sm:$0xff]
          %v2250 = vld [vmem:[#allocation2 + $0x112] sm:$0xff]
          %v2251 = vld [vmem:[#allocation2 + $0x122] sm:$0xff]
          %v2252 = vld [vmem:[#allocation2 + $0x12a] sm:$0xff]
          %v2253 = vld [vmem:[#allocation2 + $0x13a] sm:$0xff]
          %v2254 = vld [vmem:[#allocation2 + $0x142] sm:$0xff]
          %v2255 = vld [vmem:[#allocation2 + $0x152] sm:$0xff]
          %v2256 = vld [vmem:[#allocation2 + $0x15a] sm:$0xff]
          %v2257 = vld [vmem:[#allocation2 + $0x16a] sm:$0xff]
          %v2258 = vld [vmem:[#allocation2 + $0x172] sm:$0xff]
          %v2259 = vld [vmem:[%s336] sm:$0xff]
          %v2260 = vld [vmem:[%s336 + $0x8] sm:$0xff]
          %v2261 = vld [vmem:[%s336 + $0x18] sm:$0xff]
          %v2262 = vld [vmem:[%s336 + $0x20] sm:$0xff]
          %v2263 = vld [vmem:[%s336 + $0x30] sm:$0xff]
          %v2264 = vld [vmem:[%s336 + $0x38] sm:$0xff]
          %v2265 = vld [vmem:[%s336 + $0x48] sm:$0xff]
          %v2266 = vld [vmem:[%s336 + $0x50] sm:$0xff]
          %v2267 = vld [vmem:[%s336 + $0x60] sm:$0xff]
          %v2268 = vld [vmem:[%s336 + $0x68] sm:$0xff]
          %v2269 = vld [vmem:[%s336 + $0x78] sm:$0xff]
          %v2270 = vld [vmem:[%s336 + $0x80] sm:$0xff]
          %v2271 = vld [vmem:[%s336 + $0x90] sm:$0xff]
          %v2272 = vld [vmem:[%s336 + $0x98] sm:$0xff]
          %v2273 = vld [vmem:[%s336 + $0xa8] sm:$0xff]
          %v2274 = vld [vmem:[%s336 + $0xb0] sm:$0xff]
          %v2275 = vld [vmem:[%s336 + $0xc0] sm:$0xff]
          %v2276 = vld [vmem:[%s336 + $0xc8] sm:$0xff]
          %v2277 = vld [vmem:[%s336 + $0xd8] sm:$0xff]
          %v2278 = vld [vmem:[%s336 + $0xe0] sm:$0xff]
          %v2279 = vld [vmem:[%s336 + $0xf0] sm:$0xff]
          %v2280 = vld [vmem:[%s336 + $0xf8] sm:$0xff]
          %v2281 = vld [vmem:[%s336 + $0x108] sm:$0xff]
          %v2282 = vld [vmem:[%s336 + $0x110] sm:$0xff]
          %v2283 = vld [vmem:[%s336 + $0x120] sm:$0xff]
          %v2284 = vld [vmem:[%s336 + $0x128] sm:$0xff]
          %v2285 = vld [vmem:[%s336 + $0x138] sm:$0xff]
          %v2286 = vld [vmem:[%s336 + $0x140] sm:$0xff]
          %v2287 = vld [vmem:[%s336 + $0x150] sm:$0xff]
          %v2288 = vld [vmem:[%s336 + $0x158] sm:$0xff]
          %v2289 = vld [vmem:[%s336 + $0x168] sm:$0xff]
          %v2290 = vld [vmem:[%s336 + $0x170] sm:$0xff]
          %v2291 = vld [vmem:[%s336 + $0x1] sm:$0xff]
          %v2292 = vld [vmem:[%s336 + $0x9] sm:$0xff]
          %v2293 = vld [vmem:[%s336 + $0x19] sm:$0xff]
          %v2294 = vld [vmem:[%s336 + $0x21] sm:$0xff]
          %v2295 = vld [vmem:[%s336 + $0x31] sm:$0xff]
          %v2296 = vld [vmem:[%s336 + $0x39] sm:$0xff]
          %v2297 = vld [vmem:[%s336 + $0x49] sm:$0xff]
          %v2298 = vld [vmem:[%s336 + $0x51] sm:$0xff]
          %v2299 = vld [vmem:[%s336 + $0x61] sm:$0xff]
          %v2300 = vld [vmem:[%s336 + $0x69] sm:$0xff]
          %v2301 = vld [vmem:[%s336 + $0x79] sm:$0xff]
          %v2302 = vld [vmem:[%s336 + $0x81] sm:$0xff]
          %v2303 = vld [vmem:[%s336 + $0x91] sm:$0xff]
          %v2304 = vld [vmem:[%s336 + $0x99] sm:$0xff]
          %v2305 = vld [vmem:[%s336 + $0xa9] sm:$0xff]
          %v2306 = vld [vmem:[%s336 + $0xb1] sm:$0xff]
          %v2307 = vld [vmem:[%s336 + $0xc1] sm:$0xff]
          %v2308 = vld [vmem:[%s336 + $0xc9] sm:$0xff]
          %v2309 = vld [vmem:[%s336 + $0xd9] sm:$0xff]
          %v2310 = vld [vmem:[%s336 + $0xe1] sm:$0xff]
          %v2311 = vld [vmem:[%s336 + $0xf1] sm:$0xff]
          %v2312 = vld [vmem:[%s336 + $0xf9] sm:$0xff]
          %v2313 = vld [vmem:[%s336 + $0x109] sm:$0xff]
          %v2314 = vld [vmem:[%s336 + $0x111] sm:$0xff]
          %v2315 = vld [vmem:[%s336 + $0x121] sm:$0xff]
          %v2316 = vld [vmem:[%s336 + $0x129] sm:$0xff]
          %v2317 = vld [vmem:[%s336 + $0x139] sm:$0xff]
          %v2318 = vld [vmem:[%s336 + $0x141] sm:$0xff]
          %v2319 = vld [vmem:[%s336 + $0x151] sm:$0xff]
          %v2320 = vld [vmem:[%s336 + $0x159] sm:$0xff]
          %v2321 = vld [vmem:[%s336 + $0x169] sm:$0xff]
          %v2322 = vld [vmem:[%s336 + $0x171] sm:$0xff]
          %v2323 = vld [vmem:[%s336 + $0x2] sm:$0xff]
          %v2324 = vld [vmem:[%s336 + $0xa] sm:$0xff]
          %v2325 = vld [vmem:[%s336 + $0x1a] sm:$0xff]
          %v2326 = vld [vmem:[%s336 + $0x22] sm:$0xff]
          %v2327 = vld [vmem:[%s336 + $0x32] sm:$0xff]
          %v2328 = vld [vmem:[%s336 + $0x3a] sm:$0xff]
          %v2329 = vld [vmem:[%s336 + $0x4a] sm:$0xff]
          %v2330 = vld [vmem:[%s336 + $0x52] sm:$0xff]
          %v2331 = vld [vmem:[%s336 + $0x62] sm:$0xff]
          %v2332 = vld [vmem:[%s336 + $0x6a] sm:$0xff]
          %v2333 = vld [vmem:[%s336 + $0x7a] sm:$0xff]
          %v2334 = vld [vmem:[%s336 + $0x82] sm:$0xff]
          %v2335 = vld [vmem:[%s336 + $0x92] sm:$0xff]
          %v2336 = vld [vmem:[%s336 + $0x9a] sm:$0xff]
          %v2337 = vld [vmem:[%s336 + $0xaa] sm:$0xff]
          %v2338 = vld [vmem:[%s336 + $0xb2] sm:$0xff]
          %v2339 = vld [vmem:[%s336 + $0xc2] sm:$0xff]
          %v2340 = vld [vmem:[%s336 + $0xca] sm:$0xff]
          %v2341 = vld [vmem:[%s336 + $0xda] sm:$0xff]
          %v2342 = vld [vmem:[%s336 + $0xe2] sm:$0xff]
          %v2343 = vld [vmem:[%s336 + $0xf2] sm:$0xff]
          %v2344 = vld [vmem:[%s336 + $0xfa] sm:$0xff]
          %v2345 = vld [vmem:[%s336 + $0x10a] sm:$0xff]
          %v2346 = vld [vmem:[%s336 + $0x112] sm:$0xff]
          %v2347 = vld [vmem:[%s336 + $0x122] sm:$0xff]
          %v2348 = vld [vmem:[%s336 + $0x12a] sm:$0xff]
          %v2349 = vld [vmem:[%s336 + $0x13a] sm:$0xff]
          %v2350 = vld [vmem:[%s336 + $0x142] sm:$0xff]
          %v2351 = vld [vmem:[%s336 + $0x152] sm:$0xff]
          %v2352 = vld [vmem:[%s336 + $0x15a] sm:$0xff]
          %v2353 = vld [vmem:[%s336 + $0x16a] sm:$0xff]
          %v2354 = vld [vmem:[%s336 + $0x172] sm:$0xff]
          %v2355 = vld [vmem:[%s561] sm:$0xff]
          %v2356 = vld [vmem:[%s561 + $0x8] sm:$0xff]
          %v2357 = vld [vmem:[%s561 + $0x18] sm:$0xff]
          %v2358 = vld [vmem:[%s561 + $0x20] sm:$0xff]
          %v2359 = vld [vmem:[%s561 + $0x30] sm:$0xff]
          %v2360 = vld [vmem:[%s561 + $0x38] sm:$0xff]
          %v2361 = vld [vmem:[%s561 + $0x48] sm:$0xff]
          %v2362 = vld [vmem:[%s561 + $0x50] sm:$0xff]
          %v2363 = vld [vmem:[%s561 + $0x60] sm:$0xff]
          %v2364 = vld [vmem:[%s561 + $0x68] sm:$0xff]
          %v2365 = vld [vmem:[%s561 + $0x78] sm:$0xff]
          %v2366 = vld [vmem:[%s561 + $0x80] sm:$0xff]
          %v2367 = vld [vmem:[%s561 + $0x90] sm:$0xff]
          %v2368 = vld [vmem:[%s561 + $0x98] sm:$0xff]
          %v2369 = vld [vmem:[%s561 + $0xa8] sm:$0xff]
          %v2370 = vld [vmem:[%s561 + $0xb0] sm:$0xff]
          %v2371 = vld [vmem:[%s561 + $0xc0] sm:$0xff]
          %v2372 = vld [vmem:[%s561 + $0xc8] sm:$0xff]
          %v2373 = vld [vmem:[%s561 + $0xd8] sm:$0xff]
          %v2374 = vld [vmem:[%s561 + $0xe0] sm:$0xff]
          %v2375 = vld [vmem:[%s561 + $0xf0] sm:$0xff]
          %v2376 = vld [vmem:[%s561 + $0xf8] sm:$0xff]
          %v2377 = vld [vmem:[%s561 + $0x108] sm:$0xff]
          %v2378 = vld [vmem:[%s561 + $0x110] sm:$0xff]
          %v2379 = vld [vmem:[%s561 + $0x120] sm:$0xff]
          %v2380 = vld [vmem:[%s561 + $0x128] sm:$0xff]
          %v2381 = vld [vmem:[%s561 + $0x138] sm:$0xff]
          %v2382 = vld [vmem:[%s561 + $0x140] sm:$0xff]
          %v2383 = vld [vmem:[%s561 + $0x150] sm:$0xff]
          %v2384 = vld [vmem:[%s561 + $0x158] sm:$0xff]
          %v2385 = vld [vmem:[%s561 + $0x168] sm:$0xff]
          %v2386 = vld [vmem:[%s561 + $0x170] sm:$0xff]
          %v2387 = vld [vmem:[%s561 + $0x1] sm:$0xff]
          %v2388 = vld [vmem:[%s561 + $0x9] sm:$0xff]
          %v2389 = vld [vmem:[%s561 + $0x19] sm:$0xff]
          %v2390 = vld [vmem:[%s561 + $0x21] sm:$0xff]
          %v2391 = vld [vmem:[%s561 + $0x31] sm:$0xff]
          %v2392 = vld [vmem:[%s561 + $0x39] sm:$0xff]
          %v2393 = vld [vmem:[%s561 + $0x49] sm:$0xff]
          %v2394 = vld [vmem:[%s561 + $0x51] sm:$0xff]
          %v2395 = vld [vmem:[%s561 + $0x61] sm:$0xff]
          %v2396 = vld [vmem:[%s561 + $0x69] sm:$0xff]
          %v2397 = vld [vmem:[%s561 + $0x79] sm:$0xff]
          %v2398 = vld [vmem:[%s561 + $0x81] sm:$0xff]
          %v2399 = vld [vmem:[%s561 + $0x91] sm:$0xff]
          %v2400 = vld [vmem:[%s561 + $0x99] sm:$0xff]
          %v2401 = vld [vmem:[%s561 + $0xa9] sm:$0xff]
          %v2402 = vld [vmem:[%s561 + $0xb1] sm:$0xff]
          %v2403 = vld [vmem:[%s561 + $0xc1] sm:$0xff]
          %v2404 = vld [vmem:[%s561 + $0xc9] sm:$0xff]
          %v2405 = vld [vmem:[%s561 + $0xd9] sm:$0xff]
          %v2406 = vld [vmem:[%s561 + $0xe1] sm:$0xff]
          %v2407 = vld [vmem:[%s561 + $0xf1] sm:$0xff]
          %v2408 = vld [vmem:[%s561 + $0xf9] sm:$0xff]
          %v2409 = vld [vmem:[%s561 + $0x109] sm:$0xff]
          %v2410 = vld [vmem:[%s561 + $0x111] sm:$0xff]
          %v2411 = vld [vmem:[%s561 + $0x121] sm:$0xff]
          %v2412 = vld [vmem:[%s561 + $0x129] sm:$0xff]
          %v2413 = vld [vmem:[%s561 + $0x139] sm:$0xff]
          %v2414 = vld [vmem:[%s561 + $0x141] sm:$0xff]
          %v2415 = vld [vmem:[%s561 + $0x151] sm:$0xff]
          %v2416 = vld [vmem:[%s561 + $0x159] sm:$0xff]
          %v2417 = vld [vmem:[%s561 + $0x169] sm:$0xff]
          %v2418 = vld [vmem:[%s561 + $0x171] sm:$0xff]
          %v2419 = vld [vmem:[%s561 + $0x2] sm:$0xff]
          %v2420 = vld [vmem:[%s561 + $0xa] sm:$0xff]
          %v2421 = vld [vmem:[%s561 + $0x1a] sm:$0xff]
          %v2422 = vld [vmem:[%s561 + $0x22] sm:$0xff]
          %v2423 = vld [vmem:[%s561 + $0x32] sm:$0xff]
          %v2424 = vld [vmem:[%s561 + $0x3a] sm:$0xff]
          %v2425 = vld [vmem:[%s561 + $0x4a] sm:$0xff]
          %v2426 = vld [vmem:[%s561 + $0x52] sm:$0xff]
          %v2427 = vld [vmem:[%s561 + $0x62] sm:$0xff]
          %v2428 = vld [vmem:[%s561 + $0x6a] sm:$0xff]
          %v2429 = vld [vmem:[%s561 + $0x7a] sm:$0xff]
          %v2430 = vld [vmem:[%s561 + $0x82] sm:$0xff]
          %v2431 = vld [vmem:[%s561 + $0x92] sm:$0xff]
          %v2432 = vld [vmem:[%s561 + $0x9a] sm:$0xff]
          %v2433 = vld [vmem:[%s561 + $0xaa] sm:$0xff]
          %v2434 = vld [vmem:[%s561 + $0xb2] sm:$0xff]
          %v2435 = vld [vmem:[%s561 + $0xc2] sm:$0xff]
          %v2436 = vld [vmem:[%s561 + $0xca] sm:$0xff]
          %v2437 = vld [vmem:[%s561 + $0xda] sm:$0xff]
          %v2438 = vld [vmem:[%s561 + $0xe2] sm:$0xff]
          %v2439 = vld [vmem:[%s561 + $0xf2] sm:$0xff]
          %v2440 = vld [vmem:[%s561 + $0xfa] sm:$0xff]
          %v2441 = vld [vmem:[%s561 + $0x10a] sm:$0xff]
          %v2442 = vld [vmem:[%s561 + $0x112] sm:$0xff]
          %v2443 = vld [vmem:[%s561 + $0x122] sm:$0xff]
          %v2444 = vld [vmem:[%s561 + $0x12a] sm:$0xff]
          %v2445 = vld [vmem:[%s561 + $0x13a] sm:$0xff]
          %v2446 = vld [vmem:[%s561 + $0x142] sm:$0xff]
          %v2447 = vld [vmem:[%s561 + $0x152] sm:$0xff]
          %v2448 = vld [vmem:[%s561 + $0x15a] sm:$0xff]
          %v2449 = vld [vmem:[%s561 + $0x16a] sm:$0xff]
          %v2450 = vld [vmem:[%s561 + $0x172] sm:$0xff]
          %2483 = vrot.lane.b32.xlu0 %v2195, 32
          %v2484 = vpop.permute.xlu0 %2483
          %2485 = vrot.lane.b32.xlu0 %v2196, 32
          %v2486 = vpop.permute.xlu0 %2485
          %2487 = vrot.lane.b32.xlu0 %v2197, 32
          %v2488 = vpop.permute.xlu0 %2487
          %2489 = vrot.lane.b32.xlu0 %v2198, 32
          %v2490 = vpop.permute.xlu0 %2489
          %2491 = vrot.lane.b32.xlu0 %v2199, 32
          %v2492 = vpop.permute.xlu0 %2491
          %2493 = vrot.lane.b32.xlu0 %v2200, 32
          %v2494 = vpop.permute.xlu0 %2493
          %2495 = vrot.lane.b32.xlu0 %v2201, 32
          %v2496 = vpop.permute.xlu0 %2495
          %2497 = vrot.lane.b32.xlu0 %v2202, 32
          %v2498 = vpop.permute.xlu0 %2497
          %2499 = vrot.lane.b32.xlu0 %v2203, 32
          %v2500 = vpop.permute.xlu0 %2499
          %2501 = vrot.lane.b32.xlu0 %v2204, 32
          %v2502 = vpop.permute.xlu0 %2501
          %2503 = vrot.lane.b32.xlu0 %v2205, 32
          %v2504 = vpop.permute.xlu0 %2503
          %2505 = vrot.lane.b32.xlu0 %v2206, 32
          %v2506 = vpop.permute.xlu0 %2505
          %2507 = vrot.lane.b32.xlu0 %v2207, 32
          %v2508 = vpop.permute.xlu0 %2507
          %2509 = vrot.lane.b32.xlu0 %v2208, 32
          %v2510 = vpop.permute.xlu0 %2509
          %2511 = vrot.lane.b32.xlu0 %v2209, 32
          %v2512 = vpop.permute.xlu0 %2511
          %2513 = vrot.lane.b32.xlu0 %v2210, 32
          %v2514 = vpop.permute.xlu0 %2513
          %2515 = vrot.lane.b32.xlu0 %v2211, 32
          %v2516 = vpop.permute.xlu0 %2515
          %2517 = vrot.lane.b32.xlu0 %v2212, 32
          %v2518 = vpop.permute.xlu0 %2517
          %2519 = vrot.lane.b32.xlu0 %v2213, 32
          %v2520 = vpop.permute.xlu0 %2519
          %2521 = vrot.lane.b32.xlu0 %v2214, 32
          %v2522 = vpop.permute.xlu0 %2521
          %2523 = vrot.lane.b32.xlu0 %v2215, 32
          %v2524 = vpop.permute.xlu0 %2523
          %2525 = vrot.lane.b32.xlu0 %v2216, 32
          %v2526 = vpop.permute.xlu0 %2525
          %2527 = vrot.lane.b32.xlu0 %v2217, 32
          %v2528 = vpop.permute.xlu0 %2527
          %2529 = vrot.lane.b32.xlu0 %v2218, 32
          %v2530 = vpop.permute.xlu0 %2529
          %2531 = vrot.lane.b32.xlu0 %v2219, 32
          %v2532 = vpop.permute.xlu0 %2531
          %2533 = vrot.lane.b32.xlu0 %v2220, 32
          %v2534 = vpop.permute.xlu0 %2533
          %2535 = vrot.lane.b32.xlu0 %v2221, 32
          %v2536 = vpop.permute.xlu0 %2535
          %2537 = vrot.lane.b32.xlu0 %v2222, 32
          %v2538 = vpop.permute.xlu0 %2537
          %2539 = vrot.lane.b32.xlu0 %v2223, 32
          %v2540 = vpop.permute.xlu0 %2539
          %2541 = vrot.lane.b32.xlu0 %v2224, 32
          %v2542 = vpop.permute.xlu0 %2541
          %2543 = vrot.lane.b32.xlu0 %v2225, 32
          %v2544 = vpop.permute.xlu0 %2543
          %2545 = vrot.lane.b32.xlu0 %v2226, 32
          %v2546 = vpop.permute.xlu0 %2545
          %2611 = vrot.lane.b32.xlu0 %v2227, 64
          %v2612 = vpop.permute.xlu0 %2611
          %2613 = vrot.lane.b32.xlu0 %v2228, 64
          %v2614 = vpop.permute.xlu0 %2613
          %2615 = vrot.lane.b32.xlu0 %v2229, 64
          %v2616 = vpop.permute.xlu0 %2615
          %2617 = vrot.lane.b32.xlu0 %v2230, 64
          %v2618 = vpop.permute.xlu0 %2617
          %2619 = vrot.lane.b32.xlu0 %v2231, 64
          %v2620 = vpop.permute.xlu0 %2619
          %2621 = vrot.lane.b32.xlu0 %v2232, 64
          %v2622 = vpop.permute.xlu0 %2621
          %2623 = vrot.lane.b32.xlu0 %v2233, 64
          %v2624 = vpop.permute.xlu0 %2623
          %2625 = vrot.lane.b32.xlu0 %v2234, 64
          %v2626 = vpop.permute.xlu0 %2625
          %2627 = vrot.lane.b32.xlu0 %v2235, 64
          %v2628 = vpop.permute.xlu0 %2627
          %2629 = vrot.lane.b32.xlu0 %v2236, 64
          %v2630 = vpop.permute.xlu0 %2629
          %2631 = vrot.lane.b32.xlu0 %v2237, 64
          %v2632 = vpop.permute.xlu0 %2631
          %2633 = vrot.lane.b32.xlu0 %v2238, 64
          %v2634 = vpop.permute.xlu0 %2633
          %2635 = vrot.lane.b32.xlu0 %v2239, 64
          %v2636 = vpop.permute.xlu0 %2635
          %2637 = vrot.lane.b32.xlu0 %v2240, 64
          %v2638 = vpop.permute.xlu0 %2637
          %2639 = vrot.lane.b32.xlu0 %v2241, 64
          %v2640 = vpop.permute.xlu0 %2639
          %2641 = vrot.lane.b32.xlu0 %v2242, 64
          %v2642 = vpop.permute.xlu0 %2641
          %2643 = vrot.lane.b32.xlu0 %v2243, 64
          %v2644 = vpop.permute.xlu0 %2643
          %2645 = vrot.lane.b32.xlu0 %v2244, 64
          %v2646 = vpop.permute.xlu0 %2645
          %2647 = vrot.lane.b32.xlu0 %v2245, 64
          %v2648 = vpop.permute.xlu0 %2647
          %2649 = vrot.lane.b32.xlu0 %v2246, 64
          %v2650 = vpop.permute.xlu0 %2649
          %2651 = vrot.lane.b32.xlu0 %v2247, 64
          %v2652 = vpop.permute.xlu0 %2651
          %2653 = vrot.lane.b32.xlu0 %v2248, 64
          %v2654 = vpop.permute.xlu0 %2653
          %2655 = vrot.lane.b32.xlu0 %v2249, 64
          %v2656 = vpop.permute.xlu0 %2655
          %2657 = vrot.lane.b32.xlu0 %v2250, 64
          %v2658 = vpop.permute.xlu0 %2657
          %2659 = vrot.lane.b32.xlu0 %v2251, 64
          %v2660 = vpop.permute.xlu0 %2659
          %2661 = vrot.lane.b32.xlu0 %v2252, 64
          %v2662 = vpop.permute.xlu0 %2661
          %2663 = vrot.lane.b32.xlu0 %v2253, 64
          %v2664 = vpop.permute.xlu0 %2663
          %2665 = vrot.lane.b32.xlu0 %v2254, 64
          %v2666 = vpop.permute.xlu0 %2665
          %2667 = vrot.lane.b32.xlu0 %v2255, 64
          %v2668 = vpop.permute.xlu0 %2667
          %2669 = vrot.lane.b32.xlu0 %v2256, 64
          %v2670 = vpop.permute.xlu0 %2669
          %2671 = vrot.lane.b32.xlu0 %v2257, 64
          %v2672 = vpop.permute.xlu0 %2671
          %2673 = vrot.lane.b32.xlu0 %v2258, 64
          %v2674 = vpop.permute.xlu0 %2673
          %2739 = vrot.lane.b32.xlu0 %v2259, 96
          %v2740 = vpop.permute.xlu0 %2739
          %2741 = vrot.lane.b32.xlu0 %v2260, 96
          %v2742 = vpop.permute.xlu0 %2741
          %2743 = vrot.lane.b32.xlu0 %v2261, 96
          %v2744 = vpop.permute.xlu0 %2743
          %2745 = vrot.lane.b32.xlu0 %v2262, 96
          %v2746 = vpop.permute.xlu0 %2745
          %2747 = vrot.lane.b32.xlu0 %v2263, 96
          %v2748 = vpop.permute.xlu0 %2747
          %2749 = vrot.lane.b32.xlu0 %v2264, 96
          %v2750 = vpop.permute.xlu0 %2749
          %2751 = vrot.lane.b32.xlu0 %v2265, 96
          %v2752 = vpop.permute.xlu0 %2751
          %2753 = vrot.lane.b32.xlu0 %v2266, 96
          %v2754 = vpop.permute.xlu0 %2753
          %2755 = vrot.lane.b32.xlu0 %v2267, 96
          %v2756 = vpop.permute.xlu0 %2755
          %2757 = vrot.lane.b32.xlu0 %v2268, 96
          %v2758 = vpop.permute.xlu0 %2757
          %2759 = vrot.lane.b32.xlu0 %v2269, 96
          %v2760 = vpop.permute.xlu0 %2759
          %2761 = vrot.lane.b32.xlu0 %v2270, 96
          %v2762 = vpop.permute.xlu0 %2761
          %2763 = vrot.lane.b32.xlu0 %v2271, 96
          %v2764 = vpop.permute.xlu0 %2763
          %2765 = vrot.lane.b32.xlu0 %v2272, 96
          %v2766 = vpop.permute.xlu0 %2765
          %2767 = vrot.lane.b32.xlu0 %v2273, 96
          %v2768 = vpop.permute.xlu0 %2767
          %2769 = vrot.lane.b32.xlu0 %v2274, 96
          %v2770 = vpop.permute.xlu0 %2769
          %2771 = vrot.lane.b32.xlu0 %v2275, 96
          %v2772 = vpop.permute.xlu0 %2771
          %2773 = vrot.lane.b32.xlu0 %v2276, 96
          %v2774 = vpop.permute.xlu0 %2773
          %2775 = vrot.lane.b32.xlu0 %v2277, 96
          %v2776 = vpop.permute.xlu0 %2775
          %2777 = vrot.lane.b32.xlu0 %v2278, 96
          %v2778 = vpop.permute.xlu0 %2777
          %2779 = vrot.lane.b32.xlu0 %v2279, 96
          %v2780 = vpop.permute.xlu0 %2779
          %2781 = vrot.lane.b32.xlu0 %v2280, 96
          %v2782 = vpop.permute.xlu0 %2781
          %2783 = vrot.lane.b32.xlu0 %v2281, 96
          %v2784 = vpop.permute.xlu0 %2783
          %2785 = vrot.lane.b32.xlu0 %v2282, 96
          %v2786 = vpop.permute.xlu0 %2785
          %2787 = vrot.lane.b32.xlu0 %v2283, 96
          %v2788 = vpop.permute.xlu0 %2787
          %2789 = vrot.lane.b32.xlu0 %v2284, 96
          %v2790 = vpop.permute.xlu0 %2789
          %2791 = vrot.lane.b32.xlu0 %v2285, 96
          %v2792 = vpop.permute.xlu0 %2791
          %2793 = vrot.lane.b32.xlu0 %v2286, 96
          %v2794 = vpop.permute.xlu0 %2793
          %2795 = vrot.lane.b32.xlu0 %v2287, 96
          %v2796 = vpop.permute.xlu0 %2795
          %2797 = vrot.lane.b32.xlu0 %v2288, 96
          %v2798 = vpop.permute.xlu0 %2797
          %2799 = vrot.lane.b32.xlu0 %v2289, 96
          %v2800 = vpop.permute.xlu0 %2799
          %2801 = vrot.lane.b32.xlu0 %v2290, 96
          %v2802 = vpop.permute.xlu0 %2801
          %2867 = vrot.lane.b32.xlu0 %v2323, 32
          %v2868 = vpop.permute.xlu0 %2867
          %2869 = vrot.lane.b32.xlu0 %v2324, 32
          %v2870 = vpop.permute.xlu0 %2869
          %2871 = vrot.lane.b32.xlu0 %v2325, 32
          %v2872 = vpop.permute.xlu0 %2871
          %2873 = vrot.lane.b32.xlu0 %v2326, 32
          %v2874 = vpop.permute.xlu0 %2873
          %2875 = vrot.lane.b32.xlu0 %v2327, 32
          %v2876 = vpop.permute.xlu0 %2875
          %2877 = vrot.lane.b32.xlu0 %v2328, 32
          %v2878 = vpop.permute.xlu0 %2877
          %2879 = vrot.lane.b32.xlu0 %v2329, 32
          %v2880 = vpop.permute.xlu0 %2879
          %2881 = vrot.lane.b32.xlu0 %v2330, 32
          %v2882 = vpop.permute.xlu0 %2881
          %2883 = vrot.lane.b32.xlu0 %v2331, 32
          %v2884 = vpop.permute.xlu0 %2883
          %2885 = vrot.lane.b32.xlu0 %v2332, 32
          %v2886 = vpop.permute.xlu0 %2885
          %2887 = vrot.lane.b32.xlu0 %v2333, 32
          %v2888 = vpop.permute.xlu0 %2887
          %2889 = vrot.lane.b32.xlu0 %v2334, 32
          %v2890 = vpop.permute.xlu0 %2889
          %2891 = vrot.lane.b32.xlu0 %v2335, 32
          %v2892 = vpop.permute.xlu0 %2891
          %2893 = vrot.lane.b32.xlu0 %v2336, 32
          %v2894 = vpop.permute.xlu0 %2893
          %2895 = vrot.lane.b32.xlu0 %v2337, 32
          %v2896 = vpop.permute.xlu0 %2895
          %2897 = vrot.lane.b32.xlu0 %v2338, 32
          %v2898 = vpop.permute.xlu0 %2897
          %2899 = vrot.lane.b32.xlu0 %v2339, 32
          %v2900 = vpop.permute.xlu0 %2899
          %2901 = vrot.lane.b32.xlu0 %v2340, 32
          %v2902 = vpop.permute.xlu0 %2901
          %2903 = vrot.lane.b32.xlu0 %v2341, 32
          %v2904 = vpop.permute.xlu0 %2903
          %2905 = vrot.lane.b32.xlu0 %v2342, 32
          %v2906 = vpop.permute.xlu0 %2905
          %2907 = vrot.lane.b32.xlu0 %v2343, 32
          %v2908 = vpop.permute.xlu0 %2907
          %2909 = vrot.lane.b32.xlu0 %v2344, 32
          %v2910 = vpop.permute.xlu0 %2909
          %2911 = vrot.lane.b32.xlu0 %v2345, 32
          %v2912 = vpop.permute.xlu0 %2911
          %2913 = vrot.lane.b32.xlu0 %v2346, 32
          %v2914 = vpop.permute.xlu0 %2913
          %2915 = vrot.lane.b32.xlu0 %v2347, 32
          %v2916 = vpop.permute.xlu0 %2915
          %2917 = vrot.lane.b32.xlu0 %v2348, 32
          %v2918 = vpop.permute.xlu0 %2917
          %2919 = vrot.lane.b32.xlu0 %v2349, 32
          %v2920 = vpop.permute.xlu0 %2919
          %2921 = vrot.lane.b32.xlu0 %v2350, 32
          %v2922 = vpop.permute.xlu0 %2921
          %2923 = vrot.lane.b32.xlu0 %v2351, 32
          %v2924 = vpop.permute.xlu0 %2923
          %2925 = vrot.lane.b32.xlu0 %v2352, 32
          %v2926 = vpop.permute.xlu0 %2925
          %2927 = vrot.lane.b32.xlu0 %v2353, 32
          %v2928 = vpop.permute.xlu0 %2927
          %2929 = vrot.lane.b32.xlu0 %v2354, 32
          %v2930 = vpop.permute.xlu0 %2929
          %2995 = vrot.lane.b32.xlu0 %v2355, 64
          %v2996 = vpop.permute.xlu0 %2995
          %2997 = vrot.lane.b32.xlu0 %v2356, 64
          %v2998 = vpop.permute.xlu0 %2997
          %2999 = vrot.lane.b32.xlu0 %v2357, 64
          %v3000 = vpop.permute.xlu0 %2999
          %3001 = vrot.lane.b32.xlu0 %v2358, 64
          %v3002 = vpop.permute.xlu0 %3001
          %3003 = vrot.lane.b32.xlu0 %v2359, 64
          %v3004 = vpop.permute.xlu0 %3003
          %3005 = vrot.lane.b32.xlu0 %v2360, 64
          %v3006 = vpop.permute.xlu0 %3005
          %3007 = vrot.lane.b32.xlu0 %v2361, 64
          %v3008 = vpop.permute.xlu0 %3007
          %3009 = vrot.lane.b32.xlu0 %v2362, 64
          %v3010 = vpop.permute.xlu0 %3009
          %3011 = vrot.lane.b32.xlu0 %v2363, 64
          %v3012 = vpop.permute.xlu0 %3011
          %3013 = vrot.lane.b32.xlu0 %v2364, 64
          %v3014 = vpop.permute.xlu0 %3013
          %3015 = vrot.lane.b32.xlu0 %v2365, 64
          %v3016 = vpop.permute.xlu0 %3015
          %3017 = vrot.lane.b32.xlu0 %v2366, 64
          %v3018 = vpop.permute.xlu0 %3017
          %3019 = vrot.lane.b32.xlu0 %v2367, 64
          %v3020 = vpop.permute.xlu0 %3019
          %3021 = vrot.lane.b32.xlu0 %v2368, 64
          %v3022 = vpop.permute.xlu0 %3021
          %3023 = vrot.lane.b32.xlu0 %v2369, 64
          %v3024 = vpop.permute.xlu0 %3023
          %3025 = vrot.lane.b32.xlu0 %v2370, 64
          %v3026 = vpop.permute.xlu0 %3025
          %3027 = vrot.lane.b32.xlu0 %v2371, 64
          %v3028 = vpop.permute.xlu0 %3027
          %3029 = vrot.lane.b32.xlu0 %v2372, 64
          %v3030 = vpop.permute.xlu0 %3029
          %3031 = vrot.lane.b32.xlu0 %v2373, 64
          %v3032 = vpop.permute.xlu0 %3031
          %3033 = vrot.lane.b32.xlu0 %v2374, 64
          %v3034 = vpop.permute.xlu0 %3033
          %3035 = vrot.lane.b32.xlu0 %v2375, 64
          %v3036 = vpop.permute.xlu0 %3035
          %3037 = vrot.lane.b32.xlu0 %v2376, 64
          %v3038 = vpop.permute.xlu0 %3037
          %3039 = vrot.lane.b32.xlu0 %v2377, 64
          %v3040 = vpop.permute.xlu0 %3039
          %3041 = vrot.lane.b32.xlu0 %v2378, 64
          %v3042 = vpop.permute.xlu0 %3041
          %3043 = vrot.lane.b32.xlu0 %v2379, 64
          %v3044 = vpop.permute.xlu0 %3043
          %3045 = vrot.lane.b32.xlu0 %v2380, 64
          %v3046 = vpop.permute.xlu0 %3045
          %3047 = vrot.lane.b32.xlu0 %v2381, 64
          %v3048 = vpop.permute.xlu0 %3047
          %3049 = vrot.lane.b32.xlu0 %v2382, 64
          %v3050 = vpop.permute.xlu0 %3049
          %3051 = vrot.lane.b32.xlu0 %v2383, 64
          %v3052 = vpop.permute.xlu0 %3051
          %3053 = vrot.lane.b32.xlu0 %v2384, 64
          %v3054 = vpop.permute.xlu0 %3053
          %3055 = vrot.lane.b32.xlu0 %v2385, 64
          %v3056 = vpop.permute.xlu0 %3055
          %3057 = vrot.lane.b32.xlu0 %v2386, 64
          %v3058 = vpop.permute.xlu0 %3057
          %3123 = vrot.lane.b32.xlu0 %v2387, 96
          %v3124 = vpop.permute.xlu0 %3123
          %3125 = vrot.lane.b32.xlu0 %v2388, 96
          %v3126 = vpop.permute.xlu0 %3125
          %3127 = vrot.lane.b32.xlu0 %v2389, 96
          %v3128 = vpop.permute.xlu0 %3127
          %3129 = vrot.lane.b32.xlu0 %v2390, 96
          %v3130 = vpop.permute.xlu0 %3129
          %3131 = vrot.lane.b32.xlu0 %v2391, 96
          %v3132 = vpop.permute.xlu0 %3131
          %3133 = vrot.lane.b32.xlu0 %v2392, 96
          %v3134 = vpop.permute.xlu0 %3133
          %3135 = vrot.lane.b32.xlu0 %v2393, 96
          %v3136 = vpop.permute.xlu0 %3135
          %3137 = vrot.lane.b32.xlu0 %v2394, 96
          %v3138 = vpop.permute.xlu0 %3137
          %3139 = vrot.lane.b32.xlu0 %v2395, 96
          %v3140 = vpop.permute.xlu0 %3139
          %3141 = vrot.lane.b32.xlu0 %v2396, 96
          %v3142 = vpop.permute.xlu0 %3141
          %3143 = vrot.lane.b32.xlu0 %v2397, 96
          %v3144 = vpop.permute.xlu0 %3143
          %3145 = vrot.lane.b32.xlu0 %v2398, 96
          %v3146 = vpop.permute.xlu0 %3145
          %3147 = vrot.lane.b32.xlu0 %v2399, 96
          %v3148 = vpop.permute.xlu0 %3147
          %3149 = vrot.lane.b32.xlu0 %v2400, 96
          %v3150 = vpop.permute.xlu0 %3149
          %3151 = vrot.lane.b32.xlu0 %v2401, 96
          %v3152 = vpop.permute.xlu0 %3151
          %3153 = vrot.lane.b32.xlu0 %v2402, 96
          %v3154 = vpop.permute.xlu0 %3153
          %3155 = vrot.lane.b32.xlu0 %v2403, 96
          %v3156 = vpop.permute.xlu0 %3155
          %3157 = vrot.lane.b32.xlu0 %v2404, 96
          %v3158 = vpop.permute.xlu0 %3157
          %3159 = vrot.lane.b32.xlu0 %v2405, 96
          %v3160 = vpop.permute.xlu0 %3159
          %3161 = vrot.lane.b32.xlu0 %v2406, 96
          %v3162 = vpop.permute.xlu0 %3161
          %3163 = vrot.lane.b32.xlu0 %v2407, 96
          %v3164 = vpop.permute.xlu0 %3163
          %3165 = vrot.lane.b32.xlu0 %v2408, 96
          %v3166 = vpop.permute.xlu0 %3165
          %3167 = vrot.lane.b32.xlu0 %v2409, 96
          %v3168 = vpop.permute.xlu0 %3167
          %3169 = vrot.lane.b32.xlu0 %v2410, 96
          %v3170 = vpop.permute.xlu0 %3169
          %3171 = vrot.lane.b32.xlu0 %v2411, 96
          %v3172 = vpop.permute.xlu0 %3171
          %3173 = vrot.lane.b32.xlu0 %v2412, 96
          %v3174 = vpop.permute.xlu0 %3173
          %3175 = vrot.lane.b32.xlu0 %v2413, 96
          %v3176 = vpop.permute.xlu0 %3175
          %3177 = vrot.lane.b32.xlu0 %v2414, 96
          %v3178 = vpop.permute.xlu0 %3177
          %3179 = vrot.lane.b32.xlu0 %v2415, 96
          %v3180 = vpop.permute.xlu0 %3179
          %3181 = vrot.lane.b32.xlu0 %v2416, 96
          %v3182 = vpop.permute.xlu0 %3181
          %3183 = vrot.lane.b32.xlu0 %v2417, 96
          %v3184 = vpop.permute.xlu0 %3183
          %3185 = vrot.lane.b32.xlu0 %v2418, 96
          %v3186 = vpop.permute.xlu0 %3185
          %v3219 = vsel %vm169, %v2163, %v2484
          %v3220 = vsel %vm169, %v2164, %v2486
          %v3221 = vsel %vm169, %v2165, %v2488
          %v3222 = vsel %vm169, %v2166, %v2490
          %v3223 = vsel %vm169, %v2167, %v2492
          %v3224 = vsel %vm169, %v2168, %v2494
          %v3225 = vsel %vm169, %v2169, %v2496
          %v3226 = vsel %vm169, %v2170, %v2498
          %v3227 = vsel %vm169, %v2171, %v2500
          %v3228 = vsel %vm169, %v2172, %v2502
          %v3229 = vsel %vm169, %v2173, %v2504
          %v3230 = vsel %vm169, %v2174, %v2506
          %v3231 = vsel %vm169, %v2175, %v2508
          %v3232 = vsel %vm169, %v2176, %v2510
          %v3233 = vsel %vm169, %v2177, %v2512
          %v3234 = vsel %vm169, %v2178, %v2514
          %v3235 = vsel %vm169, %v2179, %v2516
          %v3236 = vsel %vm169, %v2180, %v2518
          %v3237 = vsel %vm169, %v2181, %v2520
          %v3238 = vsel %vm169, %v2182, %v2522
          %v3239 = vsel %vm169, %v2183, %v2524
          %v3240 = vsel %vm169, %v2184, %v2526
          %v3241 = vsel %vm169, %v2185, %v2528
          %v3242 = vsel %vm169, %v2186, %v2530
          %v3243 = vsel %vm169, %v2187, %v2532
          %v3244 = vsel %vm169, %v2188, %v2534
          %v3245 = vsel %vm169, %v2189, %v2536
          %v3246 = vsel %vm169, %v2190, %v2538
          %v3247 = vsel %vm169, %v2191, %v2540
          %v3248 = vsel %vm169, %v2192, %v2542
          %v3249 = vsel %vm169, %v2193, %v2544
          %v3250 = vsel %vm169, %v2194, %v2546
          %v3251 = vsel %vm1458, %v3219, %v2612
          %v3252 = vsel %vm1458, %v3220, %v2614
          %v3253 = vsel %vm1458, %v3221, %v2616
          %v3254 = vsel %vm1458, %v3222, %v2618
          %v3255 = vsel %vm1458, %v3223, %v2620
          %v3256 = vsel %vm1458, %v3224, %v2622
          %v3257 = vsel %vm1458, %v3225, %v2624
          %v3258 = vsel %vm1458, %v3226, %v2626
          %v3259 = vsel %vm1458, %v3227, %v2628
          %v3260 = vsel %vm1458, %v3228, %v2630
          %v3261 = vsel %vm1458, %v3229, %v2632
          %v3262 = vsel %vm1458, %v3230, %v2634
          %v3263 = vsel %vm1458, %v3231, %v2636
          %v3264 = vsel %vm1458, %v3232, %v2638
          %v3265 = vsel %vm1458, %v3233, %v2640
          %v3266 = vsel %vm1458, %v3234, %v2642
          %v3267 = vsel %vm1458, %v3235, %v2644
          %v3268 = vsel %vm1458, %v3236, %v2646
          %v3269 = vsel %vm1458, %v3237, %v2648
          %v3270 = vsel %vm1458, %v3238, %v2650
          %v3271 = vsel %vm1458, %v3239, %v2652
          %v3272 = vsel %vm1458, %v3240, %v2654
          %v3273 = vsel %vm1458, %v3241, %v2656
          %v3274 = vsel %vm1458, %v3242, %v2658
          %v3275 = vsel %vm1458, %v3243, %v2660
          %v3276 = vsel %vm1458, %v3244, %v2662
          %v3277 = vsel %vm1458, %v3245, %v2664
          %v3278 = vsel %vm1458, %v3246, %v2666
          %v3279 = vsel %vm1458, %v3247, %v2668
          %v3280 = vsel %vm1458, %v3248, %v2670
          %v3281 = vsel %vm1458, %v3249, %v2672
          %v3282 = vsel %vm1458, %v3250, %v2674
          %v3283 = vsel %vm1491, %v3251, %v2740
          %v3284 = vsel %vm1491, %v3252, %v2742
          %v3285 = vsel %vm1491, %v3253, %v2744
          %v3286 = vsel %vm1491, %v3254, %v2746
          %v3287 = vsel %vm1491, %v3255, %v2748
          %v3288 = vsel %vm1491, %v3256, %v2750
          %v3289 = vsel %vm1491, %v3257, %v2752
          %v3290 = vsel %vm1491, %v3258, %v2754
          %v3291 = vsel %vm1491, %v3259, %v2756
          %v3292 = vsel %vm1491, %v3260, %v2758
          %v3293 = vsel %vm1491, %v3261, %v2760
          %v3294 = vsel %vm1491, %v3262, %v2762
          %v3295 = vsel %vm1491, %v3263, %v2764
          %v3296 = vsel %vm1491, %v3264, %v2766
          %v3297 = vsel %vm1491, %v3265, %v2768
          %v3298 = vsel %vm1491, %v3266, %v2770
          %v3299 = vsel %vm1491, %v3267, %v2772
          %v3300 = vsel %vm1491, %v3268, %v2774
          %v3301 = vsel %vm1491, %v3269, %v2776
          %v3302 = vsel %vm1491, %v3270, %v2778
          %v3303 = vsel %vm1491, %v3271, %v2780
          %v3304 = vsel %vm1491, %v3272, %v2782
          %v3305 = vsel %vm1491, %v3273, %v2784
          %v3306 = vsel %vm1491, %v3274, %v2786
          %v3307 = vsel %vm1491, %v3275, %v2788
          %v3308 = vsel %vm1491, %v3276, %v2790
          %v3309 = vsel %vm1491, %v3277, %v2792
          %v3310 = vsel %vm1491, %v3278, %v2794
          %v3311 = vsel %vm1491, %v3279, %v2796
          %v3312 = vsel %vm1491, %v3280, %v2798
          %v3313 = vsel %vm1491, %v3281, %v2800
          %v3314 = vsel %vm1491, %v3282, %v2802
          %v3315 = vsel %vm169, %v2291, %v2868
          %v3316 = vsel %vm169, %v2292, %v2870
          %v3317 = vsel %vm169, %v2293, %v2872
          %v3318 = vsel %vm169, %v2294, %v2874
          %v3319 = vsel %vm169, %v2295, %v2876
          %v3320 = vsel %vm169, %v2296, %v2878
          %v3321 = vsel %vm169, %v2297, %v2880
          %v3322 = vsel %vm169, %v2298, %v2882
          %v3323 = vsel %vm169, %v2299, %v2884
          %v3324 = vsel %vm169, %v2300, %v2886
          %v3325 = vsel %vm169, %v2301, %v2888
          %v3326 = vsel %vm169, %v2302, %v2890
          %v3327 = vsel %vm169, %v2303, %v2892
          %v3328 = vsel %vm169, %v2304, %v2894
          %v3329 = vsel %vm169, %v2305, %v2896
          %v3330 = vsel %vm169, %v2306, %v2898
          %v3331 = vsel %vm169, %v2307, %v2900
          %v3332 = vsel %vm169, %v2308, %v2902
          %v3333 = vsel %vm169, %v2309, %v2904
          %v3334 = vsel %vm169, %v2310, %v2906
          %v3335 = vsel %vm169, %v2311, %v2908
          %v3336 = vsel %vm169, %v2312, %v2910
          %v3337 = vsel %vm169, %v2313, %v2912
          %v3338 = vsel %vm169, %v2314, %v2914
          %v3339 = vsel %vm169, %v2315, %v2916
          %v3340 = vsel %vm169, %v2316, %v2918
          %v3341 = vsel %vm169, %v2317, %v2920
          %v3342 = vsel %vm169, %v2318, %v2922
          %v3343 = vsel %vm169, %v2319, %v2924
          %v3344 = vsel %vm169, %v2320, %v2926
          %v3345 = vsel %vm169, %v2321, %v2928
          %v3346 = vsel %vm169, %v2322, %v2930
          %v3347 = vsel %vm1458, %v3315, %v2996
          %v3348 = vsel %vm1458, %v3316, %v2998
          %v3349 = vsel %vm1458, %v3317, %v3000
          %v3350 = vsel %vm1458, %v3318, %v3002
          %v3351 = vsel %vm1458, %v3319, %v3004
          %v3352 = vsel %vm1458, %v3320, %v3006
          %v3353 = vsel %vm1458, %v3321, %v3008
          %v3354 = vsel %vm1458, %v3322, %v3010
          %v3355 = vsel %vm1458, %v3323, %v3012
          %v3356 = vsel %vm1458, %v3324, %v3014
          %v3357 = vsel %vm1458, %v3325, %v3016
          %v3358 = vsel %vm1458, %v3326, %v3018
          %v3359 = vsel %vm1458, %v3327, %v3020
          %v3360 = vsel %vm1458, %v3328, %v3022
          %v3361 = vsel %vm1458, %v3329, %v3024
          %v3362 = vsel %vm1458, %v3330, %v3026
          %v3363 = vsel %vm1458, %v3331, %v3028
          %v3364 = vsel %vm1458, %v3332, %v3030
          %v3365 = vsel %vm1458, %v3333, %v3032
          %v3366 = vsel %vm1458, %v3334, %v3034
          %v3367 = vsel %vm1458, %v3335, %v3036
          %v3368 = vsel %vm1458, %v3336, %v3038
          %v3369 = vsel %vm1458, %v3337, %v3040
          %v3370 = vsel %vm1458, %v3338, %v3042
          %v3371 = vsel %vm1458, %v3339, %v3044
          %v3372 = vsel %vm1458, %v3340, %v3046
          %v3373 = vsel %vm1458, %v3341, %v3048
          %v3374 = vsel %vm1458, %v3342, %v3050
          %v3375 = vsel %vm1458, %v3343, %v3052
          %v3376 = vsel %vm1458, %v3344, %v3054
          %v3377 = vsel %vm1458, %v3345, %v3056
          %v3378 = vsel %vm1458, %v3346, %v3058
          %v3379 = vsel %vm1491, %v3347, %v3124
          %v3380 = vsel %vm1491, %v3348, %v3126
          %v3381 = vsel %vm1491, %v3349, %v3128
          %v3382 = vsel %vm1491, %v3350, %v3130
          %v3383 = vsel %vm1491, %v3351, %v3132
          %v3384 = vsel %vm1491, %v3352, %v3134
          %v3385 = vsel %vm1491, %v3353, %v3136
          %v3386 = vsel %vm1491, %v3354, %v3138
          %v3387 = vsel %vm1491, %v3355, %v3140
          %v3388 = vsel %vm1491, %v3356, %v3142
          %v3389 = vsel %vm1491, %v3357, %v3144
          %v3390 = vsel %vm1491, %v3358, %v3146
          %v3391 = vsel %vm1491, %v3359, %v3148
          %v3392 = vsel %vm1491, %v3360, %v3150
          %v3393 = vsel %vm1491, %v3361, %v3152
          %v3394 = vsel %vm1491, %v3362, %v3154
          %v3395 = vsel %vm1491, %v3363, %v3156
          %v3396 = vsel %vm1491, %v3364, %v3158
          %v3397 = vsel %vm1491, %v3365, %v3160
          %v3398 = vsel %vm1491, %v3366, %v3162
          %v3399 = vsel %vm1491, %v3367, %v3164
          %v3400 = vsel %vm1491, %v3368, %v3166
          %v3401 = vsel %vm1491, %v3369, %v3168
          %v3402 = vsel %vm1491, %v3370, %v3170
          %v3403 = vsel %vm1491, %v3371, %v3172
          %v3404 = vsel %vm1491, %v3372, %v3174
          %v3405 = vsel %vm1491, %v3373, %v3176
          %v3406 = vsel %vm1491, %v3374, %v3178
          %v3407 = vsel %vm1491, %v3375, %v3180
          %v3408 = vsel %vm1491, %v3376, %v3182
          %v3409 = vsel %vm1491, %v3377, %v3184
          %v3410 = vsel %vm1491, %v3378, %v3186
          %v3412 = vperm.slane %v2130, 0
          %v3415 = vsel %vm169, %v2419, 0
          %v3418 = vsel %vm169, %v2420, 0
          %v3421 = vsel %vm169, %v2421, 0
          %v3424 = vsel %vm169, %v2422, 0
          %v3427 = vsel %vm169, %v2423, 0
          %v3430 = vsel %vm169, %v2424, 0
          %v3433 = vsel %vm169, %v2425, 0
          %v3436 = vsel %vm169, %v2426, 0
          %v3439 = vsel %vm169, %v2427, 0
          %v3442 = vsel %vm169, %v2428, 0
          %v3445 = vsel %vm169, %v2429, 0
          %v3448 = vsel %vm169, %v2430, 0
          %v3451 = vsel %vm169, %v2431, 0
          %v3454 = vsel %vm169, %v2432, 0
          %v3457 = vsel %vm169, %v2433, 0
          %v3460 = vsel %vm169, %v2434, 0
          %v3463 = vsel %vm169, %v2435, 0
          %v3466 = vsel %vm169, %v2436, 0
          %v3469 = vsel %vm169, %v2437, 0
          %v3472 = vsel %vm169, %v2438, 0
          %v3475 = vsel %vm169, %v2439, 0
          %v3478 = vsel %vm169, %v2440, 0
          %v3481 = vsel %vm169, %v2441, 0
          %v3484 = vsel %vm169, %v2442, 0
          %v3487 = vsel %vm169, %v2443, 0
          %v3490 = vsel %vm169, %v2444, 0
          %v3493 = vsel %vm169, %v2445, 0
          %v3496 = vsel %vm169, %v2446, 0
          %v3499 = vsel %vm169, %v2447, 0
          %v3502 = vsel %vm169, %v2448, 0
          %v3505 = vsel %vm169, %v2449, 0
          %v3508 = vsel %vm169, %v2450, 0
          %3510 = vmatpush.msra.mxu0 %v2108
          %3511 = vmatpush.msra.mxu0 %v2107
          %3512 = vmatpush.msra.mxu0 %v2106
          %3513 = vmatpush.msra.mxu0 %v2105
          %3514 = vmatpush.msra.mxu0 %v2104
          %3515 = vmatpush.msra.mxu0 %v2103
          %3516 = vmatpush.msra.mxu0 %v2102
          %3517 = vmatpush.msra.mxu0 %v2101
          %3518 = vmatpush.msra.mxu0 %v2100
          %3519 = vmatpush.msra.mxu0 %v2099
          %3520 = vmatpush.msra.mxu0 %v2098
          %3521 = vmatpush.msra.mxu0 %v2097
          %3522 = vmatpush.msra.mxu0 %v2096
          %3523 = vmatpush.msra.mxu0 %v2095
          %3524 = vmatpush.msra.mxu0 %v2094
          %3525 = vmatpush.msra.mxu0 %v2093
          %3526 = vmatmul.f32.gmra.mxu0 %v3283
          %v3527 = vpop.f32.mrf.mxu0
          %v3528 = vadd.f32 %v3412, %v3527
          %3529 = vmatmul.f32.gmra.mxu0 %v3284
          %v3530 = vpop.f32.mrf.mxu0
          %v3531 = vadd.f32 %v3412, %v3530
          %3532 = vmatmul.f32.gmra.mxu0 %v3285
          %v3533 = vpop.f32.mrf.mxu0
          %v3534 = vadd.f32 %v3412, %v3533
          %3535 = vmatmul.f32.gmra.mxu0 %v3286
          %v3536 = vpop.f32.mrf.mxu0
          %v3537 = vadd.f32 %v3412, %v3536
          %3538 = vmatmul.f32.gmra.mxu0 %v3287
          %v3539 = vpop.f32.mrf.mxu0
          %v3540 = vadd.f32 %v3412, %v3539
          %3541 = vmatmul.f32.gmra.mxu0 %v3288
          %v3542 = vpop.f32.mrf.mxu0
          %v3543 = vadd.f32 %v3412, %v3542
          %3544 = vmatmul.f32.gmra.mxu0 %v3289
          %v3545 = vpop.f32.mrf.mxu0
          %v3546 = vadd.f32 %v3412, %v3545
          %3547 = vmatmul.f32.gmra.mxu0 %v3290
          %v3548 = vpop.f32.mrf.mxu0
          %v3549 = vadd.f32 %v3412, %v3548
          %3550 = vmatmul.f32.gmra.mxu0 %v3291
          %v3551 = vpop.f32.mrf.mxu0
          %v3552 = vadd.f32 %v3412, %v3551
          %3553 = vmatmul.f32.gmra.mxu0 %v3292
          %v3554 = vpop.f32.mrf.mxu0
          %v3555 = vadd.f32 %v3412, %v3554
          %3556 = vmatmul.f32.gmra.mxu0 %v3293
          %v3557 = vpop.f32.mrf.mxu0
          %v3558 = vadd.f32 %v3412, %v3557
          %3559 = vmatmul.f32.gmra.mxu0 %v3294
          %v3560 = vpop.f32.mrf.mxu0
          %v3561 = vadd.f32 %v3412, %v3560
          %3562 = vmatmul.f32.gmra.mxu0 %v3295
          %v3563 = vpop.f32.mrf.mxu0
          %v3564 = vadd.f32 %v3412, %v3563
          %3565 = vmatmul.f32.gmra.mxu0 %v3296
          %v3566 = vpop.f32.mrf.mxu0
          %v3567 = vadd.f32 %v3412, %v3566
          %3568 = vmatmul.f32.gmra.mxu0 %v3297
          %v3569 = vpop.f32.mrf.mxu0
          %v3570 = vadd.f32 %v3412, %v3569
          %3571 = vmatmul.f32.gmra.mxu0 %v3298
          %v3572 = vpop.f32.mrf.mxu0
          %v3573 = vadd.f32 %v3412, %v3572
          %3574 = vmatmul.f32.gmra.mxu0 %v3299
          %v3575 = vpop.f32.mrf.mxu0
          %v3576 = vadd.f32 %v3412, %v3575
          %3577 = vmatmul.f32.gmra.mxu0 %v3300
          %v3578 = vpop.f32.mrf.mxu0
          %v3579 = vadd.f32 %v3412, %v3578
          %3580 = vmatmul.f32.gmra.mxu0 %v3301
          %v3581 = vpop.f32.mrf.mxu0
          %v3582 = vadd.f32 %v3412, %v3581
          %3583 = vmatmul.f32.gmra.mxu0 %v3302
          %v3584 = vpop.f32.mrf.mxu0
          %v3585 = vadd.f32 %v3412, %v3584
          %3586 = vmatmul.f32.gmra.mxu0 %v3303
          %v3587 = vpop.f32.mrf.mxu0
          %v3588 = vadd.f32 %v3412, %v3587
          %3589 = vmatmul.f32.gmra.mxu0 %v3304
          %v3590 = vpop.f32.mrf.mxu0
          %v3591 = vadd.f32 %v3412, %v3590
          %3592 = vmatmul.f32.gmra.mxu0 %v3305
          %v3593 = vpop.f32.mrf.mxu0
          %v3594 = vadd.f32 %v3412, %v3593
          %3595 = vmatmul.f32.gmra.mxu0 %v3306
          %v3596 = vpop.f32.mrf.mxu0
          %v3597 = vadd.f32 %v3412, %v3596
          %3598 = vmatmul.f32.gmra.mxu0 %v3307
          %v3599 = vpop.f32.mrf.mxu0
          %v3600 = vadd.f32 %v3412, %v3599
          %3601 = vmatmul.f32.gmra.mxu0 %v3308
          %v3602 = vpop.f32.mrf.mxu0
          %v3603 = vadd.f32 %v3412, %v3602
          %3604 = vmatmul.f32.gmra.mxu0 %v3309
          %v3605 = vpop.f32.mrf.mxu0
          %v3606 = vadd.f32 %v3412, %v3605
          %3607 = vmatmul.f32.gmra.mxu0 %v3310
          %v3608 = vpop.f32.mrf.mxu0
          %v3609 = vadd.f32 %v3412, %v3608
          %3610 = vmatmul.f32.gmra.mxu0 %v3311
          %v3611 = vpop.f32.mrf.mxu0
          %v3612 = vadd.f32 %v3412, %v3611
          %3613 = vmatmul.f32.gmra.mxu0 %v3312
          %v3614 = vpop.f32.mrf.mxu0
          %v3615 = vadd.f32 %v3412, %v3614
          %3616 = vmatmul.f32.gmra.mxu0 %v3313
          %v3617 = vpop.f32.mrf.mxu0
          %v3618 = vadd.f32 %v3412, %v3617
          %3619 = vmatmul.f32.gmra.mxu0 %v3314
          %v3620 = vpop.f32.mrf.mxu0
          %v3621 = vadd.f32 %v3412, %v3620
          %3622 = vdwg.mxu0
          %3623 = vmatpush.msra.mxu0 %v2124
          %3624 = vmatpush.msra.mxu0 %v2123
          %3625 = vmatpush.msra.mxu0 %v2122
          %3626 = vmatpush.msra.mxu0 %v2121
          %3627 = vmatpush.msra.mxu0 %v2120
          %3628 = vmatpush.msra.mxu0 %v2119
          %3629 = vmatpush.msra.mxu0 %v2118
          %3630 = vmatpush.msra.mxu0 %v2117
          %3631 = vmatpush.msra.mxu0 %v2116
          %3632 = vmatpush.msra.mxu0 %v2115
          %3633 = vmatpush.msra.mxu0 %v2114
          %3634 = vmatpush.msra.mxu0 %v2113
          %3635 = vmatpush.msra.mxu0 %v2112
          %3636 = vmatpush.msra.mxu0 %v2111
          %3637 = vmatpush.msra.mxu0 %v2110
          %3638 = vmatpush.msra.mxu0 %v2109
          %3639 = vmatmul.f32.gmra.mxu0 %v3379
          %v3640 = vpop.f32.mrf.mxu0
          %v3641 = vadd.f32 %v3528, %v3640
          %3642 = vmatmul.f32.gmra.mxu0 %v3380
          %v3643 = vpop.f32.mrf.mxu0
          %v3644 = vadd.f32 %v3531, %v3643
          %3645 = vmatmul.f32.gmra.mxu0 %v3381
          %v3646 = vpop.f32.mrf.mxu0
          %v3647 = vadd.f32 %v3534, %v3646
          %3648 = vmatmul.f32.gmra.mxu0 %v3382
          %v3649 = vpop.f32.mrf.mxu0
          %v3650 = vadd.f32 %v3537, %v3649
          %3651 = vmatmul.f32.gmra.mxu0 %v3383
          %v3652 = vpop.f32.mrf.mxu0
          %v3653 = vadd.f32 %v3540, %v3652
          %3654 = vmatmul.f32.gmra.mxu0 %v3384
          %v3655 = vpop.f32.mrf.mxu0
          %v3656 = vadd.f32 %v3543, %v3655
          %3657 = vmatmul.f32.gmra.mxu0 %v3385
          %v3658 = vpop.f32.mrf.mxu0
          %v3659 = vadd.f32 %v3546, %v3658
          %3660 = vmatmul.f32.gmra.mxu0 %v3386
          %v3661 = vpop.f32.mrf.mxu0
          %v3662 = vadd.f32 %v3549, %v3661
          %3663 = vmatmul.f32.gmra.mxu0 %v3387
          %v3664 = vpop.f32.mrf.mxu0
          %v3665 = vadd.f32 %v3552, %v3664
          %3666 = vmatmul.f32.gmra.mxu0 %v3388
          %v3667 = vpop.f32.mrf.mxu0
          %v3668 = vadd.f32 %v3555, %v3667
          %3669 = vmatmul.f32.gmra.mxu0 %v3389
          %v3670 = vpop.f32.mrf.mxu0
          %v3671 = vadd.f32 %v3558, %v3670
          %3672 = vmatmul.f32.gmra.mxu0 %v3390
          %v3673 = vpop.f32.mrf.mxu0
          %v3674 = vadd.f32 %v3561, %v3673
          %3675 = vmatmul.f32.gmra.mxu0 %v3391
          %v3676 = vpop.f32.mrf.mxu0
          %v3677 = vadd.f32 %v3564, %v3676
          %3678 = vmatmul.f32.gmra.mxu0 %v3392
          %v3679 = vpop.f32.mrf.mxu0
          %v3680 = vadd.f32 %v3567, %v3679
          %3681 = vmatmul.f32.gmra.mxu0 %v3393
          %v3682 = vpop.f32.mrf.mxu0
          %v3683 = vadd.f32 %v3570, %v3682
          %3684 = vmatmul.f32.gmra.mxu0 %v3394
          %v3685 = vpop.f32.mrf.mxu0
          %v3686 = vadd.f32 %v3573, %v3685
          %3687 = vmatmul.f32.gmra.mxu0 %v3395
          %v3688 = vpop.f32.mrf.mxu0
          %v3689 = vadd.f32 %v3576, %v3688
          %3690 = vmatmul.f32.gmra.mxu0 %v3396
          %v3691 = vpop.f32.mrf.mxu0
          %v3692 = vadd.f32 %v3579, %v3691
          %3693 = vmatmul.f32.gmra.mxu0 %v3397
          %v3694 = vpop.f32.mrf.mxu0
          %v3695 = vadd.f32 %v3582, %v3694
          %3696 = vmatmul.f32.gmra.mxu0 %v3398
          %v3697 = vpop.f32.mrf.mxu0
          %v3698 = vadd.f32 %v3585, %v3697
          %3699 = vmatmul.f32.gmra.mxu0 %v3399
          %v3700 = vpop.f32.mrf.mxu0
          %v3701 = vadd.f32 %v3588, %v3700
          %3702 = vmatmul.f32.gmra.mxu0 %v3400
          %v3703 = vpop.f32.mrf.mxu0
          %v3704 = vadd.f32 %v3591, %v3703
          %3705 = vmatmul.f32.gmra.mxu0 %v3401
          %v3706 = vpop.f32.mrf.mxu0
          %v3707 = vadd.f32 %v3594, %v3706
          %3708 = vmatmul.f32.gmra.mxu0 %v3402
          %v3709 = vpop.f32.mrf.mxu0
          %v3710 = vadd.f32 %v3597, %v3709
          %3711 = vmatmul.f32.gmra.mxu0 %v3403
          %v3712 = vpop.f32.mrf.mxu0
          %v3713 = vadd.f32 %v3600, %v3712
          %3714 = vmatmul.f32.gmra.mxu0 %v3404
          %v3715 = vpop.f32.mrf.mxu0
          %v3716 = vadd.f32 %v3603, %v3715
          %3717 = vmatmul.f32.gmra.mxu0 %v3405
          %v3718 = vpop.f32.mrf.mxu0
          %v3719 = vadd.f32 %v3606, %v3718
          %3720 = vmatmul.f32.gmra.mxu0 %v3406
          %v3721 = vpop.f32.mrf.mxu0
          %v3722 = vadd.f32 %v3609, %v3721
          %3723 = vmatmul.f32.gmra.mxu0 %v3407
          %v3724 = vpop.f32.mrf.mxu0
          %v3725 = vadd.f32 %v3612, %v3724
          %3726 = vmatmul.f32.gmra.mxu0 %v3408
          %v3727 = vpop.f32.mrf.mxu0
          %v3728 = vadd.f32 %v3615, %v3727
          %3729 = vmatmul.f32.gmra.mxu0 %v3409
          %v3730 = vpop.f32.mrf.mxu0
          %v3731 = vadd.f32 %v3618, %v3730
          %3732 = vmatmul.f32.gmra.mxu0 %v3410
          %v3733 = vpop.f32.mrf.mxu0
          %v3734 = vadd.f32 %v3621, %v3733
          %3735 = vdwg.mxu0
          %3736 = vmatpush.msra.mxu0 0.0
          %3737 = vmatpush.msra.mxu0 0.0
          %3738 = vmatpush.msra.mxu0 0.0
          %3739 = vmatpush.msra.mxu0 0.0
          %3740 = vmatpush.msra.mxu0 0.0
          %3741 = vmatpush.msra.mxu0 0.0
          %3742 = vmatpush.msra.mxu0 0.0
          %3743 = vmatpush.msra.mxu0 0.0
          %3744 = vmatpush.msra.mxu0 0.0
          %3745 = vmatpush.msra.mxu0 0.0
          %3746 = vmatpush.msra.mxu0 0.0
          %3747 = vmatpush.msra.mxu0 0.0
          %3748 = vmatpush.msra.mxu0 %v2128
          %3749 = vmatpush.msra.mxu0 %v2127
          %3750 = vmatpush.msra.mxu0 %v2126
          %3751 = vmatpush.msra.mxu0 %v2125
          %3752 = vmatmul.f32.gmra.mxu0 %v3415
          %v3753 = vpop.f32.mrf.mxu0
          %v3754 = vadd.f32 %v3641, %v3753
          %3755 = vmatmul.f32.gmra.mxu0 %v3418
          %v3756 = vpop.f32.mrf.mxu0
          %v3757 = vadd.f32 %v3644, %v3756
          %3758 = vmatmul.f32.gmra.mxu0 %v3421
          %v3759 = vpop.f32.mrf.mxu0
          %v3760 = vadd.f32 %v3647, %v3759
          %3761 = vmatmul.f32.gmra.mxu0 %v3424
          %v3762 = vpop.f32.mrf.mxu0
          %v3763 = vadd.f32 %v3650, %v3762
          %3764 = vmatmul.f32.gmra.mxu0 %v3427
          %v3765 = vpop.f32.mrf.mxu0
          %v3766 = vadd.f32 %v3653, %v3765
          %3767 = vmatmul.f32.gmra.mxu0 %v3430
          %v3768 = vpop.f32.mrf.mxu0
          %v3769 = vadd.f32 %v3656, %v3768
          %3770 = vmatmul.f32.gmra.mxu0 %v3433
          %v3771 = vpop.f32.mrf.mxu0
          %v3772 = vadd.f32 %v3659, %v3771
          %3773 = vmatmul.f32.gmra.mxu0 %v3436
          %v3774 = vpop.f32.mrf.mxu0
          %v3775 = vadd.f32 %v3662, %v3774
          %3776 = vmatmul.f32.gmra.mxu0 %v3439
          %v3777 = vpop.f32.mrf.mxu0
          %v3778 = vadd.f32 %v3665, %v3777
          %3779 = vmatmul.f32.gmra.mxu0 %v3442
          %v3780 = vpop.f32.mrf.mxu0
          %v3781 = vadd.f32 %v3668, %v3780
          %3782 = vmatmul.f32.gmra.mxu0 %v3445
          %v3783 = vpop.f32.mrf.mxu0
          %v3784 = vadd.f32 %v3671, %v3783
          %3785 = vmatmul.f32.gmra.mxu0 %v3448
          %v3786 = vpop.f32.mrf.mxu0
          %v3787 = vadd.f32 %v3674, %v3786
          %3788 = vmatmul.f32.gmra.mxu0 %v3451
          %v3789 = vpop.f32.mrf.mxu0
          %v3790 = vadd.f32 %v3677, %v3789
          %3791 = vmatmul.f32.gmra.mxu0 %v3454
          %v3792 = vpop.f32.mrf.mxu0
          %v3793 = vadd.f32 %v3680, %v3792
          %3794 = vmatmul.f32.gmra.mxu0 %v3457
          %v3795 = vpop.f32.mrf.mxu0
          %v3796 = vadd.f32 %v3683, %v3795
          %3797 = vmatmul.f32.gmra.mxu0 %v3460
          %v3798 = vpop.f32.mrf.mxu0
          %v3799 = vadd.f32 %v3686, %v3798
          %3800 = vmatmul.f32.gmra.mxu0 %v3463
          %v3801 = vpop.f32.mrf.mxu0
          %v3802 = vadd.f32 %v3689, %v3801
          %3803 = vmatmul.f32.gmra.mxu0 %v3466
          %v3804 = vpop.f32.mrf.mxu0
          %v3805 = vadd.f32 %v3692, %v3804
          %3806 = vmatmul.f32.gmra.mxu0 %v3469
          %v3807 = vpop.f32.mrf.mxu0
          %v3808 = vadd.f32 %v3695, %v3807
          %3809 = vmatmul.f32.gmra.mxu0 %v3472
          %v3810 = vpop.f32.mrf.mxu0
          %v3811 = vadd.f32 %v3698, %v3810
          %3812 = vmatmul.f32.gmra.mxu0 %v3475
          %v3813 = vpop.f32.mrf.mxu0
          %v3814 = vadd.f32 %v3701, %v3813
          %3815 = vmatmul.f32.gmra.mxu0 %v3478
          %v3816 = vpop.f32.mrf.mxu0
          %v3817 = vadd.f32 %v3704, %v3816
          %3818 = vmatmul.f32.gmra.mxu0 %v3481
          %v3819 = vpop.f32.mrf.mxu0
          %v3820 = vadd.f32 %v3707, %v3819
          %3821 = vmatmul.f32.gmra.mxu0 %v3484
          %v3822 = vpop.f32.mrf.mxu0
          %v3823 = vadd.f32 %v3710, %v3822
          %3824 = vmatmul.f32.gmra.mxu0 %v3487
          %v3825 = vpop.f32.mrf.mxu0
          %v3826 = vadd.f32 %v3713, %v3825
          %3827 = vmatmul.f32.gmra.mxu0 %v3490
          %v3828 = vpop.f32.mrf.mxu0
          %v3829 = vadd.f32 %v3716, %v3828
          %3830 = vmatmul.f32.gmra.mxu0 %v3493
          %v3831 = vpop.f32.mrf.mxu0
          %v3832 = vadd.f32 %v3719, %v3831
          %3833 = vmatmul.f32.gmra.mxu0 %v3496
          %v3834 = vpop.f32.mrf.mxu0
          %v3835 = vadd.f32 %v3722, %v3834
          %3836 = vmatmul.f32.gmra.mxu0 %v3499
          %v3837 = vpop.f32.mrf.mxu0
          %v3838 = vadd.f32 %v3725, %v3837
          %3839 = vmatmul.f32.gmra.mxu0 %v3502
          %v3840 = vpop.f32.mrf.mxu0
          %v3841 = vadd.f32 %v3728, %v3840
          %3842 = vmatmul.f32.gmra.mxu0 %v3505
          %v3843 = vpop.f32.mrf.mxu0
          %v3844 = vadd.f32 %v3731, %v3843
          %3845 = vmatmul.f32.gmra.mxu0 %v3508
          %v3846 = vpop.f32.mrf.mxu0
          %v3847 = vadd.f32 %v3734, %v3846
          %3848 = vdwg.mxu0
          %v3849 = vadd.f32 %v3754, %v263
          %v3850 = vadd.f32 %v3757, %v264
          %v3851 = vadd.f32 %v3760, %v265
          %v3852 = vadd.f32 %v3763, %v266
          %v3853 = vadd.f32 %v3766, %v267
          %v3854 = vadd.f32 %v3769, %v268
          %v3855 = vadd.f32 %v3772, %v269
          %v3856 = vadd.f32 %v3775, %v270
          %v3857 = vadd.f32 %v3778, %v271
          %v3858 = vadd.f32 %v3781, %v272
          %v3859 = vadd.f32 %v3784, %v273
          %v3860 = vadd.f32 %v3787, %v274
          %v3861 = vadd.f32 %v3790, %v275
          %v3862 = vadd.f32 %v3793, %v276
          %v3863 = vadd.f32 %v3796, %v277
          %v3864 = vadd.f32 %v3799, %v278
          %v3865 = vadd.f32 %v3802, %v279
          %v3866 = vadd.f32 %v3805, %v280
          %v3867 = vadd.f32 %v3808, %v281
          %v3868 = vadd.f32 %v3811, %v282
          %v3869 = vadd.f32 %v3814, %v283
          %v3870 = vadd.f32 %v3817, %v284
          %v3871 = vadd.f32 %v3820, %v285
          %v3872 = vadd.f32 %v3823, %v286
          %v3873 = vadd.f32 %v3826, %v287
          %v3874 = vadd.f32 %v3829, %v288
          %v3875 = vadd.f32 %v3832, %v289
          %v3876 = vadd.f32 %v3835, %v290
          %v3877 = vadd.f32 %v3838, %v291
          %v3878 = vadd.f32 %v3841, %v292
          %v3879 = vadd.f32 %v3844, %v293
          %v3880 = vadd.f32 %v3847, %v294
        $region37: #{eblock_forward.1} parent=31 // loop_footer
          %s262 = sadd.s32 1, %s258
        $region38: #{eblock_forward.1} parent=31 // loop_footer_branch
          %257 = sbr.rel target = $region34
        $region39: #{eblock_forward.1} parent=31 // loop_exit
          _
        %3881 = vst.msk [vmem:[%s163] sm:$0xff] %vm169, %v263
        %3882 = vst.msk [vmem:[%s163 + $0x8] sm:$0xff] %vm169, %v264
        %3883 = vst.msk [vmem:[%s163 + $0x10] sm:$0xff] %vm169, %v265
        %3884 = vst.msk [vmem:[%s163 + $0x18] sm:$0xff] %vm169, %v266
        %3885 = vst.msk [vmem:[%s163 + $0x20] sm:$0xff] %vm169, %v267
        %3886 = vst.msk [vmem:[%s163 + $0x28] sm:$0xff] %vm169, %v268
        %3887 = vst.msk [vmem:[%s163 + $0x30] sm:$0xff] %vm169, %v269
        %3888 = vst.msk [vmem:[%s163 + $0x38] sm:$0xff] %vm169, %v270
        %3889 = vst.msk [vmem:[%s163 + $0x40] sm:$0xff] %vm169, %v271
        %3890 = vst.msk [vmem:[%s163 + $0x48] sm:$0xff] %vm169, %v272
        %3891 = vst.msk [vmem:[%s163 + $0x50] sm:$0xff] %vm169, %v273
        %3892 = vst.msk [vmem:[%s163 + $0x58] sm:$0xff] %vm169, %v274
        %3893 = vst.msk [vmem:[%s163 + $0x60] sm:$0xff] %vm169, %v275
        %3894 = vst.msk [vmem:[%s163 + $0x68] sm:$0xff] %vm169, %v276
        %3895 = vst.msk [vmem:[%s163 + $0x70] sm:$0xff] %vm169, %v277
        %3896 = vst.msk [vmem:[%s163 + $0x78] sm:$0xff] %vm169, %v278
        %3897 = vst.msk [vmem:[%s163 + $0x80] sm:$0xff] %vm169, %v279
        %3898 = vst.msk [vmem:[%s163 + $0x88] sm:$0xff] %vm169, %v280
        %3899 = vst.msk [vmem:[%s163 + $0x90] sm:$0xff] %vm169, %v281
        %3900 = vst.msk [vmem:[%s163 + $0x98] sm:$0xff] %vm169, %v282
        %3901 = vst.msk [vmem:[%s163 + $0xa0] sm:$0xff] %vm169, %v283
        %3902 = vst.msk [vmem:[%s163 + $0xa8] sm:$0xff] %vm169, %v284
        %3903 = vst.msk [vmem:[%s163 + $0xb0] sm:$0xff] %vm169, %v285
        %3904 = vst.msk [vmem:[%s163 + $0xb8] sm:$0xff] %vm169, %v286
        %3905 = vst.msk [vmem:[%s163 + $0xc0] sm:$0xff] %vm169, %v287
        %3906 = vst.msk [vmem:[%s163 + $0xc8] sm:$0xff] %vm169, %v288
        %3907 = vst.msk [vmem:[%s163 + $0xd0] sm:$0xff] %vm169, %v289
        %3908 = vst.msk [vmem:[%s163 + $0xd8] sm:$0xff] %vm169, %v290
        %3909 = vst.msk [vmem:[%s163 + $0xe0] sm:$0xff] %vm169, %v291
        %3910 = vst.msk [vmem:[%s163 + $0xe8] sm:$0xff] %vm169, %v292
        %3911 = vst.msk [vmem:[%s163 + $0xf0] sm:$0xff] %vm169, %v293
        %3912 = vst.msk [vmem:[%s163 + $0xf8] sm:$0xff] %vm169, %v294
        %s3913 = sand.u32 %s93, 1
        %s3914 = scalar_lea.sflag [#allocation4], %s3913
        %s3915 = sand.u32 %s93, 1
        %s3916 = smul.addr %s3915, 256
        %s3917 = scalar_lea.vmem [#allocation3], %s3916
        // Predicated region
        $region40: #{eblock_forward.1} parent=31 // pred_check
          %p3918 = pneg %p103
        $region41: #{eblock_forward.1} parent=31 // pred_check_branch
          %3920 = sbr.rel (%p3918) target = $region43
        $region42: #{eblock_forward.1} parent=31 // pred_region
          %3922 = vsyncadd %s3914, 0
          %s3923 = smul.addr %s17, 32
          %s3924 = smul.addr %s3923, 8
          %s3925 = scalar_lea.hbm %s3, %s3924
          %s3926 = sshll.u32 %s3917, 4
          %s3927 = int_to_ptr.vmem [resolvable:$true] %s3926
          %s3928 = sshll.u32 %s3925, 4
          %s3929 = int_to_ptr.hbm [resolvable:$true] %s3928
          %3934 = dma.vmem_to_hbm [thread:$0]  %s3927, 4096, %s3929, %s3914, 128, 128, 8
        $region43: #{eblock_forward.1} parent=31 // pred_fallthru
          _
      $region32: #{eblock_forward.1} parent=5 // pred_fallthru
        _
      %p3935 = scmp.le.s32.totalorder 2, %s12
      // Predicated region
      $region44: #{eblock_forward.1} parent=5 // pred_check
        %p3936 = pneg %p3935
      $region45: #{eblock_forward.1} parent=5 // pred_check_branch
        %3938 = sbr.rel (%p3936) target = $region47
      $region46: #{eblock_forward.1} parent=5 // pred_region
        %s3939 = ssub.s32 %s12, 2
        // Predicated region
        $region48: #{eblock_forward.1} parent=46 // pred_check
          %p3940 = pneg %p109
        $region49: #{eblock_forward.1} parent=46 // pred_check_branch
          %3942 = sbr.rel (%p3940) target = $region51
        $region50: #{eblock_forward.1} parent=46 // pred_region
          %s3943 = sand.u32 %s94, 1
          %s3944 = scalar_lea.sflag [#allocation4], %s3943
          %s3945 = sand.u32 %s94, 1
          %s3946 = smul.addr %s3945, 256
          %s3947 = scalar_lea.vmem [#allocation3], %s3946
          %3949 = dma.done %s3944, 4096
        $region51: #{eblock_forward.1} parent=46 // pred_fallthru
          _
      $region47: #{eblock_forward.1} parent=5 // pred_fallthru
        _
    $region6: #{eblock_forward.1} parent=1 // loop_footer
      %s16 = sadd.s32 1, %s12
    $region7: #{eblock_forward.1} parent=1 // loop_footer_branch
      %11 = sbr.rel target = $region3
    $region8: #{eblock_forward.1} parent=1 // loop_exit
      _
    %3950 = vsyncpa [#allocation4], 1
    %s3951 = scalar_lea.sflag [#allocation4], 1
    %3952 = vsyncpa %s3951, 1

</llo_original>
